<compile_context>
chip_gen: v7x
topology: tpu7x:2x2x1
jax: 0.10.0
libtpu: 0.0.40
codegen_flags: <defaults>
</compile_context>

<pallas_src>
import functools
import math

import jax
import jax.numpy as jnp
from jax import lax
from jax.experimental import pallas as pl
from jax.experimental.pallas import tpu as pltpu


def _attn_kernel(x_ref, wqkv_ref, bqkv_ref, wproj_ref, bproj_ref, o_ref, *,
                 n_head: int):
    # One grid step == one batch element.
    x = x_ref[0]                                   # (L, D) bf16
    L, D = x.shape
    H = n_head
    hd = D // H
    scale = 1.0 / math.sqrt(hd)
    f32 = jnp.float32
    bf16 = jnp.bfloat16

    # Head-batched view of x: pure sublane replication (no XLU lane shuffles),
    # so every matmul below is a canonical batched MXU op with no in-kernel
    # transpose of q/k/v or of the merged heads.
    xh = jnp.broadcast_to(x, (H, L, D))            # (H, L, D) bf16

    # QKV projections straight into head-major (H, L, hd); f32 accumulation,
    # f32 bias add on the VPU.
    q = jnp.einsum('hld,hde->hle', xh, wqkv_ref[0],
                   preferred_element_type=f32) + bqkv_ref[0]
    k = jnp.einsum('hld,hde->hle', xh, wqkv_ref[1],
                   preferred_element_type=f32) + bqkv_ref[1]
    v = jnp.einsum('hld,hde->hle', xh, wqkv_ref[2],
                   preferred_element_type=f32) + bqkv_ref[2]

    # Fold 1/sqrt(hd) into q once (f32 VPU), then hand bf16 operands to the
    # MXU with f32 accumulation for the attention logits.
    q = (q * scale).astype(bf16)
    att = jnp.einsum('hqe,hke->hqk', q, k.astype(bf16),
                     preferred_element_type=f32)   # (H, L, L) f32

    # Additive causal bias, built once at (L, L) and broadcast over heads.
    row = lax.broadcasted_iota(jnp.int32, (L, L), 0)
    col = lax.broadcasted_iota(jnp.int32, (L, L), 1)
    causal_bias = jnp.where(row >= col, 0.0, -1e30).astype(f32)
    att = att + causal_bias[None, :, :]

    # Numerically-stable softmax numerator; normalization deferred past the
    # PV matmul (scales (H,L,hd) instead of (H,L,L)).
    m = jnp.max(att, axis=-1, keepdims=True)       # (H, L, 1) f32
    e = jnp.exp(att - m)                           # (H, L, L) f32
    s = jnp.sum(e, axis=-1, keepdims=True)         # (H, L, 1) f32

    y = jnp.einsum('hqk,hke->hqe', e.astype(bf16), v.astype(bf16),
                   preferred_element_type=f32)     # (H, L, hd) f32
    y = y * pl.reciprocal(s, approx=False)         # exact recip (parity)

    # Output projection with head-major weight (H, hd, D): per-head batched
    # matmul then a cheap sum over H == concat-heads @ W_proj, without ever
    # materializing the (L, H*hd) merge.
    out = jnp.einsum('hqe,hed->hqd', y.astype(bf16), wproj_ref[...],
                     preferred_element_type=f32)   # (H, L, D) f32
    out = jnp.sum(out, axis=0) + bproj_ref[...]    # (L, D) + (1, D)

    o_ref[0] = out.astype(o_ref.dtype)


def _vmem_limit_bytes():
    # Raise the scoped-VMEM ceiling (default 16/32 MiB on v5e/v6e) so the
    # monolithic moderate-L path doesn't spill; stay well under physical VMEM.
    try:
        cap = pltpu.get_tpu_info().vmem_capacity_bytes
        return int(min(64 * 1024 * 1024, cap * 3 // 4))
    except Exception:
        return None  # unknown chip -> keep the compiler default


def _make_call(B, L, D, n_head, out_dtype, *, single_buffer_weights):
    H = n_head
    hd = D // H
    kernel = functools.partial(_attn_kernel, n_head=n_head)

    def wspec(shape):
        zero = (0,) * len(shape)
        kwargs = {}
        if single_buffer_weights:
            # Constant index_map -> the block never changes; a single buffer
            # reclaims the VMEM that default double-buffering would waste.
            kwargs["pipeline_mode"] = pl.Buffered(1)
        return pl.BlockSpec(shape, lambda b, _z=zero: _z, **kwargs)

    return pl.pallas_call(
        kernel,
        out_shape=jax.ShapeDtypeStruct((B, L, D), out_dtype),
        grid=(B,),
        in_specs=[
            pl.BlockSpec((1, L, D), lambda b: (b, 0, 0)),   # x, per-batch tile
            wspec((3, H, D, hd)),                           # W_qkv head-major
            wspec((3, H, 1, hd)),                           # b_qkv head-major
            wspec((H, hd, D)),                              # W_proj head-major
            wspec((1, D)),                                  # b_proj
        ],
        out_specs=pl.BlockSpec((1, L, D), lambda b: (b, 0, 0)),
        compiler_params=pltpu.CompilerParams(
            # TODO(synk): at prod sizes use CORE_PARALLEL (or a core_map mesh)
            # with a B*H / q-tile grid so v7x's 2 TCs load-balance.
            dimension_semantics=("parallel",),
            vmem_limit_bytes=_vmem_limit_bytes(),
        ),
    )


def causal_self_attention(x, w_attn, b_attn, w_proj, b_proj, *, n_head):
    B, L, D = x.shape
    H = n_head
    hd = D // H
    out_dtype = x.dtype

    # One-time wrapper-side (XLA) relayouts to head-major weights, so the
    # kernel body contains no head-split/merge transposes.
    #   w_attn (D, 3D): column j = (t, h, e) with j = t*D + h*hd + e.
    w_qkv_r = w_attn.reshape(D, 3, H, hd).transpose(1, 2, 0, 3)   # (3, H, D, hd)
    b_qkv_r = b_attn.reshape(3, H, hd)[:, :, None, :]             # (3, H, 1, hd)
    w_proj_r = w_proj.reshape(H, hd, D)                           # (H, hd, D)

    # bf16 MXU operands (kernel accumulates in f32); biases stay f32.
    x_b = x.astype(jnp.bfloat16)
    w_qkv_r = w_qkv_r.astype(jnp.bfloat16)
    w_proj_r = w_proj_r.astype(jnp.bfloat16)
    b_qkv_r = b_qkv_r.astype(jnp.float32)
    b_proj_f = b_proj.astype(jnp.float32)

    args = (x_b, w_qkv_r, b_qkv_r, w_proj_r, b_proj_f)

    try:
        out = _make_call(B, L, D, n_head, out_dtype,
                         single_buffer_weights=True)(*args)
        return jax.block_until_ready(out)
    except Exception:
        # pipeline_mode=pl.Buffered(1) unsupported on this jax build; fall
        # back to default (double-buffered) weight blocks.
        return _make_call(B, L, D, n_head, out_dtype,
                          single_buffer_weights=False)(*args)


def _reference(x, w_attn, b_attn, w_proj, b_proj, n_head):
    # Plain-JAX f32 reference mirroring the PyTorch forward (dropout = 0).
    B, L, D = x.shape
    hd = D // n_head
    qkv = x @ w_attn + b_attn[0]                                # (B, L, 3D)
    q, k, v = jnp.split(qkv, 3, axis=-1)

    def heads(t):
        return t.reshape(B, L, n_head, hd).transpose(0, 2, 1, 3)  # (B, H, L, hd)

    q, k, v = heads(q), heads(k), heads(v)
    att = jnp.einsum('bhld,bhmd->bhlm', q, k) / math.sqrt(hd)
    mask = jnp.tril(jnp.ones((L, L), dtype=bool))
    att = jnp.where(mask[None, None], att, -jnp.inf)
    att = jax.nn.softmax(att, axis=-1)
    y = jnp.einsum('bhlm,bhmd->bhld', att, v)
    y = y.transpose(0, 2, 1, 3).reshape(B, L, D)
    return y @ w_proj + b_proj[0]


if __name__ == "__main__":
    # Config (GPTConfig): block_size >= L, n_embd = 32, n_head = 4, bias=True,
    # dropout = 0.0
    B, L, D, n_head = 2, 8, 32, 4

    key = jax.random.PRNGKey(0)
    kx, kw1, kb1, kw2, kb2 = jax.random.split(key, 5)

    x = jax.random.normal(kx, (B, L, D), dtype=jnp.float32)
    # c_attn: Linear(D, 3D, bias=True)  -> W (D, 3D), b (1, 3D)  (y = x@W + b)
    w_attn = jax.random.normal(kw1, (D, 3 * D), dtype=jnp.float32) * 0.02
    b_attn = jax.random.normal(kb1, (1, 3 * D), dtype=jnp.float32) * 0.02
    # c_proj: Linear(D, D, bias=True)   -> W (D, D), b (1, D)
    w_proj = jax.random.normal(kw2, (D, D), dtype=jnp.float32) * 0.02
    b_proj = jax.random.normal(kb2, (1, D), dtype=jnp.float32) * 0.02

    out = causal_self_attention(x, w_attn, b_attn, w_proj, b_proj,
                                n_head=n_head)
    out = jax.block_until_ready(out)

    ref = _reference(x, w_attn, b_attn, w_proj, b_proj, n_head)
    assert out.shape == (B, L, D)
    # Tolerance accounts for bf16 MXU operands (f32 accumulation); any real
    # bug (wrong mask / head mapping / projection) is orders of magnitude
    # larger than this.
    assert jnp.allclose(out, ref, atol=2e-3, rtol=2e-2), "mismatch vs reference"

    print("KERNEL_OK")
</pallas_src>

<mosaic_0001>
module attributes {stable_mosaic.version = 11 : i64} {
  func.func @_attn_kernel(%arg0: i32, %arg1: memref<1x8x32xbf16, #tpu.memory_space<vmem>>, %arg2: memref<3x4x32x8xbf16, #tpu.memory_space<vmem>>, %arg3: memref<3x4x1x8xf32, #tpu.memory_space<vmem>>, %arg4: memref<4x8x32xbf16, #tpu.memory_space<vmem>>, %arg5: memref<1x32xf32, #tpu.memory_space<vmem>>, %arg6: memref<1x8x32xf32, #tpu.memory_space<vmem>>) attributes {dimension_semantics = [#tpu.dimension_semantics<parallel>], iteration_bounds = array<i64: 2>, scalar_prefetch = 0 : i64, scratch_operands = 0 : i64, tpu.core_type = #tpu.core_type<tc>, window_params = [{transform_indices = @transform_0, window_bounds = array<i64: 1, 8, 32>}, {pipeline_mode = #tpu.pipeline_mode<synchronous>, transform_indices = @transform_1, window_bounds = array<i64: 3, 4, 32, 8>}, {pipeline_mode = #tpu.pipeline_mode<synchronous>, transform_indices = @transform_2, window_bounds = array<i64: 3, 4, 1, 8>}, {pipeline_mode = #tpu.pipeline_mode<synchronous>, transform_indices = @transform_3, window_bounds = array<i64: 4, 8, 32>}, {pipeline_mode = #tpu.pipeline_mode<synchronous>, transform_indices = @transform_4, window_bounds = array<i64: 1, 32>}, {transform_indices = @transform_5, window_bounds = array<i64: 1, 8, 32>}]} {
    %c0 = arith.constant 0 : index
    %c0_0 = arith.constant 0 : index
    %c0_1 = arith.constant 0 : index
    %0 = vector.load %arg1[%c0, %c0_0, %c0_1] : memref<1x8x32xbf16, #tpu.memory_space<vmem>>, vector<1x8x32xbf16>
    %1 = vector.shape_cast %0 : vector<1x8x32xbf16> to vector<8x32xbf16>
    %2 = vector.shape_cast %1 : vector<8x32xbf16> to vector<1x8x32xbf16>
    %3 = vector.broadcast %2 : vector<1x8x32xbf16> to vector<4x8x32xbf16>
    %c0_2 = arith.constant 0 : index
    %c0_3 = arith.constant 0 : index
    %c0_4 = arith.constant 0 : index
    %c0_5 = arith.constant 0 : index
    %4 = vector.load %arg2[%c0_2, %c0_3, %c0_4, %c0_5] : memref<3x4x32x8xbf16, #tpu.memory_space<vmem>>, vector<1x4x32x8xbf16>
    %5 = vector.shape_cast %4 : vector<1x4x32x8xbf16> to vector<4x32x8xbf16>
    "tpu.trace_start"() <{level = 10 : i32, message = "hld,hde->hle"}> : () -> ()
    %cst = arith.constant dense<0.000000e+00> : vector<4x8x8xf32>
    %6 = tpu.matmul %3, %5, %cst {dimension_numbers = #tpu.dot_dimension_numbers<[2], [1], [1], [2], [0, 0, 0, 1, 1, 2], [0], [0]>} : vector<4x8x32xbf16>, vector<4x32x8xbf16>, vector<4x8x8xf32> -> vector<4x8x8xf32>
    "tpu.trace_stop"() : () -> ()
    %c0_6 = arith.constant 0 : index
    %c0_7 = arith.constant 0 : index
    %c0_8 = arith.constant 0 : index
    %c0_9 = arith.constant 0 : index
    %7 = vector.load %arg3[%c0_6, %c0_7, %c0_8, %c0_9] : memref<3x4x1x8xf32, #tpu.memory_space<vmem>>, vector<1x4x1x8xf32>
    %8 = vector.shape_cast %7 : vector<1x4x1x8xf32> to vector<4x1x8xf32>
    %9 = vector.broadcast %8 : vector<4x1x8xf32> to vector<4x8x8xf32>
    %10 = arith.addf %6, %9 : vector<4x8x8xf32>
    %c1 = arith.constant 1 : index
    %c0_10 = arith.constant 0 : index
    %c0_11 = arith.constant 0 : index
    %c0_12 = arith.constant 0 : index
    %11 = vector.load %arg2[%c1, %c0_10, %c0_11, %c0_12] : memref<3x4x32x8xbf16, #tpu.memory_space<vmem>>, vector<1x4x32x8xbf16>
    %12 = vector.shape_cast %11 : vector<1x4x32x8xbf16> to vector<4x32x8xbf16>
    "tpu.trace_start"() <{level = 10 : i32, message = "hld,hde->hle"}> : () -> ()
    %cst_13 = arith.constant dense<0.000000e+00> : vector<4x8x8xf32>
    %13 = tpu.matmul %3, %12, %cst_13 {dimension_numbers = #tpu.dot_dimension_numbers<[2], [1], [1], [2], [0, 0, 0, 1, 1, 2], [0], [0]>} : vector<4x8x32xbf16>, vector<4x32x8xbf16>, vector<4x8x8xf32> -> vector<4x8x8xf32>
    "tpu.trace_stop"() : () -> ()
    %c1_14 = arith.constant 1 : index
    %c0_15 = arith.constant 0 : index
    %c0_16 = arith.constant 0 : index
    %c0_17 = arith.constant 0 : index
    %14 = vector.load %arg3[%c1_14, %c0_15, %c0_16, %c0_17] : memref<3x4x1x8xf32, #tpu.memory_space<vmem>>, vector<1x4x1x8xf32>
    %15 = vector.shape_cast %14 : vector<1x4x1x8xf32> to vector<4x1x8xf32>
    %16 = vector.broadcast %15 : vector<4x1x8xf32> to vector<4x8x8xf32>
    %17 = arith.addf %13, %16 : vector<4x8x8xf32>
    %c2 = arith.constant 2 : index
    %c0_18 = arith.constant 0 : index
    %c0_19 = arith.constant 0 : index
    %c0_20 = arith.constant 0 : index
    %18 = vector.load %arg2[%c2, %c0_18, %c0_19, %c0_20] : memref<3x4x32x8xbf16, #tpu.memory_space<vmem>>, vector<1x4x32x8xbf16>
    %19 = vector.shape_cast %18 : vector<1x4x32x8xbf16> to vector<4x32x8xbf16>
    "tpu.trace_start"() <{level = 10 : i32, message = "hld,hde->hle"}> : () -> ()
    %cst_21 = arith.constant dense<0.000000e+00> : vector<4x8x8xf32>
    %20 = tpu.matmul %3, %19, %cst_21 {dimension_numbers = #tpu.dot_dimension_numbers<[2], [1], [1], [2], [0, 0, 0, 1, 1, 2], [0], [0]>} : vector<4x8x32xbf16>, vector<4x32x8xbf16>, vector<4x8x8xf32> -> vector<4x8x8xf32>
    "tpu.trace_stop"() : () -> ()
    %c2_22 = arith.constant 2 : index
    %c0_23 = arith.constant 0 : index
    %c0_24 = arith.constant 0 : index
    %c0_25 = arith.constant 0 : index
    %21 = vector.load %arg3[%c2_22, %c0_23, %c0_24, %c0_25] : memref<3x4x1x8xf32, #tpu.memory_space<vmem>>, vector<1x4x1x8xf32>
    %22 = vector.shape_cast %21 : vector<1x4x1x8xf32> to vector<4x1x8xf32>
    %23 = vector.broadcast %22 : vector<4x1x8xf32> to vector<4x8x8xf32>
    %24 = arith.addf %20, %23 : vector<4x8x8xf32>
    %cst_26 = arith.constant 0.353553385 : f32
    %25 = vector.broadcast %cst_26 : f32 to vector<4x8x8xf32>
    %26 = arith.mulf %10, %25 : vector<4x8x8xf32>
    %27 = arith.truncf %26 : vector<4x8x8xf32> to vector<4x8x8xbf16>
    %28 = arith.truncf %17 : vector<4x8x8xf32> to vector<4x8x8xbf16>
    "tpu.trace_start"() <{level = 10 : i32, message = "hqe,hke->hqk"}> : () -> ()
    %cst_27 = arith.constant dense<0.000000e+00> : vector<4x8x8xf32>
    %29 = tpu.matmul %27, %28, %cst_27 {dimension_numbers = #tpu.dot_dimension_numbers<[2], [2], [1], [1], [0, 0, 0, 1, 1, 1], [0], [0]>} : vector<4x8x8xbf16>, vector<4x8x8xbf16>, vector<4x8x8xf32> -> vector<4x8x8xf32>
    "tpu.trace_stop"() : () -> ()
    %30 = tpu.iota {dimensions = array<i32: 0>} : vector<8x8xi32>
    %31 = tpu.iota {dimensions = array<i32: 1>} : vector<8x8xi32>
    %32 = arith.cmpi sge, %30, %31 : vector<8x8xi32>
    %cst_28 = arith.constant 0.000000e+00 : f32
    %cst_29 = arith.constant -1.000000e+30 : f32
    %33 = vector.broadcast %cst_28 : f32 to vector<8x8xf32>
    %34 = vector.broadcast %cst_29 : f32 to vector<8x8xf32>
    %35 = arith.select %32, %33, %34 : vector<8x8xi1>, vector<8x8xf32>
    %36 = vector.shape_cast %35 : vector<8x8xf32> to vector<1x8x8xf32>
    %37 = vector.broadcast %36 : vector<1x8x8xf32> to vector<4x8x8xf32>
    %38 = arith.addf %29, %37 : vector<4x8x8xf32>
    %cst_30 = arith.constant dense<0xFF800000> : vector<4x8xf32>
    %39 = vector.multi_reduction <maximumf>, %38, %cst_30 [2] : vector<4x8x8xf32> to vector<4x8xf32>
    %40 = vector.shape_cast %39 : vector<4x8xf32> to vector<4x8x1xf32>
    %41 = vector.broadcast %40 : vector<4x8x1xf32> to vector<4x8x8xf32>
    %42 = arith.subf %38, %41 : vector<4x8x8xf32>
    %43 = math.exp %42 : vector<4x8x8xf32>
    %cst_31 = arith.constant dense<0.000000e+00> : vector<4x8xf32>
    %44 = vector.multi_reduction <add>, %43, %cst_31 [2] : vector<4x8x8xf32> to vector<4x8xf32>
    %45 = vector.shape_cast %44 : vector<4x8xf32> to vector<4x8x1xf32>
    %46 = arith.truncf %43 : vector<4x8x8xf32> to vector<4x8x8xbf16>
    %47 = arith.truncf %24 : vector<4x8x8xf32> to vector<4x8x8xbf16>
    "tpu.trace_start"() <{level = 10 : i32, message = "hqk,hke->hqe"}> : () -> ()
    %cst_32 = arith.constant dense<0.000000e+00> : vector<4x8x8xf32>
    %48 = tpu.matmul %46, %47, %cst_32 {dimension_numbers = #tpu.dot_dimension_numbers<[2], [1], [1], [2], [0, 0, 0, 1, 1, 2], [0], [0]>} : vector<4x8x8xbf16>, vector<4x8x8xbf16>, vector<4x8x8xf32> -> vector<4x8x8xf32>
    "tpu.trace_stop"() : () -> ()
    %49 = tpu.reciprocal %45 : vector<4x8x1xf32> -> vector<4x8x1xf32>
    %50 = vector.broadcast %49 : vector<4x8x1xf32> to vector<4x8x8xf32>
    %51 = arith.mulf %48, %50 : vector<4x8x8xf32>
    %52 = arith.truncf %51 : vector<4x8x8xf32> to vector<4x8x8xbf16>
    %c0_33 = arith.constant 0 : index
    %c0_34 = arith.constant 0 : index
    %c0_35 = arith.constant 0 : index
    %53 = vector.load %arg4[%c0_33, %c0_34, %c0_35] : memref<4x8x32xbf16, #tpu.memory_space<vmem>>, vector<4x8x32xbf16>
    "tpu.trace_start"() <{level = 10 : i32, message = "hqe,hed->hqd"}> : () -> ()
    %cst_36 = arith.constant dense<0.000000e+00> : vector<4x8x32xf32>
    %54 = tpu.matmul %52, %53, %cst_36 {dimension_numbers = #tpu.dot_dimension_numbers<[2], [1], [1], [2], [0, 0, 0, 1, 1, 2], [0], [0]>} : vector<4x8x8xbf16>, vector<4x8x32xbf16>, vector<4x8x32xf32> -> vector<4x8x32xf32>
    "tpu.trace_stop"() : () -> ()
    %cst_37 = arith.constant dense<0.000000e+00> : vector<8x32xf32>
    %55 = vector.multi_reduction <add>, %54, %cst_37 [0] : vector<4x8x32xf32> to vector<8x32xf32>
    %c0_38 = arith.constant 0 : index
    %c0_39 = arith.constant 0 : index
    %56 = vector.load %arg5[%c0_38, %c0_39] : memref<1x32xf32, #tpu.memory_space<vmem>>, vector<1x32xf32>
    %57 = vector.broadcast %56 : vector<1x32xf32> to vector<8x32xf32>
    %58 = arith.addf %55, %57 : vector<8x32xf32>
    %c0_40 = arith.constant 0 : index
    %c0_41 = arith.constant 0 : index
    %c0_42 = arith.constant 0 : index
    %59 = vector.load %arg6[%c0_40, %c0_41, %c0_42] : memref<1x8x32xf32, #tpu.memory_space<vmem>>, vector<1x8x32xf32>
    %60 = vector.shape_cast %59 : vector<1x8x32xf32> to vector<8x32xf32>
    %61 = vector.shape_cast %58 : vector<8x32xf32> to vector<1x8x32xf32>
    tpu.vector_store %arg6[%c0_40, %c0_41, %c0_42], %61 {strides = array<i32>} : memref<1x8x32xf32, #tpu.memory_space<vmem>>, vector<1x8x32xf32>,
    return
  }
  func.func @transform_0(%arg0: i32) -> (i32, i32, i32) {
    %c0_i32 = arith.constant 0 : i32
    %c0_i32_0 = arith.constant 0 : i32
    %c0_i32_1 = arith.constant 0 : i32
    return %arg0, %c0_i32, %c0_i32_0 : i32, i32, i32
  }
  func.func @transform_1(%arg0: i32) -> (i32, i32, i32, i32) {
    %c0_i32 = arith.constant 0 : i32
    %c0_i32_0 = arith.constant 0 : i32
    %c0_i32_1 = arith.constant 0 : i32
    %c0_i32_2 = arith.constant 0 : i32
    %c0_i32_3 = arith.constant 0 : i32
    return %c0_i32, %c0_i32_0, %c0_i32_1, %c0_i32_2 : i32, i32, i32, i32
  }
  func.func @transform_2(%arg0: i32) -> (i32, i32, i32, i32) {
    %c0_i32 = arith.constant 0 : i32
    %c0_i32_0 = arith.constant 0 : i32
    %c0_i32_1 = arith.constant 0 : i32
    %c0_i32_2 = arith.constant 0 : i32
    %c0_i32_3 = arith.constant 0 : i32
    return %c0_i32, %c0_i32_0, %c0_i32_1, %c0_i32_2 : i32, i32, i32, i32
  }
  func.func @transform_3(%arg0: i32) -> (i32, i32, i32) {
    %c0_i32 = arith.constant 0 : i32
    %c0_i32_0 = arith.constant 0 : i32
    %c0_i32_1 = arith.constant 0 : i32
    %c0_i32_2 = arith.constant 0 : i32
    return %c0_i32, %c0_i32_0, %c0_i32_1 : i32, i32, i32
  }
  func.func @transform_4(%arg0: i32) -> (i32, i32) {
    %c0_i32 = arith.constant 0 : i32
    %c0_i32_0 = arith.constant 0 : i32
    %c0_i32_1 = arith.constant 0 : i32
    return %c0_i32, %c0_i32_0 : i32, i32
  }
  func.func @transform_5(%arg0: i32) -> (i32, i32, i32) {
    %c0_i32 = arith.constant 0 : i32
    %c0_i32_0 = arith.constant 0 : i32
    %c0_i32_1 = arith.constant 0 : i32
    return %arg0, %c0_i32, %c0_i32_0 : i32, i32, i32
  }
}

module attributes {stable_mosaic.version = 11 : i64} {
  func.func @_attn_kernel(%arg0: i32, %arg1: memref<1x8x32xbf16, #tpu.memory_space<vmem>>, %arg2: memref<3x4x32x8xbf16, #tpu.memory_space<vmem>>, %arg3: memref<3x4x1x8xf32, #tpu.memory_space<vmem>>, %arg4: memref<4x8x32xbf16, #tpu.memory_space<vmem>>, %arg5: memref<1x32xf32, #tpu.memory_space<vmem>>, %arg6: memref<1x8x32xf32, #tpu.memory_space<vmem>>) attributes {dimension_semantics = [#tpu.dimension_semantics<parallel>], iteration_bounds = array<i64: 2>, scalar_prefetch = 0 : i64, scratch_operands = 0 : i64, tpu.core_type = #tpu.core_type<tc>, window_params = [{transform_indices = @transform_0, window_bounds = array<i64: 1, 8, 32>}, {pipeline_mode = #tpu.pipeline_mode<synchronous>, transform_indices = @transform_1, window_bounds = array<i64: 3, 4, 32, 8>}, {pipeline_mode = #tpu.pipeline_mode<synchronous>, transform_indices = @transform_2, window_bounds = array<i64: 3, 4, 1, 8>}, {pipeline_mode = #tpu.pipeline_mode<synchronous>, transform_indices = @transform_3, window_bounds = array<i64: 4, 8, 32>}, {pipeline_mode = #tpu.pipeline_mode<synchronous>, transform_indices = @transform_4, window_bounds = array<i64: 1, 32>}, {transform_indices = @transform_5, window_bounds = array<i64: 1, 8, 32>}]} {
    %c0 = arith.constant 0 : index
    %c0_0 = arith.constant 0 : index
    %c0_1 = arith.constant 0 : index
    %0 = vector.load %arg1[%c0, %c0_0, %c0_1] : memref<1x8x32xbf16, #tpu.memory_space<vmem>>, vector<1x8x32xbf16>
    %1 = vector.shape_cast %0 : vector<1x8x32xbf16> to vector<8x32xbf16>
    %2 = vector.shape_cast %1 : vector<8x32xbf16> to vector<1x8x32xbf16>
    %3 = vector.broadcast %2 : vector<1x8x32xbf16> to vector<4x8x32xbf16>
    %c0_2 = arith.constant 0 : index
    %c0_3 = arith.constant 0 : index
    %c0_4 = arith.constant 0 : index
    %c0_5 = arith.constant 0 : index
    %4 = vector.load %arg2[%c0_2, %c0_3, %c0_4, %c0_5] : memref<3x4x32x8xbf16, #tpu.memory_space<vmem>>, vector<1x4x32x8xbf16>
    %5 = vector.shape_cast %4 : vector<1x4x32x8xbf16> to vector<4x32x8xbf16>
    "tpu.trace_start"() <{level = 10 : i32, message = "hld,hde->hle"}> : () -> ()
    %cst = arith.constant dense<0.000000e+00> : vector<4x8x8xf32>
    %6 = tpu.matmul %3, %5, %cst {dimension_numbers = #tpu.dot_dimension_numbers<[2], [1], [1], [2], [0, 0, 0, 1, 1, 2], [0], [0]>} : vector<4x8x32xbf16>, vector<4x32x8xbf16>, vector<4x8x8xf32> -> vector<4x8x8xf32>
    "tpu.trace_stop"() : () -> ()
    %c0_6 = arith.constant 0 : index
    %c0_7 = arith.constant 0 : index
    %c0_8 = arith.constant 0 : index
    %c0_9 = arith.constant 0 : index
    %7 = vector.load %arg3[%c0_6, %c0_7, %c0_8, %c0_9] : memref<3x4x1x8xf32, #tpu.memory_space<vmem>>, vector<1x4x1x8xf32>
    %8 = vector.shape_cast %7 : vector<1x4x1x8xf32> to vector<4x1x8xf32>
    %9 = vector.broadcast %8 : vector<4x1x8xf32> to vector<4x8x8xf32>
    %10 = arith.addf %6, %9 : vector<4x8x8xf32>
    %c1 = arith.constant 1 : index
    %c0_10 = arith.constant 0 : index
    %c0_11 = arith.constant 0 : index
    %c0_12 = arith.constant 0 : index
    %11 = vector.load %arg2[%c1, %c0_10, %c0_11, %c0_12] : memref<3x4x32x8xbf16, #tpu.memory_space<vmem>>, vector<1x4x32x8xbf16>
    %12 = vector.shape_cast %11 : vector<1x4x32x8xbf16> to vector<4x32x8xbf16>
    "tpu.trace_start"() <{level = 10 : i32, message = "hld,hde->hle"}> : () -> ()
    %cst_13 = arith.constant dense<0.000000e+00> : vector<4x8x8xf32>
    %13 = tpu.matmul %3, %12, %cst_13 {dimension_numbers = #tpu.dot_dimension_numbers<[2], [1], [1], [2], [0, 0, 0, 1, 1, 2], [0], [0]>} : vector<4x8x32xbf16>, vector<4x32x8xbf16>, vector<4x8x8xf32> -> vector<4x8x8xf32>
    "tpu.trace_stop"() : () -> ()
    %c1_14 = arith.constant 1 : index
    %c0_15 = arith.constant 0 : index
    %c0_16 = arith.constant 0 : index
    %c0_17 = arith.constant 0 : index
    %14 = vector.load %arg3[%c1_14, %c0_15, %c0_16, %c0_17] : memref<3x4x1x8xf32, #tpu.memory_space<vmem>>, vector<1x4x1x8xf32>
    %15 = vector.shape_cast %14 : vector<1x4x1x8xf32> to vector<4x1x8xf32>
    %16 = vector.broadcast %15 : vector<4x1x8xf32> to vector<4x8x8xf32>
    %17 = arith.addf %13, %16 : vector<4x8x8xf32>
    %c2 = arith.constant 2 : index
    %c0_18 = arith.constant 0 : index
    %c0_19 = arith.constant 0 : index
    %c0_20 = arith.constant 0 : index
    %18 = vector.load %arg2[%c2, %c0_18, %c0_19, %c0_20] : memref<3x4x32x8xbf16, #tpu.memory_space<vmem>>, vector<1x4x32x8xbf16>
    %19 = vector.shape_cast %18 : vector<1x4x32x8xbf16> to vector<4x32x8xbf16>
    "tpu.trace_start"() <{level = 10 : i32, message = "hld,hde->hle"}> : () -> ()
    %cst_21 = arith.constant dense<0.000000e+00> : vector<4x8x8xf32>
    %20 = tpu.matmul %3, %19, %cst_21 {dimension_numbers = #tpu.dot_dimension_numbers<[2], [1], [1], [2], [0, 0, 0, 1, 1, 2], [0], [0]>} : vector<4x8x32xbf16>, vector<4x32x8xbf16>, vector<4x8x8xf32> -> vector<4x8x8xf32>
    "tpu.trace_stop"() : () -> ()
    %c2_22 = arith.constant 2 : index
    %c0_23 = arith.constant 0 : index
    %c0_24 = arith.constant 0 : index
    %c0_25 = arith.constant 0 : index
    %21 = vector.load %arg3[%c2_22, %c0_23, %c0_24, %c0_25] : memref<3x4x1x8xf32, #tpu.memory_space<vmem>>, vector<1x4x1x8xf32>
    %22 = vector.shape_cast %21 : vector<1x4x1x8xf32> to vector<4x1x8xf32>
    %23 = vector.broadcast %22 : vector<4x1x8xf32> to vector<4x8x8xf32>
    %24 = arith.addf %20, %23 : vector<4x8x8xf32>
    %cst_26 = arith.constant 0.353553385 : f32
    %25 = vector.broadcast %cst_26 : f32 to vector<4x8x8xf32>
    %26 = arith.mulf %10, %25 : vector<4x8x8xf32>
    %27 = arith.truncf %26 : vector<4x8x8xf32> to vector<4x8x8xbf16>
    %28 = arith.truncf %17 : vector<4x8x8xf32> to vector<4x8x8xbf16>
    "tpu.trace_start"() <{level = 10 : i32, message = "hqe,hke->hqk"}> : () -> ()
    %cst_27 = arith.constant dense<0.000000e+00> : vector<4x8x8xf32>
    %29 = tpu.matmul %27, %28, %cst_27 {dimension_numbers = #tpu.dot_dimension_numbers<[2], [2], [1], [1], [0, 0, 0, 1, 1, 1], [0], [0]>} : vector<4x8x8xbf16>, vector<4x8x8xbf16>, vector<4x8x8xf32> -> vector<4x8x8xf32>
    "tpu.trace_stop"() : () -> ()
    %30 = tpu.iota {dimensions = array<i32: 0>} : vector<8x8xi32>
    %31 = tpu.iota {dimensions = array<i32: 1>} : vector<8x8xi32>
    %32 = arith.cmpi sge, %30, %31 : vector<8x8xi32>
    %cst_28 = arith.constant 0.000000e+00 : f32
    %cst_29 = arith.constant -1.000000e+30 : f32
    %33 = vector.broadcast %cst_28 : f32 to vector<8x8xf32>
    %34 = vector.broadcast %cst_29 : f32 to vector<8x8xf32>
    %35 = arith.select %32, %33, %34 : vector<8x8xi1>, vector<8x8xf32>
    %36 = vector.shape_cast %35 : vector<8x8xf32> to vector<1x8x8xf32>
    %37 = vector.broadcast %36 : vector<1x8x8xf32> to vector<4x8x8xf32>
    %38 = arith.addf %29, %37 : vector<4x8x8xf32>
    %cst_30 = arith.constant dense<0xFF800000> : vector<4x8xf32>
    %39 = vector.multi_reduction <maximumf>, %38, %cst_30 [2] : vector<4x8x8xf32> to vector<4x8xf32>
    %40 = vector.shape_cast %39 : vector<4x8xf32> to vector<4x8x1xf32>
    %41 = vector.broadcast %40 : vector<4x8x1xf32> to vector<4x8x8xf32>
    %42 = arith.subf %38, %41 : vector<4x8x8xf32>
    %43 = math.exp %42 : vector<4x8x8xf32>
    %cst_31 = arith.constant dense<0.000000e+00> : vector<4x8xf32>
    %44 = vector.multi_reduction <add>, %43, %cst_31 [2] : vector<4x8x8xf32> to vector<4x8xf32>
    %45 = vector.shape_cast %44 : vector<4x8xf32> to vector<4x8x1xf32>
    %46 = arith.truncf %43 : vector<4x8x8xf32> to vector<4x8x8xbf16>
    %47 = arith.truncf %24 : vector<4x8x8xf32> to vector<4x8x8xbf16>
    "tpu.trace_start"() <{level = 10 : i32, message = "hqk,hke->hqe"}> : () -> ()
    %cst_32 = arith.constant dense<0.000000e+00> : vector<4x8x8xf32>
    %48 = tpu.matmul %46, %47, %cst_32 {dimension_numbers = #tpu.dot_dimension_numbers<[2], [1], [1], [2], [0, 0, 0, 1, 1, 2], [0], [0]>} : vector<4x8x8xbf16>, vector<4x8x8xbf16>, vector<4x8x8xf32> -> vector<4x8x8xf32>
    "tpu.trace_stop"() : () -> ()
    %49 = tpu.reciprocal %45 : vector<4x8x1xf32> -> vector<4x8x1xf32>
    %50 = vector.broadcast %49 : vector<4x8x1xf32> to vector<4x8x8xf32>
    %51 = arith.mulf %48, %50 : vector<4x8x8xf32>
    %52 = arith.truncf %51 : vector<4x8x8xf32> to vector<4x8x8xbf16>
    %c0_33 = arith.constant 0 : index
    %c0_34 = arith.constant 0 : index
    %c0_35 = arith.constant 0 : index
    %53 = vector.load %arg4[%c0_33, %c0_34, %c0_35] : memref<4x8x32xbf16, #tpu.memory_space<vmem>>, vector<4x8x32xbf16>
    "tpu.trace_start"() <{level = 10 : i32, message = "hqe,hed->hqd"}> : () -> ()
    %cst_36 = arith.constant dense<0.000000e+00> : vector<4x8x32xf32>
    %54 = tpu.matmul %52, %53, %cst_36 {dimension_numbers = #tpu.dot_dimension_numbers<[2], [1], [1], [2], [0, 0, 0, 1, 1, 2], [0], [0]>} : vector<4x8x8xbf16>, vector<4x8x32xbf16>, vector<4x8x32xf32> -> vector<4x8x32xf32>
    "tpu.trace_stop"() : () -> ()
    %cst_37 = arith.constant dense<0.000000e+00> : vector<8x32xf32>
    %55 = vector.multi_reduction <add>, %54, %cst_37 [0] : vector<4x8x32xf32> to vector<8x32xf32>
    %c0_38 = arith.constant 0 : index
    %c0_39 = arith.constant 0 : index
    %56 = vector.load %arg5[%c0_38, %c0_39] : memref<1x32xf32, #tpu.memory_space<vmem>>, vector<1x32xf32>
    %57 = vector.broadcast %56 : vector<1x32xf32> to vector<8x32xf32>
    %58 = arith.addf %55, %57 : vector<8x32xf32>
    %c0_40 = arith.constant 0 : index
    %c0_41 = arith.constant 0 : index
    %c0_42 = arith.constant 0 : index
    %59 = vector.load %arg6[%c0_40, %c0_41, %c0_42] : memref<1x8x32xf32, #tpu.memory_space<vmem>>, vector<1x8x32xf32>
    %60 = vector.shape_cast %59 : vector<1x8x32xf32> to vector<8x32xf32>
    %61 = vector.shape_cast %58 : vector<8x32xf32> to vector<1x8x32xf32>
    tpu.vector_store %arg6[%c0_40, %c0_41, %c0_42], %61 {strides = array<i32>} : memref<1x8x32xf32, #tpu.memory_space<vmem>>, vector<1x8x32xf32>,
    return
  }
  func.func @transform_0(%arg0: i32) -> (i32, i32, i32) {
    %c0_i32 = arith.constant 0 : i32
    %c0_i32_0 = arith.constant 0 : i32
    %c0_i32_1 = arith.constant 0 : i32
    return %arg0, %c0_i32, %c0_i32_0 : i32, i32, i32
  }
  func.func @transform_1(%arg0: i32) -> (i32, i32, i32, i32) {
    %c0_i32 = arith.constant 0 : i32
    %c0_i32_0 = arith.constant 0 : i32
    %c0_i32_1 = arith.constant 0 : i32
    %c0_i32_2 = arith.constant 0 : i32
    %c0_i32_3 = arith.constant 0 : i32
    return %c0_i32, %c0_i32_0, %c0_i32_1, %c0_i32_2 : i32, i32, i32, i32
  }
  func.func @transform_2(%arg0: i32) -> (i32, i32, i32, i32) {
    %c0_i32 = arith.constant 0 : i32
    %c0_i32_0 = arith.constant 0 : i32
    %c0_i32_1 = arith.constant 0 : i32
    %c0_i32_2 = arith.constant 0 : i32
    %c0_i32_3 = arith.constant 0 : i32
    return %c0_i32, %c0_i32_0, %c0_i32_1, %c0_i32_2 : i32, i32, i32, i32
  }
  func.func @transform_3(%arg0: i32) -> (i32, i32, i32) {
    %c0_i32 = arith.constant 0 : i32
    %c0_i32_0 = arith.constant 0 : i32
    %c0_i32_1 = arith.constant 0 : i32
    %c0_i32_2 = arith.constant 0 : i32
    return %c0_i32, %c0_i32_0, %c0_i32_1 : i32, i32, i32
  }
  func.func @transform_4(%arg0: i32) -> (i32, i32) {
    %c0_i32 = arith.constant 0 : i32
    %c0_i32_0 = arith.constant 0 : i32
    %c0_i32_1 = arith.constant 0 : i32
    return %c0_i32, %c0_i32_0 : i32, i32
  }
  func.func @transform_5(%arg0: i32) -> (i32, i32, i32) {
    %c0_i32 = arith.constant 0 : i32
    %c0_i32_0 = arith.constant 0 : i32
    %c0_i32_1 = arith.constant 0 : i32
    return %arg0, %c0_i32, %c0_i32_0 : i32, i32, i32
  }
}

</mosaic_0001>

<llo_original>
// kernel: tpu_custom_call.1
$region0: #{tpu_custom_call.1}
  #allocation0 [shape = 'u32[]', space=smem, size = 0x4, offset = 0x4, fixed_abs, tag = 'smem constant byte address 0x4 - core index']
  #allocation1 [shape = 'u32[144,128]{1,0:T(1,128)}', space=vmem, size = 0x12000, scoped, tag = 'internal scratch']
  %s0 = inlined_call_operand.vmem [shape: bf16[2,8,32], index: 0, kind: input, shape index: {}]
  %s1 = inlined_call_operand.vmem [shape: bf16[3,4,32,8], index: 1, kind: input, shape index: {}]
  %s2 = inlined_call_operand.vmem [shape: f32[3,4,1,8], index: 2, kind: input, shape index: {}]
  %s3 = inlined_call_operand.vmem [shape: bf16[4,8,32], index: 3, kind: input, shape index: {}]
  %s4 = inlined_call_operand.vmem [shape: f32[1,32], index: 4, kind: input, shape index: {}]
  %s5 = inlined_call_operand.hbm [shape: f32[2,8,32], index: 5, kind: output, shape index: {}]
  %s6 = sld [smem:[#allocation0]]
  $region53: #{tpu_custom_call.1} parent=0
    _
  %s8 = ssub.s32 1, %s6
  %s9 = scalar_select 0, %s8, %s6
  $region1: #{tpu_custom_call.1} parent=0
    #allocation2 [shape = 'u8[8192]{0}', space=vmem, size = 0x2000, scoped, tag = 'output window, operand 0']
    #allocation3 [shape = 's32[2]{0}', space=sflag, size = 0x8, scoped, tag = 'scoped memory for tpu_custom_call.1']
    %10 = vsyncpa [#allocation3], 0
    %s11 = scalar_lea.sflag [#allocation3], 1
    %12 = vsyncpa %s11, 0
    loop: start=0, step=1, limit=4
    $region2: #{tpu_custom_call.1} parent=1 // loop_pre_header
      _
    $region3: #{tpu_custom_call.1} parent=1 // loop_header
      %s14 = sphi 0, %s18
      %p15 = scmp.ge.s32.totalorder %s14, 4
      %s24 = sphi 0, %s26
      %s27 = sphi 0, %s24
      %s28 = sphi 0, %s27
      %s44 = sphi 0, %s28
      %s48 = sphi 0, %s48
      %s50 = sphi 0, %s48
      %s51 = sphi 0, %s50
      %s65 = sphi 0, %s51
      %s69 = sphi 0, %s69
      %s71 = sphi 0, %s69
      %s72 = sphi 0, %s71
      %s86 = sphi 0, %s72
      %s90 = sphi 0, %s90
      %s92 = sphi 0, %s90
      %s93 = sphi 0, %s92
      %s107 = sphi 0, %s93
      %s111 = sphi 0, %s111
      %s113 = sphi 0, %s111
      %s114 = sphi 0, %s113
      %s128 = sphi 0, %s114
      %s134 = sphi 0, %s136
      %s137 = sphi 0, %s134
      %s138 = sphi 0, %s137
      %s154 = sphi 0, %s138
    $region4: #{tpu_custom_call.1} parent=1 // loop_header_branch
      %17 = sbr.rel (%p15) target = $region8
    $region5: #{tpu_custom_call.1} parent=1 // loop_body
      %s19 = ssub.s32 %s14, 1
      %s20 = ssub.s32 %s14, 2
      %s21 = sadd.s32 %s14, 1
      %s22 = ssub.s32 %s14, %s21
      %p23 = scmp.eq.s32.totalorder %s22, 0
      %s25 = sadd.s32 %s24, 1
      %s26 = scalar_select %p23, %s24, %s25
      %p29 = pneg %p23
      %p30 = scmp.eq.s32.totalorder %s14, 1
      %p31 = por %p29, %p30
      %p32 = scmp.ne.s32.totalorder %s24, %s27
      %p33 = scmp.eq.s32.totalorder %s14, 0
      %p34 = por %p32, %p33
      %p35 = scmp.ne.s32.totalorder %s24, %s27
      %p36 = scmp.eq.s32.totalorder %s19, 1
      %p37 = por %p35, %p36
      %p38 = scmp.ne.s32.totalorder %s27, %s28
      %p39 = scmp.eq.s32.totalorder %s19, 0
      %p40 = por %p38, %p39
      %p41 = scmp.ne.s32.totalorder %s27, %s28
      %p42 = scmp.eq.s32.totalorder %s20, 1
      %p43 = por %p41, %p42
      %p45 = scmp.ne.s32.totalorder %s28, %s44
      %p46 = scmp.eq.s32.totalorder %s20, 0
      %p47 = por %p45, %p46
      %s49 = sadd.s32 %s48, 1
      %p52 = scmp.eq.s32.totalorder %s14, 1
      %p53 = scmp.ne.s32.totalorder %s48, %s50
      %p54 = scmp.eq.s32.totalorder %s14, 0
      %p55 = por %p53, %p54
      %p56 = scmp.ne.s32.totalorder %s48, %s50
      %p57 = scmp.eq.s32.totalorder %s19, 1
      %p58 = por %p56, %p57
      %p59 = scmp.ne.s32.totalorder %s50, %s51
      %p60 = scmp.eq.s32.totalorder %s19, 0
      %p61 = por %p59, %p60
      %p62 = scmp.ne.s32.totalorder %s50, %s51
      %p63 = scmp.eq.s32.totalorder %s20, 1
      %p64 = por %p62, %p63
      %p66 = scmp.ne.s32.totalorder %s51, %s65
      %p67 = scmp.eq.s32.totalorder %s20, 0
      %p68 = por %p66, %p67
      %s70 = sadd.s32 %s69, 1
      %p73 = scmp.eq.s32.totalorder %s14, 1
      %p74 = scmp.ne.s32.totalorder %s69, %s71
      %p75 = scmp.eq.s32.totalorder %s14, 0
      %p76 = por %p74, %p75
      %p77 = scmp.ne.s32.totalorder %s69, %s71
      %p78 = scmp.eq.s32.totalorder %s19, 1
      %p79 = por %p77, %p78
      %p80 = scmp.ne.s32.totalorder %s71, %s72
      %p81 = scmp.eq.s32.totalorder %s19, 0
      %p82 = por %p80, %p81
      %p83 = scmp.ne.s32.totalorder %s71, %s72
      %p84 = scmp.eq.s32.totalorder %s20, 1
      %p85 = por %p83, %p84
      %p87 = scmp.ne.s32.totalorder %s72, %s86
      %p88 = scmp.eq.s32.totalorder %s20, 0
      %p89 = por %p87, %p88
      %s91 = sadd.s32 %s90, 1
      %p94 = scmp.eq.s32.totalorder %s14, 1
      %p95 = scmp.ne.s32.totalorder %s90, %s92
      %p96 = scmp.eq.s32.totalorder %s14, 0
      %p97 = por %p95, %p96
      %p98 = scmp.ne.s32.totalorder %s90, %s92
      %p99 = scmp.eq.s32.totalorder %s19, 1
      %p100 = por %p98, %p99
      %p101 = scmp.ne.s32.totalorder %s92, %s93
      %p102 = scmp.eq.s32.totalorder %s19, 0
      %p103 = por %p101, %p102
      %p104 = scmp.ne.s32.totalorder %s92, %s93
      %p105 = scmp.eq.s32.totalorder %s20, 1
      %p106 = por %p104, %p105
      %p108 = scmp.ne.s32.totalorder %s93, %s107
      %p109 = scmp.eq.s32.totalorder %s20, 0
      %p110 = por %p108, %p109
      %s112 = sadd.s32 %s111, 1
      %p115 = scmp.eq.s32.totalorder %s14, 1
      %p116 = scmp.ne.s32.totalorder %s111, %s113
      %p117 = scmp.eq.s32.totalorder %s14, 0
      %p118 = por %p116, %p117
      %p119 = scmp.ne.s32.totalorder %s111, %s113
      %p120 = scmp.eq.s32.totalorder %s19, 1
      %p121 = por %p119, %p120
      %p122 = scmp.ne.s32.totalorder %s113, %s114
      %p123 = scmp.eq.s32.totalorder %s19, 0
      %p124 = por %p122, %p123
      %p125 = scmp.ne.s32.totalorder %s113, %s114
      %p126 = scmp.eq.s32.totalorder %s20, 1
      %p127 = por %p125, %p126
      %p129 = scmp.ne.s32.totalorder %s114, %s128
      %p130 = scmp.eq.s32.totalorder %s20, 0
      %p131 = por %p129, %p130
      %s132 = ssub.s32 %s14, %s21
      %p133 = scmp.eq.s32.totalorder %s132, 0
      %s135 = sadd.s32 %s134, 1
      %s136 = scalar_select %p133, %s134, %s135
      %p139 = pneg %p133
      %p140 = scmp.eq.s32.totalorder %s14, 1
      %p141 = por %p139, %p140
      %p142 = scmp.ne.s32.totalorder %s134, %s137
      %p143 = scmp.eq.s32.totalorder %s14, 0
      %p144 = por %p142, %p143
      %p145 = scmp.ne.s32.totalorder %s134, %s137
      %p146 = scmp.eq.s32.totalorder %s19, 1
      %p147 = por %p145, %p146
      %p148 = scmp.ne.s32.totalorder %s137, %s138
      %p149 = scmp.eq.s32.totalorder %s19, 0
      %p150 = por %p148, %p149
      %p151 = scmp.ne.s32.totalorder %s137, %s138
      %p152 = scmp.eq.s32.totalorder %s20, 1
      %p153 = por %p151, %p152
      %p155 = scmp.ne.s32.totalorder %s138, %s154
      %p156 = scmp.eq.s32.totalorder %s20, 0
      %p157 = por %p155, %p156
      %p158 = scmp.le.s32.totalorder 1, %s14
      %p159 = scmp.lt.s32.totalorder %s14, 3
      %p160 = pnand %p158, %p159
      %p161 = pneg %p160
      // Predicated region
      $region9: #{tpu_custom_call.1} parent=5 // pred_check
        _
      $region10: #{tpu_custom_call.1} parent=5 // pred_check_branch
        %163 = sbr.rel (%p160) target = $region12
      $region11: #{tpu_custom_call.1} parent=5 // pred_region
        %s164 = ssub.s32 %s14, 1
        // Predicated region
        $region13: #{tpu_custom_call.1} parent=11 // pred_check
          %p165 = pneg %p61
        $region14: #{tpu_custom_call.1} parent=11 // pred_check_branch
          %167 = sbr.rel (%p165) target = $region16
        $region15: #{tpu_custom_call.1} parent=11 // pred_region
          _
        $region16: #{tpu_custom_call.1} parent=11 // pred_fallthru
          _
        // Predicated region
        $region17: #{tpu_custom_call.1} parent=11 // pred_check
          %p168 = pneg %p82
        $region18: #{tpu_custom_call.1} parent=11 // pred_check_branch
          %170 = sbr.rel (%p168) target = $region20
        $region19: #{tpu_custom_call.1} parent=11 // pred_region
          _
        $region20: #{tpu_custom_call.1} parent=11 // pred_fallthru
          _
        // Predicated region
        $region21: #{tpu_custom_call.1} parent=11 // pred_check
          %p171 = pneg %p103
        $region22: #{tpu_custom_call.1} parent=11 // pred_check_branch
          %173 = sbr.rel (%p171) target = $region24
        $region23: #{tpu_custom_call.1} parent=11 // pred_region
          _
        $region24: #{tpu_custom_call.1} parent=11 // pred_fallthru
          _
        // Predicated region
        $region25: #{tpu_custom_call.1} parent=11 // pred_check
          %p174 = pneg %p124
        $region26: #{tpu_custom_call.1} parent=11 // pred_check_branch
          %176 = sbr.rel (%p174) target = $region28
        $region27: #{tpu_custom_call.1} parent=11 // pred_region
          _
        $region28: #{tpu_custom_call.1} parent=11 // pred_fallthru
          _
      $region12: #{tpu_custom_call.1} parent=5 // pred_fallthru
        _
      %p177 = scmp.lt.s32.totalorder %s14, 2
      // Predicated region
      $region29: #{tpu_custom_call.1} parent=5 // pred_check
        %p178 = pneg %p177
      $region30: #{tpu_custom_call.1} parent=5 // pred_check_branch
        %180 = sbr.rel (%p178) target = $region32
      $region31: #{tpu_custom_call.1} parent=5 // pred_region
        // Predicated region
        $region33: #{tpu_custom_call.1} parent=31 // pred_check
          %p181 = pneg %p34
        $region34: #{tpu_custom_call.1} parent=31 // pred_check_branch
          %183 = sbr.rel (%p181) target = $region36
        $region35: #{tpu_custom_call.1} parent=31 // pred_region
          %p184 = scmp.lt.s32.totalorder %s14, 1
          %s185 = scalar_select %p184, %s14, 1
          %s186 = smul.addr %s185, 4
          %s187 = scalar_lea.vmem %s0, %s186
        $region36: #{tpu_custom_call.1} parent=31 // pred_fallthru
          _
      $region32: #{tpu_custom_call.1} parent=5 // pred_fallthru
        _
      %p188 = scmp.le.s32.totalorder 1, %s14
      %p189 = scmp.lt.s32.totalorder %s14, 3
      %p190 = pnand %p188, %p189
      %p191 = pneg %p190
      // Predicated region
      $region37: #{tpu_custom_call.1} parent=5 // pred_check
        _
      $region38: #{tpu_custom_call.1} parent=5 // pred_check_branch
        %193 = sbr.rel (%p190) target = $region40
      $region39: #{tpu_custom_call.1} parent=5 // pred_region
        %s194 = ssub.s32 %s14, 1
        %p195 = scmp.lt.s32.totalorder %s19, 1
        %s196 = scalar_select %p195, %s19, 1
        %s197 = smul.addr %s196, 4
        %s198 = scalar_lea.vmem %s0, %s197
        %p199 = pneg %p40
        %p200 = pneg %p37
        %p201 = pneg %p61
        %p202 = pneg %p58
        %p203 = pneg %p82
        %p204 = pneg %p79
        %p205 = pneg %p103
        %p206 = pneg %p100
        %p207 = pneg %p124
        %p208 = pneg %p121
        %p209 = pneg %p150
        %p210 = pneg %p147
        %s211 = sand.u32 %s137, 1
        %s212 = scalar_lea.sflag [#allocation3], %s211
        %s213 = sand.u32 %s137, 1
        %s214 = smul.addr %s213, 8
        %s215 = scalar_lea.vmem [#allocation2], %s214
        %p216 = scmp.lt.s32.totalorder %s19, 1
        %s217 = scalar_select %p216, %s19, 1
        %s218 = smul.addr %s217, 4
        %s219 = scalar_lea.vmem %s0, %s218
        %v221 = vld [vmem:[%s219] sm:$0xf]
        %v222 = vld [vmem:[%s1] sm:$0xf]
        %v223 = vld [vmem:[%s1 + $0x4] sm:$0xf]
        %v224 = vld [vmem:[%s1 + $0x8] sm:$0xf]
        %v225 = vld [vmem:[%s1 + $0xc] sm:$0xf]
        %v226 = vld [vmem:[%s1 + $0x10] sm:$0xf]
        %v227 = vld [vmem:[%s1 + $0x14] sm:$0xf]
        %v228 = vld [vmem:[%s1 + $0x18] sm:$0xf]
        %v229 = vld [vmem:[%s1 + $0x1c] sm:$0xf]
        %v230 = vld [vmem:[%s1 + $0x20] sm:$0xf]
        %v231 = vld [vmem:[%s1 + $0x24] sm:$0xf]
        %v232 = vld [vmem:[%s1 + $0x28] sm:$0xf]
        %v233 = vld [vmem:[%s1 + $0x2c] sm:$0xf]
        %v234 = vld [vmem:[%s1 + $0x30] sm:$0xf]
        %v235 = vld [vmem:[%s1 + $0x34] sm:$0xf]
        %v236 = vld [vmem:[%s1 + $0x38] sm:$0xf]
        %v237 = vld [vmem:[%s1 + $0x3c] sm:$0xf]
        %v238 = vld [vmem:[%s2] sm:$0x1]
        %v239 = vld [vmem:[%s2 + $0x1] sm:$0x1]
        %v240 = vld [vmem:[%s2 + $0x2] sm:$0x1]
        %v241 = vld [vmem:[%s2 + $0x3] sm:$0x1]
        %v246 = vlaneseq
        %v247 = vshrl.u32 %v246, 7
        %v248 = vsub.s32 0, %v247
        %v249 = vrot.slane %v238, %v248
        %v250 = vlaneseq
        %v251 = vshrl.u32 %v250, 7
        %v252 = vsub.s32 0, %v251
        %v253 = vrot.slane %v239, %v252
        %v254 = vlaneseq
        %v255 = vshrl.u32 %v254, 7
        %v256 = vsub.s32 0, %v255
        %v257 = vrot.slane %v240, %v256
        %v258 = vlaneseq
        %v259 = vshrl.u32 %v258, 7
        %v260 = vsub.s32 0, %v259
        %v261 = vrot.slane %v241, %v260
        %v270 = vunpack.c.l.b16 %v222
        %v271 = vunpack.c.l.b16 %v223
        %v272 = vunpack.c.l.b16 %v224
        %v273 = vunpack.c.l.b16 %v225
        %v274 = vpack.c.b16 %v271, %v270
        %v275 = vpack.c.b16 %v273, %v272
        %vm278 = vcmask 261120
        %v280 = vsel %vm278, %v221, 0
        %282 = vmatprep.subr.bf16.mxu0 0
        %283 = vmatpush1.bf16.msra.mxu0 %v274
        %284 = vmatprep.subr.bf16.mxu0 0
        %285 = vmatpush1.bf16.msra.mxu0 %v275
        %286 = vmatprep.subr.bf16.mxu0 0
        %287 = vmatpush1.bf16.msra.mxu0 0
        %288 = vmatprep.subr.bf16.mxu0 0
        %289 = vmatpush1.bf16.msra.mxu0 0
        %290 = vmatprep.subr.bf16.mxu0 0
        %291 = vmatpush1.bf16.msra.mxu0 0
        %292 = vmatprep.subr.bf16.mxu0 0
        %293 = vmatpush1.bf16.msra.mxu0 0
        %294 = vmatprep.subr.bf16.mxu0 0
        %295 = vmatpush1.bf16.msra.mxu0 0
        %296 = vmatprep.subr.bf16.mxu0 0
        %297 = vmatpush1.bf16.msra.mxu0 0
        %298 = vmatprep.subr.bf16.mxu0 0
        %299 = vmatpush1.bf16.msra.mxu0 0
        %300 = vmatprep.subr.bf16.mxu0 0
        %301 = vmatpush1.bf16.msra.mxu0 0
        %302 = vmatprep.subr.bf16.mxu0 0
        %303 = vmatpush1.bf16.msra.mxu0 0
        %304 = vmatprep.subr.bf16.mxu0 0
        %305 = vmatpush1.bf16.msra.mxu0 0
        %306 = vmatprep.subr.bf16.mxu0 0
        %307 = vmatpush1.bf16.msra.mxu0 0
        %308 = vmatprep.subr.bf16.mxu0 0
        %309 = vmatpush1.bf16.msra.mxu0 0
        %310 = vmatprep.subr.bf16.mxu0 0
        %311 = vmatpush1.bf16.msra.mxu0 0
        %312 = vmatprep.subr.bf16.mxu0 0
        %313 = vmatpush1.bf16.msra.mxu0 0
        %314 = vmatprep.mubr.bf16.mxu0 0
        %315 = vmatmul.mubr.bf16.gmra.mrb[0].mxu0 %v280
        %v316 = vpop.f32.mrb[0].mxu0
        %v317 = vadd.f32 %v249, %v316
        %v318 = vpop.f32.mrb[0].mxu0
        %v319 = vpop.f32.mrb[0].mxu0
        %v320 = vpop.f32.mrb[0].mxu0
        %321 = vdwg.mxu0
        %v326 = vunpack.c.l.b16 %v226
        %v327 = vunpack.c.l.b16 %v227
        %v328 = vunpack.c.l.b16 %v228
        %v329 = vunpack.c.l.b16 %v229
        %v330 = vpack.c.b16 %v327, %v326
        %v331 = vpack.c.b16 %v329, %v328
        %334 = vmatprep.subr.bf16.mxu0 0
        %335 = vmatpush1.bf16.msra.mxu0 %v330
        %336 = vmatprep.subr.bf16.mxu0 0
        %337 = vmatpush1.bf16.msra.mxu0 %v331
        %338 = vmatprep.subr.bf16.mxu0 0
        %339 = vmatpush1.bf16.msra.mxu0 0
        %340 = vmatprep.subr.bf16.mxu0 0
        %341 = vmatpush1.bf16.msra.mxu0 0
        %342 = vmatprep.subr.bf16.mxu0 0
        %343 = vmatpush1.bf16.msra.mxu0 0
        %344 = vmatprep.subr.bf16.mxu0 0
        %345 = vmatpush1.bf16.msra.mxu0 0
        %346 = vmatprep.subr.bf16.mxu0 0
        %347 = vmatpush1.bf16.msra.mxu0 0
        %348 = vmatprep.subr.bf16.mxu0 0
        %349 = vmatpush1.bf16.msra.mxu0 0
        %350 = vmatprep.subr.bf16.mxu0 0
        %351 = vmatpush1.bf16.msra.mxu0 0
        %352 = vmatprep.subr.bf16.mxu0 0
        %353 = vmatpush1.bf16.msra.mxu0 0
        %354 = vmatprep.subr.bf16.mxu0 0
        %355 = vmatpush1.bf16.msra.mxu0 0
        %356 = vmatprep.subr.bf16.mxu0 0
        %357 = vmatpush1.bf16.msra.mxu0 0
        %358 = vmatprep.subr.bf16.mxu0 0
        %359 = vmatpush1.bf16.msra.mxu0 0
        %360 = vmatprep.subr.bf16.mxu0 0
        %361 = vmatpush1.bf16.msra.mxu0 0
        %362 = vmatprep.subr.bf16.mxu0 0
        %363 = vmatpush1.bf16.msra.mxu0 0
        %364 = vmatprep.subr.bf16.mxu0 0
        %365 = vmatpush1.bf16.msra.mxu0 0
        %366 = vmatprep.mubr.bf16.mxu0 0
        %367 = vmatmul.mubr.bf16.gmra.mrb[0].mxu0 %v280
        %v368 = vpop.f32.mrb[0].mxu0
        %v369 = vadd.f32 %v253, %v368
        %v370 = vpop.f32.mrb[0].mxu0
        %v371 = vpop.f32.mrb[0].mxu0
        %v372 = vpop.f32.mrb[0].mxu0
        %373 = vdwg.mxu0
        %v378 = vunpack.c.l.b16 %v230
        %v379 = vunpack.c.l.b16 %v231
        %v380 = vunpack.c.l.b16 %v232
        %v381 = vunpack.c.l.b16 %v233
        %v382 = vpack.c.b16 %v379, %v378
        %v383 = vpack.c.b16 %v381, %v380
        %386 = vmatprep.subr.bf16.mxu0 0
        %387 = vmatpush1.bf16.msra.mxu0 %v382
        %388 = vmatprep.subr.bf16.mxu0 0
        %389 = vmatpush1.bf16.msra.mxu0 %v383
        %390 = vmatprep.subr.bf16.mxu0 0
        %391 = vmatpush1.bf16.msra.mxu0 0
        %392 = vmatprep.subr.bf16.mxu0 0
        %393 = vmatpush1.bf16.msra.mxu0 0
        %394 = vmatprep.subr.bf16.mxu0 0
        %395 = vmatpush1.bf16.msra.mxu0 0
        %396 = vmatprep.subr.bf16.mxu0 0
        %397 = vmatpush1.bf16.msra.mxu0 0
        %398 = vmatprep.subr.bf16.mxu0 0
        %399 = vmatpush1.bf16.msra.mxu0 0
        %400 = vmatprep.subr.bf16.mxu0 0
        %401 = vmatpush1.bf16.msra.mxu0 0
        %402 = vmatprep.subr.bf16.mxu0 0
        %403 = vmatpush1.bf16.msra.mxu0 0
        %404 = vmatprep.subr.bf16.mxu0 0
        %405 = vmatpush1.bf16.msra.mxu0 0
        %406 = vmatprep.subr.bf16.mxu0 0
        %407 = vmatpush1.bf16.msra.mxu0 0
        %408 = vmatprep.subr.bf16.mxu0 0
        %409 = vmatpush1.bf16.msra.mxu0 0
        %410 = vmatprep.subr.bf16.mxu0 0
        %411 = vmatpush1.bf16.msra.mxu0 0
        %412 = vmatprep.subr.bf16.mxu0 0
        %413 = vmatpush1.bf16.msra.mxu0 0
        %414 = vmatprep.subr.bf16.mxu0 0
        %415 = vmatpush1.bf16.msra.mxu0 0
        %416 = vmatprep.subr.bf16.mxu0 0
        %417 = vmatpush1.bf16.msra.mxu0 0
        %418 = vmatprep.mubr.bf16.mxu0 0
        %419 = vmatmul.mubr.bf16.gmra.mrb[0].mxu0 %v280
        %v420 = vpop.f32.mrb[0].mxu0
        %v421 = vadd.f32 %v257, %v420
        %v422 = vpop.f32.mrb[0].mxu0
        %v423 = vpop.f32.mrb[0].mxu0
        %v424 = vpop.f32.mrb[0].mxu0
        %425 = vdwg.mxu0
        %v430 = vunpack.c.l.b16 %v234
        %v431 = vunpack.c.l.b16 %v235
        %v432 = vunpack.c.l.b16 %v236
        %v433 = vunpack.c.l.b16 %v237
        %v434 = vpack.c.b16 %v431, %v430
        %v435 = vpack.c.b16 %v433, %v432
        %438 = vmatprep.subr.bf16.mxu0 0
        %439 = vmatpush1.bf16.msra.mxu0 %v434
        %440 = vmatprep.subr.bf16.mxu0 0
        %441 = vmatpush1.bf16.msra.mxu0 %v435
        %442 = vmatprep.subr.bf16.mxu0 0
        %443 = vmatpush1.bf16.msra.mxu0 0
        %444 = vmatprep.subr.bf16.mxu0 0
        %445 = vmatpush1.bf16.msra.mxu0 0
        %446 = vmatprep.subr.bf16.mxu0 0
        %447 = vmatpush1.bf16.msra.mxu0 0
        %448 = vmatprep.subr.bf16.mxu0 0
        %449 = vmatpush1.bf16.msra.mxu0 0
        %450 = vmatprep.subr.bf16.mxu0 0
        %451 = vmatpush1.bf16.msra.mxu0 0
        %452 = vmatprep.subr.bf16.mxu0 0
        %453 = vmatpush1.bf16.msra.mxu0 0
        %454 = vmatprep.subr.bf16.mxu0 0
        %455 = vmatpush1.bf16.msra.mxu0 0
        %456 = vmatprep.subr.bf16.mxu0 0
        %457 = vmatpush1.bf16.msra.mxu0 0
        %458 = vmatprep.subr.bf16.mxu0 0
        %459 = vmatpush1.bf16.msra.mxu0 0
        %460 = vmatprep.subr.bf16.mxu0 0
        %461 = vmatpush1.bf16.msra.mxu0 0
        %462 = vmatprep.subr.bf16.mxu0 0
        %463 = vmatpush1.bf16.msra.mxu0 0
        %464 = vmatprep.subr.bf16.mxu0 0
        %465 = vmatpush1.bf16.msra.mxu0 0
        %466 = vmatprep.subr.bf16.mxu0 0
        %467 = vmatpush1.bf16.msra.mxu0 0
        %468 = vmatprep.subr.bf16.mxu0 0
        %469 = vmatpush1.bf16.msra.mxu0 0
        %470 = vmatprep.mubr.bf16.mxu0 0
        %471 = vmatmul.mubr.bf16.gmra.mrb[0].mxu0 %v280
        %v472 = vpop.f32.mrb[0].mxu0
        %v473 = vadd.f32 %v261, %v472
        %v474 = vpop.f32.mrb[0].mxu0
        %v475 = vpop.f32.mrb[0].mxu0
        %v476 = vpop.f32.mrb[0].mxu0
        %477 = vdwg.mxu0
        %s478 = scalar_lea.vmem %s1, 64
        %v479 = vld [vmem:[%s478] sm:$0xf]
        %v480 = vld [vmem:[%s478 + $0x4] sm:$0xf]
        %v481 = vld [vmem:[%s478 + $0x8] sm:$0xf]
        %v482 = vld [vmem:[%s478 + $0xc] sm:$0xf]
        %v483 = vld [vmem:[%s478 + $0x10] sm:$0xf]
        %v484 = vld [vmem:[%s478 + $0x14] sm:$0xf]
        %v485 = vld [vmem:[%s478 + $0x18] sm:$0xf]
        %v486 = vld [vmem:[%s478 + $0x1c] sm:$0xf]
        %v487 = vld [vmem:[%s478 + $0x20] sm:$0xf]
        %v488 = vld [vmem:[%s478 + $0x24] sm:$0xf]
        %v489 = vld [vmem:[%s478 + $0x28] sm:$0xf]
        %v490 = vld [vmem:[%s478 + $0x2c] sm:$0xf]
        %v491 = vld [vmem:[%s478 + $0x30] sm:$0xf]
        %v492 = vld [vmem:[%s478 + $0x34] sm:$0xf]
        %v493 = vld [vmem:[%s478 + $0x38] sm:$0xf]
        %v494 = vld [vmem:[%s478 + $0x3c] sm:$0xf]
        %s495 = scalar_lea.vmem %s2, 4
        %v496 = vld [vmem:[%s495] sm:$0x1]
        %v497 = vld [vmem:[%s495 + $0x1] sm:$0x1]
        %v498 = vld [vmem:[%s495 + $0x2] sm:$0x1]
        %v499 = vld [vmem:[%s495 + $0x3] sm:$0x1]
        %v504 = vlaneseq
        %v505 = vshrl.u32 %v504, 7
        %v506 = vsub.s32 0, %v505
        %v507 = vrot.slane %v496, %v506
        %v508 = vlaneseq
        %v509 = vshrl.u32 %v508, 7
        %v510 = vsub.s32 0, %v509
        %v511 = vrot.slane %v497, %v510
        %v512 = vlaneseq
        %v513 = vshrl.u32 %v512, 7
        %v514 = vsub.s32 0, %v513
        %v515 = vrot.slane %v498, %v514
        %v516 = vlaneseq
        %v517 = vshrl.u32 %v516, 7
        %v518 = vsub.s32 0, %v517
        %v519 = vrot.slane %v499, %v518
        %v528 = vunpack.c.l.b16 %v479
        %v529 = vunpack.c.l.b16 %v480
        %v530 = vunpack.c.l.b16 %v481
        %v531 = vunpack.c.l.b16 %v482
        %v532 = vpack.c.b16 %v529, %v528
        %v533 = vpack.c.b16 %v531, %v530
        %536 = vmatprep.subr.bf16.mxu0 0
        %537 = vmatpush1.bf16.msra.mxu0 %v532
        %538 = vmatprep.subr.bf16.mxu0 0
        %539 = vmatpush1.bf16.msra.mxu0 %v533
        %540 = vmatprep.subr.bf16.mxu0 0
        %541 = vmatpush1.bf16.msra.mxu0 0
        %542 = vmatprep.subr.bf16.mxu0 0
        %543 = vmatpush1.bf16.msra.mxu0 0
        %544 = vmatprep.subr.bf16.mxu0 0
        %545 = vmatpush1.bf16.msra.mxu0 0
        %546 = vmatprep.subr.bf16.mxu0 0
        %547 = vmatpush1.bf16.msra.mxu0 0
        %548 = vmatprep.subr.bf16.mxu0 0
        %549 = vmatpush1.bf16.msra.mxu0 0
        %550 = vmatprep.subr.bf16.mxu0 0
        %551 = vmatpush1.bf16.msra.mxu0 0
        %552 = vmatprep.subr.bf16.mxu0 0
        %553 = vmatpush1.bf16.msra.mxu0 0
        %554 = vmatprep.subr.bf16.mxu0 0
        %555 = vmatpush1.bf16.msra.mxu0 0
        %556 = vmatprep.subr.bf16.mxu0 0
        %557 = vmatpush1.bf16.msra.mxu0 0
        %558 = vmatprep.subr.bf16.mxu0 0
        %559 = vmatpush1.bf16.msra.mxu0 0
        %560 = vmatprep.subr.bf16.mxu0 0
        %561 = vmatpush1.bf16.msra.mxu0 0
        %562 = vmatprep.subr.bf16.mxu0 0
        %563 = vmatpush1.bf16.msra.mxu0 0
        %564 = vmatprep.subr.bf16.mxu0 0
        %565 = vmatpush1.bf16.msra.mxu0 0
        %566 = vmatprep.subr.bf16.mxu0 0
        %567 = vmatpush1.bf16.msra.mxu0 0
        %568 = vmatprep.mubr.bf16.mxu0 0
        %569 = vmatmul.mubr.bf16.gmra.mrb[0].mxu0 %v280
        %v570 = vpop.f32.mrb[0].mxu0
        %v571 = vadd.f32 %v507, %v570
        %v572 = vpop.f32.mrb[0].mxu0
        %v573 = vpop.f32.mrb[0].mxu0
        %v574 = vpop.f32.mrb[0].mxu0
        %575 = vdwg.mxu0
        %v580 = vunpack.c.l.b16 %v483
        %v581 = vunpack.c.l.b16 %v484
        %v582 = vunpack.c.l.b16 %v485
        %v583 = vunpack.c.l.b16 %v486
        %v584 = vpack.c.b16 %v581, %v580
        %v585 = vpack.c.b16 %v583, %v582
        %588 = vmatprep.subr.bf16.mxu0 0
        %589 = vmatpush1.bf16.msra.mxu0 %v584
        %590 = vmatprep.subr.bf16.mxu0 0
        %591 = vmatpush1.bf16.msra.mxu0 %v585
        %592 = vmatprep.subr.bf16.mxu0 0
        %593 = vmatpush1.bf16.msra.mxu0 0
        %594 = vmatprep.subr.bf16.mxu0 0
        %595 = vmatpush1.bf16.msra.mxu0 0
        %596 = vmatprep.subr.bf16.mxu0 0
        %597 = vmatpush1.bf16.msra.mxu0 0
        %598 = vmatprep.subr.bf16.mxu0 0
        %599 = vmatpush1.bf16.msra.mxu0 0
        %600 = vmatprep.subr.bf16.mxu0 0
        %601 = vmatpush1.bf16.msra.mxu0 0
        %602 = vmatprep.subr.bf16.mxu0 0
        %603 = vmatpush1.bf16.msra.mxu0 0
        %604 = vmatprep.subr.bf16.mxu0 0
        %605 = vmatpush1.bf16.msra.mxu0 0
        %606 = vmatprep.subr.bf16.mxu0 0
        %607 = vmatpush1.bf16.msra.mxu0 0
        %608 = vmatprep.subr.bf16.mxu0 0
        %609 = vmatpush1.bf16.msra.mxu0 0
        %610 = vmatprep.subr.bf16.mxu0 0
        %611 = vmatpush1.bf16.msra.mxu0 0
        %612 = vmatprep.subr.bf16.mxu0 0
        %613 = vmatpush1.bf16.msra.mxu0 0
        %614 = vmatprep.subr.bf16.mxu0 0
        %615 = vmatpush1.bf16.msra.mxu0 0
        %616 = vmatprep.subr.bf16.mxu0 0
        %617 = vmatpush1.bf16.msra.mxu0 0
        %618 = vmatprep.subr.bf16.mxu0 0
        %619 = vmatpush1.bf16.msra.mxu0 0
        %620 = vmatprep.mubr.bf16.mxu0 0
        %621 = vmatmul.mubr.bf16.gmra.mrb[0].mxu0 %v280
        %v622 = vpop.f32.mrb[0].mxu0
        %v623 = vadd.f32 %v511, %v622
        %v624 = vpop.f32.mrb[0].mxu0
        %v625 = vpop.f32.mrb[0].mxu0
        %v626 = vpop.f32.mrb[0].mxu0
        %627 = vdwg.mxu0
        %v632 = vunpack.c.l.b16 %v487
        %v633 = vunpack.c.l.b16 %v488
        %v634 = vunpack.c.l.b16 %v489
        %v635 = vunpack.c.l.b16 %v490
        %v636 = vpack.c.b16 %v633, %v632
        %v637 = vpack.c.b16 %v635, %v634
        %640 = vmatprep.subr.bf16.mxu0 0
        %641 = vmatpush1.bf16.msra.mxu0 %v636
        %642 = vmatprep.subr.bf16.mxu0 0
        %643 = vmatpush1.bf16.msra.mxu0 %v637
        %644 = vmatprep.subr.bf16.mxu0 0
        %645 = vmatpush1.bf16.msra.mxu0 0
        %646 = vmatprep.subr.bf16.mxu0 0
        %647 = vmatpush1.bf16.msra.mxu0 0
        %648 = vmatprep.subr.bf16.mxu0 0
        %649 = vmatpush1.bf16.msra.mxu0 0
        %650 = vmatprep.subr.bf16.mxu0 0
        %651 = vmatpush1.bf16.msra.mxu0 0
        %652 = vmatprep.subr.bf16.mxu0 0
        %653 = vmatpush1.bf16.msra.mxu0 0
        %654 = vmatprep.subr.bf16.mxu0 0
        %655 = vmatpush1.bf16.msra.mxu0 0
        %656 = vmatprep.subr.bf16.mxu0 0
        %657 = vmatpush1.bf16.msra.mxu0 0
        %658 = vmatprep.subr.bf16.mxu0 0
        %659 = vmatpush1.bf16.msra.mxu0 0
        %660 = vmatprep.subr.bf16.mxu0 0
        %661 = vmatpush1.bf16.msra.mxu0 0
        %662 = vmatprep.subr.bf16.mxu0 0
        %663 = vmatpush1.bf16.msra.mxu0 0
        %664 = vmatprep.subr.bf16.mxu0 0
        %665 = vmatpush1.bf16.msra.mxu0 0
        %666 = vmatprep.subr.bf16.mxu0 0
        %667 = vmatpush1.bf16.msra.mxu0 0
        %668 = vmatprep.subr.bf16.mxu0 0
        %669 = vmatpush1.bf16.msra.mxu0 0
        %670 = vmatprep.subr.bf16.mxu0 0
        %671 = vmatpush1.bf16.msra.mxu0 0
        %672 = vmatprep.mubr.bf16.mxu0 0
        %673 = vmatmul.mubr.bf16.gmra.mrb[0].mxu0 %v280
        %v674 = vpop.f32.mrb[0].mxu0
        %v675 = vadd.f32 %v515, %v674
        %v676 = vpop.f32.mrb[0].mxu0
        %v677 = vpop.f32.mrb[0].mxu0
        %v678 = vpop.f32.mrb[0].mxu0
        %679 = vdwg.mxu0
        %v684 = vunpack.c.l.b16 %v491
        %v685 = vunpack.c.l.b16 %v492
        %v686 = vunpack.c.l.b16 %v493
        %v687 = vunpack.c.l.b16 %v494
        %v688 = vpack.c.b16 %v685, %v684
        %v689 = vpack.c.b16 %v687, %v686
        %692 = vmatprep.subr.bf16.mxu0 0
        %693 = vmatpush1.bf16.msra.mxu0 %v688
        %694 = vmatprep.subr.bf16.mxu0 0
        %695 = vmatpush1.bf16.msra.mxu0 %v689
        %696 = vmatprep.subr.bf16.mxu0 0
        %697 = vmatpush1.bf16.msra.mxu0 0
        %698 = vmatprep.subr.bf16.mxu0 0
        %699 = vmatpush1.bf16.msra.mxu0 0
        %700 = vmatprep.subr.bf16.mxu0 0
        %701 = vmatpush1.bf16.msra.mxu0 0
        %702 = vmatprep.subr.bf16.mxu0 0
        %703 = vmatpush1.bf16.msra.mxu0 0
        %704 = vmatprep.subr.bf16.mxu0 0
        %705 = vmatpush1.bf16.msra.mxu0 0
        %706 = vmatprep.subr.bf16.mxu0 0
        %707 = vmatpush1.bf16.msra.mxu0 0
        %708 = vmatprep.subr.bf16.mxu0 0
        %709 = vmatpush1.bf16.msra.mxu0 0
        %710 = vmatprep.subr.bf16.mxu0 0
        %711 = vmatpush1.bf16.msra.mxu0 0
        %712 = vmatprep.subr.bf16.mxu0 0
        %713 = vmatpush1.bf16.msra.mxu0 0
        %714 = vmatprep.subr.bf16.mxu0 0
        %715 = vmatpush1.bf16.msra.mxu0 0
        %716 = vmatprep.subr.bf16.mxu0 0
        %717 = vmatpush1.bf16.msra.mxu0 0
        %718 = vmatprep.subr.bf16.mxu0 0
        %719 = vmatpush1.bf16.msra.mxu0 0
        %720 = vmatprep.subr.bf16.mxu0 0
        %721 = vmatpush1.bf16.msra.mxu0 0
        %722 = vmatprep.subr.bf16.mxu0 0
        %723 = vmatpush1.bf16.msra.mxu0 0
        %724 = vmatprep.mubr.bf16.mxu0 0
        %725 = vmatmul.mubr.bf16.gmra.mrb[0].mxu0 %v280
        %v726 = vpop.f32.mrb[0].mxu0
        %v727 = vadd.f32 %v519, %v726
        %v728 = vpop.f32.mrb[0].mxu0
        %v729 = vpop.f32.mrb[0].mxu0
        %v730 = vpop.f32.mrb[0].mxu0
        %731 = vdwg.mxu0
        %s732 = scalar_lea.vmem %s1, 128
        %v733 = vld [vmem:[%s732] sm:$0xf]
        %v734 = vld [vmem:[%s732 + $0x4] sm:$0xf]
        %v735 = vld [vmem:[%s732 + $0x8] sm:$0xf]
        %v736 = vld [vmem:[%s732 + $0xc] sm:$0xf]
        %v737 = vld [vmem:[%s732 + $0x10] sm:$0xf]
        %v738 = vld [vmem:[%s732 + $0x14] sm:$0xf]
        %v739 = vld [vmem:[%s732 + $0x18] sm:$0xf]
        %v740 = vld [vmem:[%s732 + $0x1c] sm:$0xf]
        %v741 = vld [vmem:[%s732 + $0x20] sm:$0xf]
        %v742 = vld [vmem:[%s732 + $0x24] sm:$0xf]
        %v743 = vld [vmem:[%s732 + $0x28] sm:$0xf]
        %v744 = vld [vmem:[%s732 + $0x2c] sm:$0xf]
        %v745 = vld [vmem:[%s732 + $0x30] sm:$0xf]
        %v746 = vld [vmem:[%s732 + $0x34] sm:$0xf]
        %v747 = vld [vmem:[%s732 + $0x38] sm:$0xf]
        %v748 = vld [vmem:[%s732 + $0x3c] sm:$0xf]
        %s749 = scalar_lea.vmem %s2, 8
        %v750 = vld [vmem:[%s749] sm:$0x1]
        %v751 = vld [vmem:[%s749 + $0x1] sm:$0x1]
        %v752 = vld [vmem:[%s749 + $0x2] sm:$0x1]
        %v753 = vld [vmem:[%s749 + $0x3] sm:$0x1]
        %v758 = vlaneseq
        %v759 = vshrl.u32 %v758, 7
        %v760 = vsub.s32 0, %v759
        %v761 = vrot.slane %v750, %v760
        %v762 = vlaneseq
        %v763 = vshrl.u32 %v762, 7
        %v764 = vsub.s32 0, %v763
        %v765 = vrot.slane %v751, %v764
        %v766 = vlaneseq
        %v767 = vshrl.u32 %v766, 7
        %v768 = vsub.s32 0, %v767
        %v769 = vrot.slane %v752, %v768
        %v770 = vlaneseq
        %v771 = vshrl.u32 %v770, 7
        %v772 = vsub.s32 0, %v771
        %v773 = vrot.slane %v753, %v772
        %v782 = vunpack.c.l.b16 %v733
        %v783 = vunpack.c.l.b16 %v734
        %v784 = vunpack.c.l.b16 %v735
        %v785 = vunpack.c.l.b16 %v736
        %v786 = vpack.c.b16 %v783, %v782
        %v787 = vpack.c.b16 %v785, %v784
        %790 = vmatprep.subr.bf16.mxu0 0
        %791 = vmatpush1.bf16.msra.mxu0 %v786
        %792 = vmatprep.subr.bf16.mxu0 0
        %793 = vmatpush1.bf16.msra.mxu0 %v787
        %794 = vmatprep.subr.bf16.mxu0 0
        %795 = vmatpush1.bf16.msra.mxu0 0
        %796 = vmatprep.subr.bf16.mxu0 0
        %797 = vmatpush1.bf16.msra.mxu0 0
        %798 = vmatprep.subr.bf16.mxu0 0
        %799 = vmatpush1.bf16.msra.mxu0 0
        %800 = vmatprep.subr.bf16.mxu0 0
        %801 = vmatpush1.bf16.msra.mxu0 0
        %802 = vmatprep.subr.bf16.mxu0 0
        %803 = vmatpush1.bf16.msra.mxu0 0
        %804 = vmatprep.subr.bf16.mxu0 0
        %805 = vmatpush1.bf16.msra.mxu0 0
        %806 = vmatprep.subr.bf16.mxu0 0
        %807 = vmatpush1.bf16.msra.mxu0 0
        %808 = vmatprep.subr.bf16.mxu0 0
        %809 = vmatpush1.bf16.msra.mxu0 0
        %810 = vmatprep.subr.bf16.mxu0 0
        %811 = vmatpush1.bf16.msra.mxu0 0
        %812 = vmatprep.subr.bf16.mxu0 0
        %813 = vmatpush1.bf16.msra.mxu0 0
        %814 = vmatprep.subr.bf16.mxu0 0
        %815 = vmatpush1.bf16.msra.mxu0 0
        %816 = vmatprep.subr.bf16.mxu0 0
        %817 = vmatpush1.bf16.msra.mxu0 0
        %818 = vmatprep.subr.bf16.mxu0 0
        %819 = vmatpush1.bf16.msra.mxu0 0
        %820 = vmatprep.subr.bf16.mxu0 0
        %821 = vmatpush1.bf16.msra.mxu0 0
        %822 = vmatprep.mubr.bf16.mxu0 0
        %823 = vmatmul.mubr.bf16.gmra.mrb[0].mxu0 %v280
        %v824 = vpop.f32.mrb[0].mxu0
        %v825 = vadd.f32 %v761, %v824
        %v826 = vpop.f32.mrb[0].mxu0
        %v827 = vpop.f32.mrb[0].mxu0
        %v828 = vpop.f32.mrb[0].mxu0
        %829 = vdwg.mxu0
        %v834 = vunpack.c.l.b16 %v737
        %v835 = vunpack.c.l.b16 %v738
        %v836 = vunpack.c.l.b16 %v739
        %v837 = vunpack.c.l.b16 %v740
        %v838 = vpack.c.b16 %v835, %v834
        %v839 = vpack.c.b16 %v837, %v836
        %842 = vmatprep.subr.bf16.mxu0 0
        %843 = vmatpush1.bf16.msra.mxu0 %v838
        %844 = vmatprep.subr.bf16.mxu0 0
        %845 = vmatpush1.bf16.msra.mxu0 %v839
        %846 = vmatprep.subr.bf16.mxu0 0
        %847 = vmatpush1.bf16.msra.mxu0 0
        %848 = vmatprep.subr.bf16.mxu0 0
        %849 = vmatpush1.bf16.msra.mxu0 0
        %850 = vmatprep.subr.bf16.mxu0 0
        %851 = vmatpush1.bf16.msra.mxu0 0
        %852 = vmatprep.subr.bf16.mxu0 0
        %853 = vmatpush1.bf16.msra.mxu0 0
        %854 = vmatprep.subr.bf16.mxu0 0
        %855 = vmatpush1.bf16.msra.mxu0 0
        %856 = vmatprep.subr.bf16.mxu0 0
        %857 = vmatpush1.bf16.msra.mxu0 0
        %858 = vmatprep.subr.bf16.mxu0 0
        %859 = vmatpush1.bf16.msra.mxu0 0
        %860 = vmatprep.subr.bf16.mxu0 0
        %861 = vmatpush1.bf16.msra.mxu0 0
        %862 = vmatprep.subr.bf16.mxu0 0
        %863 = vmatpush1.bf16.msra.mxu0 0
        %864 = vmatprep.subr.bf16.mxu0 0
        %865 = vmatpush1.bf16.msra.mxu0 0
        %866 = vmatprep.subr.bf16.mxu0 0
        %867 = vmatpush1.bf16.msra.mxu0 0
        %868 = vmatprep.subr.bf16.mxu0 0
        %869 = vmatpush1.bf16.msra.mxu0 0
        %870 = vmatprep.subr.bf16.mxu0 0
        %871 = vmatpush1.bf16.msra.mxu0 0
        %872 = vmatprep.subr.bf16.mxu0 0
        %873 = vmatpush1.bf16.msra.mxu0 0
        %874 = vmatprep.mubr.bf16.mxu0 0
        %875 = vmatmul.mubr.bf16.gmra.mrb[0].mxu0 %v280
        %v876 = vpop.f32.mrb[0].mxu0
        %v877 = vadd.f32 %v765, %v876
        %v878 = vpop.f32.mrb[0].mxu0
        %v879 = vpop.f32.mrb[0].mxu0
        %v880 = vpop.f32.mrb[0].mxu0
        %881 = vdwg.mxu0
        %v886 = vunpack.c.l.b16 %v741
        %v887 = vunpack.c.l.b16 %v742
        %v888 = vunpack.c.l.b16 %v743
        %v889 = vunpack.c.l.b16 %v744
        %v890 = vpack.c.b16 %v887, %v886
        %v891 = vpack.c.b16 %v889, %v888
        %894 = vmatprep.subr.bf16.mxu0 0
        %895 = vmatpush1.bf16.msra.mxu0 %v890
        %896 = vmatprep.subr.bf16.mxu0 0
        %897 = vmatpush1.bf16.msra.mxu0 %v891
        %898 = vmatprep.subr.bf16.mxu0 0
        %899 = vmatpush1.bf16.msra.mxu0 0
        %900 = vmatprep.subr.bf16.mxu0 0
        %901 = vmatpush1.bf16.msra.mxu0 0
        %902 = vmatprep.subr.bf16.mxu0 0
        %903 = vmatpush1.bf16.msra.mxu0 0
        %904 = vmatprep.subr.bf16.mxu0 0
        %905 = vmatpush1.bf16.msra.mxu0 0
        %906 = vmatprep.subr.bf16.mxu0 0
        %907 = vmatpush1.bf16.msra.mxu0 0
        %908 = vmatprep.subr.bf16.mxu0 0
        %909 = vmatpush1.bf16.msra.mxu0 0
        %910 = vmatprep.subr.bf16.mxu0 0
        %911 = vmatpush1.bf16.msra.mxu0 0
        %912 = vmatprep.subr.bf16.mxu0 0
        %913 = vmatpush1.bf16.msra.mxu0 0
        %914 = vmatprep.subr.bf16.mxu0 0
        %915 = vmatpush1.bf16.msra.mxu0 0
        %916 = vmatprep.subr.bf16.mxu0 0
        %917 = vmatpush1.bf16.msra.mxu0 0
        %918 = vmatprep.subr.bf16.mxu0 0
        %919 = vmatpush1.bf16.msra.mxu0 0
        %920 = vmatprep.subr.bf16.mxu0 0
        %921 = vmatpush1.bf16.msra.mxu0 0
        %922 = vmatprep.subr.bf16.mxu0 0
        %923 = vmatpush1.bf16.msra.mxu0 0
        %924 = vmatprep.subr.bf16.mxu0 0
        %925 = vmatpush1.bf16.msra.mxu0 0
        %926 = vmatprep.mubr.bf16.mxu0 0
        %927 = vmatmul.mubr.bf16.gmra.mrb[0].mxu0 %v280
        %v928 = vpop.f32.mrb[0].mxu0
        %v929 = vadd.f32 %v769, %v928
        %v930 = vpop.f32.mrb[0].mxu0
        %v931 = vpop.f32.mrb[0].mxu0
        %v932 = vpop.f32.mrb[0].mxu0
        %933 = vdwg.mxu0
        %v938 = vunpack.c.l.b16 %v745
        %v939 = vunpack.c.l.b16 %v746
        %v940 = vunpack.c.l.b16 %v747
        %v941 = vunpack.c.l.b16 %v748
        %v942 = vpack.c.b16 %v939, %v938
        %v943 = vpack.c.b16 %v941, %v940
        %946 = vmatprep.subr.bf16.mxu0 0
        %947 = vmatpush1.bf16.msra.mxu0 %v942
        %948 = vmatprep.subr.bf16.mxu0 0
        %949 = vmatpush1.bf16.msra.mxu0 %v943
        %950 = vmatprep.subr.bf16.mxu0 0
        %951 = vmatpush1.bf16.msra.mxu0 0
        %952 = vmatprep.subr.bf16.mxu0 0
        %953 = vmatpush1.bf16.msra.mxu0 0
        %954 = vmatprep.subr.bf16.mxu0 0
        %955 = vmatpush1.bf16.msra.mxu0 0
        %956 = vmatprep.subr.bf16.mxu0 0
        %957 = vmatpush1.bf16.msra.mxu0 0
        %958 = vmatprep.subr.bf16.mxu0 0
        %959 = vmatpush1.bf16.msra.mxu0 0
        %960 = vmatprep.subr.bf16.mxu0 0
        %961 = vmatpush1.bf16.msra.mxu0 0
        %962 = vmatprep.subr.bf16.mxu0 0
        %963 = vmatpush1.bf16.msra.mxu0 0
        %964 = vmatprep.subr.bf16.mxu0 0
        %965 = vmatpush1.bf16.msra.mxu0 0
        %966 = vmatprep.subr.bf16.mxu0 0
        %967 = vmatpush1.bf16.msra.mxu0 0
        %968 = vmatprep.subr.bf16.mxu0 0
        %969 = vmatpush1.bf16.msra.mxu0 0
        %970 = vmatprep.subr.bf16.mxu0 0
        %971 = vmatpush1.bf16.msra.mxu0 0
        %972 = vmatprep.subr.bf16.mxu0 0
        %973 = vmatpush1.bf16.msra.mxu0 0
        %974 = vmatprep.subr.bf16.mxu0 0
        %975 = vmatpush1.bf16.msra.mxu0 0
        %976 = vmatprep.subr.bf16.mxu0 0
        %977 = vmatpush1.bf16.msra.mxu0 0
        %978 = vmatprep.mubr.bf16.mxu0 0
        %979 = vmatmul.mubr.bf16.gmra.mrb[0].mxu0 %v280
        %v980 = vpop.f32.mrb[0].mxu0
        %v981 = vadd.f32 %v773, %v980
        %v982 = vpop.f32.mrb[0].mxu0
        %v983 = vpop.f32.mrb[0].mxu0
        %v984 = vpop.f32.mrb[0].mxu0
        %985 = vdwg.mxu0
        %v986 = vmul.f32 %v317, 0.35355338
        %v987 = vmul.f32 %v369, 0.35355338
        %v988 = vmul.f32 %v421, 0.35355338
        %v989 = vmul.f32 %v473, 0.35355338
        %v990 = vpack.c.bf16 %v986, %v986
        %v991 = vpack.c.bf16 %v987, %v987
        %v992 = vpack.c.bf16 %v988, %v988
        %v993 = vpack.c.bf16 %v989, %v989
        %v994 = vpack.c.bf16 %v571, %v571
        %v995 = vpack.c.bf16 %v623, %v623
        %v996 = vpack.c.bf16 %v675, %v675
        %v997 = vpack.c.bf16 %v727, %v727
        %v998 = vlaneseq
        %v999 = vshrl.u32 %v998, 7
        %v1000 = vlaneseq
        %v1001 = vand.u32 %v1000, 127
        %vm1002 = vcmp.ge.s32.totalorder %v999, %v1001
        %v1003 = vsel %vm1002, 0.0, -1e+30
        %vm1004 = vcmask 64512
        %v1006 = vsel %vm1004, %v990, 0
        %v1009 = vsel %vm1004, %v994, 0
        %1011 = vmatprep.subr.bf16.mxu0 0
        %1012 = vmatpush1.bf16.xpose.msra.mxu0 %v1009
        %1013 = vmatprep.subr.bf16.mxu0 0
        %1014 = vmatpush1.bf16.xpose.msra.mxu0 0
        %1015 = vmatprep.subr.bf16.mxu0 0
        %1016 = vmatpush1.bf16.xpose.msra.mxu0 0
        %1017 = vmatprep.subr.bf16.mxu0 0
        %1018 = vmatpush1.bf16.xpose.msra.mxu0 0
        %1019 = vmatprep.subr.bf16.mxu0 0
        %1020 = vmatpush1.bf16.xpose.msra.mxu0 0
        %1021 = vmatprep.subr.bf16.mxu0 0
        %1022 = vmatpush1.bf16.xpose.msra.mxu0 0
        %1023 = vmatprep.subr.bf16.mxu0 0
        %1024 = vmatpush1.bf16.xpose.msra.mxu0 0
        %1025 = vmatprep.subr.bf16.mxu0 0
        %1026 = vmatpush1.bf16.xpose.msra.mxu0 0
        %1027 = vmatprep.subr.bf16.mxu0 0
        %1028 = vmatpush1.bf16.xpose.msra.mxu0 0
        %1029 = vmatprep.subr.bf16.mxu0 0
        %1030 = vmatpush1.bf16.xpose.msra.mxu0 0
        %1031 = vmatprep.subr.bf16.mxu0 0
        %1032 = vmatpush1.bf16.xpose.msra.mxu0 0
        %1033 = vmatprep.subr.bf16.mxu0 0
        %1034 = vmatpush1.bf16.xpose.msra.mxu0 0
        %1035 = vmatprep.subr.bf16.mxu0 0
        %1036 = vmatpush1.bf16.xpose.msra.mxu0 0
        %1037 = vmatprep.subr.bf16.mxu0 0
        %1038 = vmatpush1.bf16.xpose.msra.mxu0 0
        %1039 = vmatprep.subr.bf16.mxu0 0
        %1040 = vmatpush1.bf16.xpose.msra.mxu0 0
        %1041 = vmatprep.subr.bf16.mxu0 0
        %1042 = vmatpush1.bf16.xpose.msra.mxu0 0
        %1043 = vmatprep.mubr.bf16.mxu0 0
        %1044 = vmatmul.mubr.bf16.gmra.mrb[0].mxu0 %v1006
        %v1045 = vpop.f32.mrb[0].mxu0
        %v1046 = vadd.f32 %v1003, %v1045
        %v1047 = vpop.f32.mrb[0].mxu0
        %v1048 = vpop.f32.mrb[0].mxu0
        %v1049 = vpop.f32.mrb[0].mxu0
        %1050 = vdwg.mxu0
        %v1052 = vsel %vm1004, %v991, 0
        %v1055 = vsel %vm1004, %v995, 0
        %1057 = vmatprep.subr.bf16.mxu0 0
        %1058 = vmatpush1.bf16.xpose.msra.mxu0 %v1055
        %1059 = vmatprep.subr.bf16.mxu0 0
        %1060 = vmatpush1.bf16.xpose.msra.mxu0 0
        %1061 = vmatprep.subr.bf16.mxu0 0
        %1062 = vmatpush1.bf16.xpose.msra.mxu0 0
        %1063 = vmatprep.subr.bf16.mxu0 0
        %1064 = vmatpush1.bf16.xpose.msra.mxu0 0
        %1065 = vmatprep.subr.bf16.mxu0 0
        %1066 = vmatpush1.bf16.xpose.msra.mxu0 0
        %1067 = vmatprep.subr.bf16.mxu0 0
        %1068 = vmatpush1.bf16.xpose.msra.mxu0 0
        %1069 = vmatprep.subr.bf16.mxu0 0
        %1070 = vmatpush1.bf16.xpose.msra.mxu0 0
        %1071 = vmatprep.subr.bf16.mxu0 0
        %1072 = vmatpush1.bf16.xpose.msra.mxu0 0
        %1073 = vmatprep.subr.bf16.mxu0 0
        %1074 = vmatpush1.bf16.xpose.msra.mxu0 0
        %1075 = vmatprep.subr.bf16.mxu0 0
        %1076 = vmatpush1.bf16.xpose.msra.mxu0 0
        %1077 = vmatprep.subr.bf16.mxu0 0
        %1078 = vmatpush1.bf16.xpose.msra.mxu0 0
        %1079 = vmatprep.subr.bf16.mxu0 0
        %1080 = vmatpush1.bf16.xpose.msra.mxu0 0
        %1081 = vmatprep.subr.bf16.mxu0 0
        %1082 = vmatpush1.bf16.xpose.msra.mxu0 0
        %1083 = vmatprep.subr.bf16.mxu0 0
        %1084 = vmatpush1.bf16.xpose.msra.mxu0 0
        %1085 = vmatprep.subr.bf16.mxu0 0
        %1086 = vmatpush1.bf16.xpose.msra.mxu0 0
        %1087 = vmatprep.subr.bf16.mxu0 0
        %1088 = vmatpush1.bf16.xpose.msra.mxu0 0
        %1089 = vmatprep.mubr.bf16.mxu0 0
        %1090 = vmatmul.mubr.bf16.gmra.mrb[0].mxu0 %v1052
        %v1091 = vpop.f32.mrb[0].mxu0
        %v1092 = vadd.f32 %v1003, %v1091
        %v1093 = vpop.f32.mrb[0].mxu0
        %v1094 = vpop.f32.mrb[0].mxu0
        %v1095 = vpop.f32.mrb[0].mxu0
        %1096 = vdwg.mxu0
        %v1098 = vsel %vm1004, %v992, 0
        %v1101 = vsel %vm1004, %v996, 0
        %1103 = vmatprep.subr.bf16.mxu0 0
        %1104 = vmatpush1.bf16.xpose.msra.mxu0 %v1101
        %1105 = vmatprep.subr.bf16.mxu0 0
        %1106 = vmatpush1.bf16.xpose.msra.mxu0 0
        %1107 = vmatprep.subr.bf16.mxu0 0
        %1108 = vmatpush1.bf16.xpose.msra.mxu0 0
        %1109 = vmatprep.subr.bf16.mxu0 0
        %1110 = vmatpush1.bf16.xpose.msra.mxu0 0
        %1111 = vmatprep.subr.bf16.mxu0 0
        %1112 = vmatpush1.bf16.xpose.msra.mxu0 0
        %1113 = vmatprep.subr.bf16.mxu0 0
        %1114 = vmatpush1.bf16.xpose.msra.mxu0 0
        %1115 = vmatprep.subr.bf16.mxu0 0
        %1116 = vmatpush1.bf16.xpose.msra.mxu0 0
        %1117 = vmatprep.subr.bf16.mxu0 0
        %1118 = vmatpush1.bf16.xpose.msra.mxu0 0
        %1119 = vmatprep.subr.bf16.mxu0 0
        %1120 = vmatpush1.bf16.xpose.msra.mxu0 0
        %1121 = vmatprep.subr.bf16.mxu0 0
        %1122 = vmatpush1.bf16.xpose.msra.mxu0 0
        %1123 = vmatprep.subr.bf16.mxu0 0
        %1124 = vmatpush1.bf16.xpose.msra.mxu0 0
        %1125 = vmatprep.subr.bf16.mxu0 0
        %1126 = vmatpush1.bf16.xpose.msra.mxu0 0
        %1127 = vmatprep.subr.bf16.mxu0 0
        %1128 = vmatpush1.bf16.xpose.msra.mxu0 0
        %1129 = vmatprep.subr.bf16.mxu0 0
        %1130 = vmatpush1.bf16.xpose.msra.mxu0 0
        %1131 = vmatprep.subr.bf16.mxu0 0
        %1132 = vmatpush1.bf16.xpose.msra.mxu0 0
        %1133 = vmatprep.subr.bf16.mxu0 0
        %1134 = vmatpush1.bf16.xpose.msra.mxu0 0
        %1135 = vmatprep.mubr.bf16.mxu0 0
        %1136 = vmatmul.mubr.bf16.gmra.mrb[0].mxu0 %v1098
        %v1137 = vpop.f32.mrb[0].mxu0
        %v1138 = vadd.f32 %v1003, %v1137
        %v1139 = vpop.f32.mrb[0].mxu0
        %v1140 = vpop.f32.mrb[0].mxu0
        %v1141 = vpop.f32.mrb[0].mxu0
        %1142 = vdwg.mxu0
        %v1144 = vsel %vm1004, %v993, 0
        %v1147 = vsel %vm1004, %v997, 0
        %1149 = vmatprep.subr.bf16.mxu0 0
        %1150 = vmatpush1.bf16.xpose.msra.mxu0 %v1147
        %1151 = vmatprep.subr.bf16.mxu0 0
        %1152 = vmatpush1.bf16.xpose.msra.mxu0 0
        %1153 = vmatprep.subr.bf16.mxu0 0
        %1154 = vmatpush1.bf16.xpose.msra.mxu0 0
        %1155 = vmatprep.subr.bf16.mxu0 0
        %1156 = vmatpush1.bf16.xpose.msra.mxu0 0
        %1157 = vmatprep.subr.bf16.mxu0 0
        %1158 = vmatpush1.bf16.xpose.msra.mxu0 0
        %1159 = vmatprep.subr.bf16.mxu0 0
        %1160 = vmatpush1.bf16.xpose.msra.mxu0 0
        %1161 = vmatprep.subr.bf16.mxu0 0
        %1162 = vmatpush1.bf16.xpose.msra.mxu0 0
        %1163 = vmatprep.subr.bf16.mxu0 0
        %1164 = vmatpush1.bf16.xpose.msra.mxu0 0
        %1165 = vmatprep.subr.bf16.mxu0 0
        %1166 = vmatpush1.bf16.xpose.msra.mxu0 0
        %1167 = vmatprep.subr.bf16.mxu0 0
        %1168 = vmatpush1.bf16.xpose.msra.mxu0 0
        %1169 = vmatprep.subr.bf16.mxu0 0
        %1170 = vmatpush1.bf16.xpose.msra.mxu0 0
        %1171 = vmatprep.subr.bf16.mxu0 0
        %1172 = vmatpush1.bf16.xpose.msra.mxu0 0
        %1173 = vmatprep.subr.bf16.mxu0 0
        %1174 = vmatpush1.bf16.xpose.msra.mxu0 0
        %1175 = vmatprep.subr.bf16.mxu0 0
        %1176 = vmatpush1.bf16.xpose.msra.mxu0 0
        %1177 = vmatprep.subr.bf16.mxu0 0
        %1178 = vmatpush1.bf16.xpose.msra.mxu0 0
        %1179 = vmatprep.subr.bf16.mxu0 0
        %1180 = vmatpush1.bf16.xpose.msra.mxu0 0
        %1181 = vmatprep.mubr.bf16.mxu0 0
        %1182 = vmatmul.mubr.bf16.gmra.mrb[0].mxu0 %v1144
        %v1183 = vpop.f32.mrb[0].mxu0
        %v1184 = vadd.f32 %v1003, %v1183
        %v1185 = vpop.f32.mrb[0].mxu0
        %v1186 = vpop.f32.mrb[0].mxu0
        %v1187 = vpop.f32.mrb[0].mxu0
        %1188 = vdwg.mxu0
        %v1189 = vsel %vm1004, %v1046, -inf
        %1190 = vmax.xlane.f32.xlu0 %v1189
        %v1191 = vpop.xlane.xlu0 %1190
        %v1192 = vsel %vm1004, %v1092, -inf
        %1193 = vmax.xlane.f32.xlu0 %v1192
        %v1194 = vpop.xlane.xlu0 %1193
        %v1195 = vsel %vm1004, %v1138, -inf
        %1196 = vmax.xlane.f32.xlu0 %v1195
        %v1197 = vpop.xlane.xlu0 %1196
        %v1198 = vsel %vm1004, %v1184, -inf
        %1199 = vmax.xlane.f32.xlu0 %v1198
        %v1200 = vpop.xlane.xlu0 %1199
        %v1201 = vsub.f32 %v1046, %v1191
        %v1202 = vsub.f32 %v1092, %v1194
        %v1203 = vsub.f32 %v1138, %v1197
        %v1204 = vsub.f32 %v1184, %v1200
        %v1205 = vmul.f32 %v1201, 1.442695
        %v1206 = vpow.pop %v1205
        %v1207 = vmul.f32 %v1202, 1.442695
        %v1208 = vpow.pop %v1207
        %v1209 = vmul.f32 %v1203, 1.442695
        %v1210 = vpow.pop %v1209
        %v1211 = vmul.f32 %v1204, 1.442695
        %v1212 = vpow.pop %v1211
        %v1213 = vsel %vm1004, %v1206, 0.0
        %1214 = vadd.xlane.f32.xlu0 %v1213
        %v1215 = vpop.xlane.xlu0 %1214
        %v1216 = vsel %vm1004, %v1208, 0.0
        %1217 = vadd.xlane.f32.xlu0 %v1216
        %v1218 = vpop.xlane.xlu0 %1217
        %v1219 = vsel %vm1004, %v1210, 0.0
        %1220 = vadd.xlane.f32.xlu0 %v1219
        %v1221 = vpop.xlane.xlu0 %1220
        %v1222 = vsel %vm1004, %v1212, 0.0
        %1223 = vadd.xlane.f32.xlu0 %v1222
        %v1224 = vpop.xlane.xlu0 %1223
        %v1225 = vpack.c.bf16 %v1206, %v1206
        %v1226 = vpack.c.bf16 %v1208, %v1208
        %v1227 = vpack.c.bf16 %v1210, %v1210
        %v1228 = vpack.c.bf16 %v1212, %v1212
        %v1229 = vpack.c.bf16 %v825, %v825
        %v1230 = vpack.c.bf16 %v877, %v877
        %v1231 = vpack.c.bf16 %v929, %v929
        %v1232 = vpack.c.bf16 %v981, %v981
        %v1234 = vsel %vm1004, %v1225, 0
        %vm1236 = vcmask 1043456
        %v1238 = vsel %vm1236, %v1229, 0
        %1240 = vmatprep.subr.bf16.mxu0 0
        %1241 = vmatpush1.bf16.msra.mxu0 %v1238
        %1242 = vmatprep.subr.bf16.mxu0 0
        %1243 = vmatpush1.bf16.msra.mxu0 0
        %1244 = vmatprep.subr.bf16.mxu0 0
        %1245 = vmatpush1.bf16.msra.mxu0 0
        %1246 = vmatprep.subr.bf16.mxu0 0
        %1247 = vmatpush1.bf16.msra.mxu0 0
        %1248 = vmatprep.subr.bf16.mxu0 0
        %1249 = vmatpush1.bf16.msra.mxu0 0
        %1250 = vmatprep.subr.bf16.mxu0 0
        %1251 = vmatpush1.bf16.msra.mxu0 0
        %1252 = vmatprep.subr.bf16.mxu0 0
        %1253 = vmatpush1.bf16.msra.mxu0 0
        %1254 = vmatprep.subr.bf16.mxu0 0
        %1255 = vmatpush1.bf16.msra.mxu0 0
        %1256 = vmatprep.subr.bf16.mxu0 0
        %1257 = vmatpush1.bf16.msra.mxu0 0
        %1258 = vmatprep.subr.bf16.mxu0 0
        %1259 = vmatpush1.bf16.msra.mxu0 0
        %1260 = vmatprep.subr.bf16.mxu0 0
        %1261 = vmatpush1.bf16.msra.mxu0 0
        %1262 = vmatprep.subr.bf16.mxu0 0
        %1263 = vmatpush1.bf16.msra.mxu0 0
        %1264 = vmatprep.subr.bf16.mxu0 0
        %1265 = vmatpush1.bf16.msra.mxu0 0
        %1266 = vmatprep.subr.bf16.mxu0 0
        %1267 = vmatpush1.bf16.msra.mxu0 0
        %1268 = vmatprep.subr.bf16.mxu0 0
        %1269 = vmatpush1.bf16.msra.mxu0 0
        %1270 = vmatprep.subr.bf16.mxu0 0
        %1271 = vmatpush1.bf16.msra.mxu0 0
        %1272 = vmatprep.mubr.bf16.mxu0 0
        %1273 = vmatmul.mubr.bf16.gmra.mrb[0].mxu0 %v1234
        %v1274 = vpop.f32.mrb[0].mxu0
        %v1275 = vadd.f32 0.0, %v1274
        %v1276 = vpop.f32.mrb[0].mxu0
        %v1277 = vpop.f32.mrb[0].mxu0
        %v1278 = vpop.f32.mrb[0].mxu0
        %1279 = vdwg.mxu0
        %v1281 = vsel %vm1004, %v1226, 0
        %v1284 = vsel %vm1236, %v1230, 0
        %1286 = vmatprep.subr.bf16.mxu0 0
        %1287 = vmatpush1.bf16.msra.mxu0 %v1284
        %1288 = vmatprep.subr.bf16.mxu0 0
        %1289 = vmatpush1.bf16.msra.mxu0 0
        %1290 = vmatprep.subr.bf16.mxu0 0
        %1291 = vmatpush1.bf16.msra.mxu0 0
        %1292 = vmatprep.subr.bf16.mxu0 0
        %1293 = vmatpush1.bf16.msra.mxu0 0
        %1294 = vmatprep.subr.bf16.mxu0 0
        %1295 = vmatpush1.bf16.msra.mxu0 0
        %1296 = vmatprep.subr.bf16.mxu0 0
        %1297 = vmatpush1.bf16.msra.mxu0 0
        %1298 = vmatprep.subr.bf16.mxu0 0
        %1299 = vmatpush1.bf16.msra.mxu0 0
        %1300 = vmatprep.subr.bf16.mxu0 0
        %1301 = vmatpush1.bf16.msra.mxu0 0
        %1302 = vmatprep.subr.bf16.mxu0 0
        %1303 = vmatpush1.bf16.msra.mxu0 0
        %1304 = vmatprep.subr.bf16.mxu0 0
        %1305 = vmatpush1.bf16.msra.mxu0 0
        %1306 = vmatprep.subr.bf16.mxu0 0
        %1307 = vmatpush1.bf16.msra.mxu0 0
        %1308 = vmatprep.subr.bf16.mxu0 0
        %1309 = vmatpush1.bf16.msra.mxu0 0
        %1310 = vmatprep.subr.bf16.mxu0 0
        %1311 = vmatpush1.bf16.msra.mxu0 0
        %1312 = vmatprep.subr.bf16.mxu0 0
        %1313 = vmatpush1.bf16.msra.mxu0 0
        %1314 = vmatprep.subr.bf16.mxu0 0
        %1315 = vmatpush1.bf16.msra.mxu0 0
        %1316 = vmatprep.subr.bf16.mxu0 0
        %1317 = vmatpush1.bf16.msra.mxu0 0
        %1318 = vmatprep.mubr.bf16.mxu0 0
        %1319 = vmatmul.mubr.bf16.gmra.mrb[0].mxu0 %v1281
        %v1320 = vpop.f32.mrb[0].mxu0
        %v1321 = vadd.f32 0.0, %v1320
        %v1322 = vpop.f32.mrb[0].mxu0
        %v1323 = vpop.f32.mrb[0].mxu0
        %v1324 = vpop.f32.mrb[0].mxu0
        %1325 = vdwg.mxu0
        %v1327 = vsel %vm1004, %v1227, 0
        %v1330 = vsel %vm1236, %v1231, 0
        %1332 = vmatprep.subr.bf16.mxu0 0
        %1333 = vmatpush1.bf16.msra.mxu0 %v1330
        %1334 = vmatprep.subr.bf16.mxu0 0
        %1335 = vmatpush1.bf16.msra.mxu0 0
        %1336 = vmatprep.subr.bf16.mxu0 0
        %1337 = vmatpush1.bf16.msra.mxu0 0
        %1338 = vmatprep.subr.bf16.mxu0 0
        %1339 = vmatpush1.bf16.msra.mxu0 0
        %1340 = vmatprep.subr.bf16.mxu0 0
        %1341 = vmatpush1.bf16.msra.mxu0 0
        %1342 = vmatprep.subr.bf16.mxu0 0
        %1343 = vmatpush1.bf16.msra.mxu0 0
        %1344 = vmatprep.subr.bf16.mxu0 0
        %1345 = vmatpush1.bf16.msra.mxu0 0
        %1346 = vmatprep.subr.bf16.mxu0 0
        %1347 = vmatpush1.bf16.msra.mxu0 0
        %1348 = vmatprep.subr.bf16.mxu0 0
        %1349 = vmatpush1.bf16.msra.mxu0 0
        %1350 = vmatprep.subr.bf16.mxu0 0
        %1351 = vmatpush1.bf16.msra.mxu0 0
        %1352 = vmatprep.subr.bf16.mxu0 0
        %1353 = vmatpush1.bf16.msra.mxu0 0
        %1354 = vmatprep.subr.bf16.mxu0 0
        %1355 = vmatpush1.bf16.msra.mxu0 0
        %1356 = vmatprep.subr.bf16.mxu0 0
        %1357 = vmatpush1.bf16.msra.mxu0 0
        %1358 = vmatprep.subr.bf16.mxu0 0
        %1359 = vmatpush1.bf16.msra.mxu0 0
        %1360 = vmatprep.subr.bf16.mxu0 0
        %1361 = vmatpush1.bf16.msra.mxu0 0
        %1362 = vmatprep.subr.bf16.mxu0 0
        %1363 = vmatpush1.bf16.msra.mxu0 0
        %1364 = vmatprep.mubr.bf16.mxu0 0
        %1365 = vmatmul.mubr.bf16.gmra.mrb[0].mxu0 %v1327
        %v1366 = vpop.f32.mrb[0].mxu0
        %v1367 = vadd.f32 0.0, %v1366
        %v1368 = vpop.f32.mrb[0].mxu0
        %v1369 = vpop.f32.mrb[0].mxu0
        %v1370 = vpop.f32.mrb[0].mxu0
        %1371 = vdwg.mxu0
        %v1373 = vsel %vm1004, %v1228, 0
        %v1376 = vsel %vm1236, %v1232, 0
        %1378 = vmatprep.subr.bf16.mxu0 0
        %1379 = vmatpush1.bf16.msra.mxu0 %v1376
        %1380 = vmatprep.subr.bf16.mxu0 0
        %1381 = vmatpush1.bf16.msra.mxu0 0
        %1382 = vmatprep.subr.bf16.mxu0 0
        %1383 = vmatpush1.bf16.msra.mxu0 0
        %1384 = vmatprep.subr.bf16.mxu0 0
        %1385 = vmatpush1.bf16.msra.mxu0 0
        %1386 = vmatprep.subr.bf16.mxu0 0
        %1387 = vmatpush1.bf16.msra.mxu0 0
        %1388 = vmatprep.subr.bf16.mxu0 0
        %1389 = vmatpush1.bf16.msra.mxu0 0
        %1390 = vmatprep.subr.bf16.mxu0 0
        %1391 = vmatpush1.bf16.msra.mxu0 0
        %1392 = vmatprep.subr.bf16.mxu0 0
        %1393 = vmatpush1.bf16.msra.mxu0 0
        %1394 = vmatprep.subr.bf16.mxu0 0
        %1395 = vmatpush1.bf16.msra.mxu0 0
        %1396 = vmatprep.subr.bf16.mxu0 0
        %1397 = vmatpush1.bf16.msra.mxu0 0
        %1398 = vmatprep.subr.bf16.mxu0 0
        %1399 = vmatpush1.bf16.msra.mxu0 0
        %1400 = vmatprep.subr.bf16.mxu0 0
        %1401 = vmatpush1.bf16.msra.mxu0 0
        %1402 = vmatprep.subr.bf16.mxu0 0
        %1403 = vmatpush1.bf16.msra.mxu0 0
        %1404 = vmatprep.subr.bf16.mxu0 0
        %1405 = vmatpush1.bf16.msra.mxu0 0
        %1406 = vmatprep.subr.bf16.mxu0 0
        %1407 = vmatpush1.bf16.msra.mxu0 0
        %1408 = vmatprep.subr.bf16.mxu0 0
        %1409 = vmatpush1.bf16.msra.mxu0 0
        %1410 = vmatprep.mubr.bf16.mxu0 0
        %1411 = vmatmul.mubr.bf16.gmra.mrb[0].mxu0 %v1373
        %v1412 = vpop.f32.mrb[0].mxu0
        %v1413 = vadd.f32 0.0, %v1412
        %v1414 = vpop.f32.mrb[0].mxu0
        %v1415 = vpop.f32.mrb[0].mxu0
        %v1416 = vpop.f32.mrb[0].mxu0
        %1417 = vdwg.mxu0
        %v1418 = vrcp.pop %v1215
        %v1419 = vrcp.pop %v1218
        %v1420 = vrcp.pop %v1221
        %v1421 = vrcp.pop %v1224
        %v1422 = vmul.f32 %v1275, %v1418
        %v1423 = vmul.f32 %v1321, %v1419
        %v1424 = vmul.f32 %v1367, %v1420
        %v1425 = vmul.f32 %v1413, %v1421
        %v1426 = vpack.c.bf16 %v1422, %v1422
        %v1427 = vpack.c.bf16 %v1423, %v1423
        %v1428 = vpack.c.bf16 %v1424, %v1424
        %v1429 = vpack.c.bf16 %v1425, %v1425
        %v1430 = vld [vmem:[%s3] sm:$0xf]
        %v1431 = vld [vmem:[%s3 + $0x4] sm:$0xf]
        %v1432 = vld [vmem:[%s3 + $0x8] sm:$0xf]
        %v1433 = vld [vmem:[%s3 + $0xc] sm:$0xf]
        %v1435 = vsel %vm1004, %v1426, 0
        %v1438 = vsel %vm1236, %v1430, 0
        %1440 = vmatprep.subr.bf16.mxu0 0
        %1441 = vmatpush1.bf16.msra.mxu0 %v1438
        %1442 = vmatprep.subr.bf16.mxu0 0
        %1443 = vmatpush1.bf16.msra.mxu0 0
        %1444 = vmatprep.subr.bf16.mxu0 0
        %1445 = vmatpush1.bf16.msra.mxu0 0
        %1446 = vmatprep.subr.bf16.mxu0 0
        %1447 = vmatpush1.bf16.msra.mxu0 0
        %1448 = vmatprep.subr.bf16.mxu0 0
        %1449 = vmatpush1.bf16.msra.mxu0 0
        %1450 = vmatprep.subr.bf16.mxu0 0
        %1451 = vmatpush1.bf16.msra.mxu0 0
        %1452 = vmatprep.subr.bf16.mxu0 0
        %1453 = vmatpush1.bf16.msra.mxu0 0
        %1454 = vmatprep.subr.bf16.mxu0 0
        %1455 = vmatpush1.bf16.msra.mxu0 0
        %1456 = vmatprep.subr.bf16.mxu0 0
        %1457 = vmatpush1.bf16.msra.mxu0 0
        %1458 = vmatprep.subr.bf16.mxu0 0
        %1459 = vmatpush1.bf16.msra.mxu0 0
        %1460 = vmatprep.subr.bf16.mxu0 0
        %1461 = vmatpush1.bf16.msra.mxu0 0
        %1462 = vmatprep.subr.bf16.mxu0 0
        %1463 = vmatpush1.bf16.msra.mxu0 0
        %1464 = vmatprep.subr.bf16.mxu0 0
        %1465 = vmatpush1.bf16.msra.mxu0 0
        %1466 = vmatprep.subr.bf16.mxu0 0
        %1467 = vmatpush1.bf16.msra.mxu0 0
        %1468 = vmatprep.subr.bf16.mxu0 0
        %1469 = vmatpush1.bf16.msra.mxu0 0
        %1470 = vmatprep.subr.bf16.mxu0 0
        %1471 = vmatpush1.bf16.msra.mxu0 0
        %1472 = vmatprep.mubr.bf16.mxu0 0
        %1473 = vmatmul.mubr.bf16.gmra.mrb[0].mxu0 %v1435
        %v1474 = vpop.f32.mrb[0].mxu0
        %v1475 = vadd.f32 0.0, %v1474
        %v1476 = vpop.f32.mrb[0].mxu0
        %v1477 = vpop.f32.mrb[0].mxu0
        %v1478 = vpop.f32.mrb[0].mxu0
        %1479 = vdwg.mxu0
        %v1481 = vsel %vm1004, %v1427, 0
        %v1484 = vsel %vm1236, %v1431, 0
        %1486 = vmatprep.subr.bf16.mxu0 0
        %1487 = vmatpush1.bf16.msra.mxu0 %v1484
        %1488 = vmatprep.subr.bf16.mxu0 0
        %1489 = vmatpush1.bf16.msra.mxu0 0
        %1490 = vmatprep.subr.bf16.mxu0 0
        %1491 = vmatpush1.bf16.msra.mxu0 0
        %1492 = vmatprep.subr.bf16.mxu0 0
        %1493 = vmatpush1.bf16.msra.mxu0 0
        %1494 = vmatprep.subr.bf16.mxu0 0
        %1495 = vmatpush1.bf16.msra.mxu0 0
        %1496 = vmatprep.subr.bf16.mxu0 0
        %1497 = vmatpush1.bf16.msra.mxu0 0
        %1498 = vmatprep.subr.bf16.mxu0 0
        %1499 = vmatpush1.bf16.msra.mxu0 0
        %1500 = vmatprep.subr.bf16.mxu0 0
        %1501 = vmatpush1.bf16.msra.mxu0 0
        %1502 = vmatprep.subr.bf16.mxu0 0
        %1503 = vmatpush1.bf16.msra.mxu0 0
        %1504 = vmatprep.subr.bf16.mxu0 0
        %1505 = vmatpush1.bf16.msra.mxu0 0
        %1506 = vmatprep.subr.bf16.mxu0 0
        %1507 = vmatpush1.bf16.msra.mxu0 0
        %1508 = vmatprep.subr.bf16.mxu0 0
        %1509 = vmatpush1.bf16.msra.mxu0 0
        %1510 = vmatprep.subr.bf16.mxu0 0
        %1511 = vmatpush1.bf16.msra.mxu0 0
        %1512 = vmatprep.subr.bf16.mxu0 0
        %1513 = vmatpush1.bf16.msra.mxu0 0
        %1514 = vmatprep.subr.bf16.mxu0 0
        %1515 = vmatpush1.bf16.msra.mxu0 0
        %1516 = vmatprep.subr.bf16.mxu0 0
        %1517 = vmatpush1.bf16.msra.mxu0 0
        %1518 = vmatprep.mubr.bf16.mxu0 0
        %1519 = vmatmul.mubr.bf16.gmra.mrb[0].mxu0 %v1481
        %v1520 = vpop.f32.mrb[0].mxu0
        %v1521 = vadd.f32 0.0, %v1520
        %v1522 = vpop.f32.mrb[0].mxu0
        %v1523 = vpop.f32.mrb[0].mxu0
        %v1524 = vpop.f32.mrb[0].mxu0
        %1525 = vdwg.mxu0
        %v1527 = vsel %vm1004, %v1428, 0
        %v1530 = vsel %vm1236, %v1432, 0
        %1532 = vmatprep.subr.bf16.mxu0 0
        %1533 = vmatpush1.bf16.msra.mxu0 %v1530
        %1534 = vmatprep.subr.bf16.mxu0 0
        %1535 = vmatpush1.bf16.msra.mxu0 0
        %1536 = vmatprep.subr.bf16.mxu0 0
        %1537 = vmatpush1.bf16.msra.mxu0 0
        %1538 = vmatprep.subr.bf16.mxu0 0
        %1539 = vmatpush1.bf16.msra.mxu0 0
        %1540 = vmatprep.subr.bf16.mxu0 0
        %1541 = vmatpush1.bf16.msra.mxu0 0
        %1542 = vmatprep.subr.bf16.mxu0 0
        %1543 = vmatpush1.bf16.msra.mxu0 0
        %1544 = vmatprep.subr.bf16.mxu0 0
        %1545 = vmatpush1.bf16.msra.mxu0 0
        %1546 = vmatprep.subr.bf16.mxu0 0
        %1547 = vmatpush1.bf16.msra.mxu0 0
        %1548 = vmatprep.subr.bf16.mxu0 0
        %1549 = vmatpush1.bf16.msra.mxu0 0
        %1550 = vmatprep.subr.bf16.mxu0 0
        %1551 = vmatpush1.bf16.msra.mxu0 0
        %1552 = vmatprep.subr.bf16.mxu0 0
        %1553 = vmatpush1.bf16.msra.mxu0 0
        %1554 = vmatprep.subr.bf16.mxu0 0
        %1555 = vmatpush1.bf16.msra.mxu0 0
        %1556 = vmatprep.subr.bf16.mxu0 0
        %1557 = vmatpush1.bf16.msra.mxu0 0
        %1558 = vmatprep.subr.bf16.mxu0 0
        %1559 = vmatpush1.bf16.msra.mxu0 0
        %1560 = vmatprep.subr.bf16.mxu0 0
        %1561 = vmatpush1.bf16.msra.mxu0 0
        %1562 = vmatprep.subr.bf16.mxu0 0
        %1563 = vmatpush1.bf16.msra.mxu0 0
        %1564 = vmatprep.mubr.bf16.mxu0 0
        %1565 = vmatmul.mubr.bf16.gmra.mrb[0].mxu0 %v1527
        %v1566 = vpop.f32.mrb[0].mxu0
        %v1567 = vadd.f32 0.0, %v1566
        %v1568 = vpop.f32.mrb[0].mxu0
        %v1569 = vpop.f32.mrb[0].mxu0
        %v1570 = vpop.f32.mrb[0].mxu0
        %1571 = vdwg.mxu0
        %v1573 = vsel %vm1004, %v1429, 0
        %v1576 = vsel %vm1236, %v1433, 0
        %1578 = vmatprep.subr.bf16.mxu0 0
        %1579 = vmatpush1.bf16.msra.mxu0 %v1576
        %1580 = vmatprep.subr.bf16.mxu0 0
        %1581 = vmatpush1.bf16.msra.mxu0 0
        %1582 = vmatprep.subr.bf16.mxu0 0
        %1583 = vmatpush1.bf16.msra.mxu0 0
        %1584 = vmatprep.subr.bf16.mxu0 0
        %1585 = vmatpush1.bf16.msra.mxu0 0
        %1586 = vmatprep.subr.bf16.mxu0 0
        %1587 = vmatpush1.bf16.msra.mxu0 0
        %1588 = vmatprep.subr.bf16.mxu0 0
        %1589 = vmatpush1.bf16.msra.mxu0 0
        %1590 = vmatprep.subr.bf16.mxu0 0
        %1591 = vmatpush1.bf16.msra.mxu0 0
        %1592 = vmatprep.subr.bf16.mxu0 0
        %1593 = vmatpush1.bf16.msra.mxu0 0
        %1594 = vmatprep.subr.bf16.mxu0 0
        %1595 = vmatpush1.bf16.msra.mxu0 0
        %1596 = vmatprep.subr.bf16.mxu0 0
        %1597 = vmatpush1.bf16.msra.mxu0 0
        %1598 = vmatprep.subr.bf16.mxu0 0
        %1599 = vmatpush1.bf16.msra.mxu0 0
        %1600 = vmatprep.subr.bf16.mxu0 0
        %1601 = vmatpush1.bf16.msra.mxu0 0
        %1602 = vmatprep.subr.bf16.mxu0 0
        %1603 = vmatpush1.bf16.msra.mxu0 0
        %1604 = vmatprep.subr.bf16.mxu0 0
        %1605 = vmatpush1.bf16.msra.mxu0 0
        %1606 = vmatprep.subr.bf16.mxu0 0
        %1607 = vmatpush1.bf16.msra.mxu0 0
        %1608 = vmatprep.subr.bf16.mxu0 0
        %1609 = vmatpush1.bf16.msra.mxu0 0
        %1610 = vmatprep.mubr.bf16.mxu0 0
        %1611 = vmatmul.mubr.bf16.gmra.mrb[0].mxu0 %v1573
        %v1612 = vpop.f32.mrb[0].mxu0
        %v1613 = vadd.f32 0.0, %v1612
        %v1614 = vpop.f32.mrb[0].mxu0
        %v1615 = vpop.f32.mrb[0].mxu0
        %v1616 = vpop.f32.mrb[0].mxu0
        %1617 = vdwg.mxu0
        %v1618 = vsel %vm278, %v1475, 0.0
        %v1619 = vsel %vm278, %v1521, 0.0
        %v1620 = vadd.f32 %v1618, %v1619
        %v1621 = vsel %vm278, %v1567, 0.0
        %v1622 = vadd.f32 %v1620, %v1621
        %v1623 = vsel %vm278, %v1613, 0.0
        %v1624 = vadd.f32 %v1622, %v1623
        %v1625 = vld [vmem:[%s4] sm:$0x1]
        %v1627 = vlaneseq
        %v1628 = vshrl.u32 %v1627, 7
        %v1629 = vsub.s32 0, %v1628
        %v1630 = vrot.slane %v1625, %v1629
        %v1632 = vadd.f32 %v1624, %v1630
        %1633 = vst.msk [vmem:[%s215] sm:$0xff] %vm278, %v1632
        %s1634 = sand.u32 %s137, 1
        %s1635 = scalar_lea.sflag [#allocation3], %s1634
        %s1636 = sand.u32 %s137, 1
        %s1637 = smul.addr %s1636, 8
        %s1638 = scalar_lea.vmem [#allocation2], %s1637
        // Predicated region
        $region41: #{tpu_custom_call.1} parent=39 // pred_check
          %p1639 = pneg %p147
        $region42: #{tpu_custom_call.1} parent=39 // pred_check_branch
          %1641 = sbr.rel (%p1639) target = $region44
        $region43: #{tpu_custom_call.1} parent=39 // pred_region
          %s1643 = ssub.s32 128, 128
          %1644 = vsyncadd %s1635, %s1643
          %s1645 = smul.addr %s19, 128
          %s1646 = scalar_lea.hbm %s5, %s1645
          %s1648 = sshll.u32 %s1638, 4
          %s1649 = int_to_ptr.vmem [resolvable:$true] %s1648
          %1651 = dma.vmem_to_hbm [thread:$0]  %s1649, 128, %s1646, %s1635
        $region44: #{tpu_custom_call.1} parent=39 // pred_fallthru
          _
      $region40: #{tpu_custom_call.1} parent=5 // pred_fallthru
        _
      %p1652 = scmp.le.s32.totalorder 2, %s14
      // Predicated region
      $region45: #{tpu_custom_call.1} parent=5 // pred_check
        %p1653 = pneg %p1652
      $region46: #{tpu_custom_call.1} parent=5 // pred_check_branch
        %1655 = sbr.rel (%p1653) target = $region48
      $region47: #{tpu_custom_call.1} parent=5 // pred_region
        %s1656 = ssub.s32 %s14, 2
        // Predicated region
        $region49: #{tpu_custom_call.1} parent=47 // pred_check
          %p1657 = pneg %p153
        $region50: #{tpu_custom_call.1} parent=47 // pred_check_branch
          %1659 = sbr.rel (%p1657) target = $region52
        $region51: #{tpu_custom_call.1} parent=47 // pred_region
          %s1660 = sand.u32 %s138, 1
          %s1661 = scalar_lea.sflag [#allocation3], %s1660
          %s1662 = sand.u32 %s138, 1
          %s1663 = smul.addr %s1662, 8
          %s1664 = scalar_lea.vmem [#allocation2], %s1663
          %1665 = dma.done %s1661, 128
        $region52: #{tpu_custom_call.1} parent=47 // pred_fallthru
          _
      $region48: #{tpu_custom_call.1} parent=5 // pred_fallthru
        _
    $region6: #{tpu_custom_call.1} parent=1 // loop_footer
      %s18 = sadd.s32 1, %s14
    $region7: #{tpu_custom_call.1} parent=1 // loop_footer_branch
      %13 = sbr.rel target = $region3
    $region8: #{tpu_custom_call.1} parent=1 // loop_exit
      _
    %1666 = vsyncpa [#allocation3], 1
    %s1667 = scalar_lea.sflag [#allocation3], 1
    %1668 = vsyncpa %s1667, 1

// kernel: tpu_custom_call.1
$region0: #{tpu_custom_call.1}
  #allocation0 [shape = 'u32[]', space=smem, size = 0x4, offset = 0x4, fixed_abs, tag = 'smem constant byte address 0x4 - core index']
  #allocation1 [shape = 'u32[144,128]{1,0:T(1,128)}', space=vmem, size = 0x12000, scoped, tag = 'internal scratch']
  %s0 = inlined_call_operand.vmem [shape: bf16[2,8,32], index: 0, kind: input, shape index: {}]
  %s1 = inlined_call_operand.vmem [shape: bf16[3,4,32,8], index: 1, kind: input, shape index: {}]
  %s2 = inlined_call_operand.vmem [shape: f32[3,4,1,8], index: 2, kind: input, shape index: {}]
  %s3 = inlined_call_operand.vmem [shape: bf16[4,8,32], index: 3, kind: input, shape index: {}]
  %s4 = inlined_call_operand.vmem [shape: f32[1,32], index: 4, kind: input, shape index: {}]
  %s5 = inlined_call_operand.hbm [shape: f32[2,8,32], index: 5, kind: output, shape index: {}]
  %s6 = sld [smem:[#allocation0]]
  $region53: #{tpu_custom_call.1} parent=0
    _
  %s8 = ssub.s32 1, %s6
  %s9 = scalar_select 0, %s8, %s6
  $region1: #{tpu_custom_call.1} parent=0
    #allocation2 [shape = 'u8[8192]{0}', space=vmem, size = 0x2000, scoped, tag = 'output window, operand 0']
    #allocation3 [shape = 's32[2]{0}', space=sflag, size = 0x8, scoped, tag = 'scoped memory for tpu_custom_call.1']
    %10 = vsyncpa [#allocation3], 0
    %s11 = scalar_lea.sflag [#allocation3], 1
    %12 = vsyncpa %s11, 0
    loop: start=0, step=1, limit=4
    $region2: #{tpu_custom_call.1} parent=1 // loop_pre_header
      _
    $region3: #{tpu_custom_call.1} parent=1 // loop_header
      %s14 = sphi 0, %s18
      %p15 = scmp.ge.s32.totalorder %s14, 4
      %s24 = sphi 0, %s26
      %s27 = sphi 0, %s24
      %s28 = sphi 0, %s27
      %s44 = sphi 0, %s28
      %s48 = sphi 0, %s48
      %s50 = sphi 0, %s48
      %s51 = sphi 0, %s50
      %s65 = sphi 0, %s51
      %s69 = sphi 0, %s69
      %s71 = sphi 0, %s69
      %s72 = sphi 0, %s71
      %s86 = sphi 0, %s72
      %s90 = sphi 0, %s90
      %s92 = sphi 0, %s90
      %s93 = sphi 0, %s92
      %s107 = sphi 0, %s93
      %s111 = sphi 0, %s111
      %s113 = sphi 0, %s111
      %s114 = sphi 0, %s113
      %s128 = sphi 0, %s114
      %s134 = sphi 0, %s136
      %s137 = sphi 0, %s134
      %s138 = sphi 0, %s137
      %s154 = sphi 0, %s138
    $region4: #{tpu_custom_call.1} parent=1 // loop_header_branch
      %17 = sbr.rel (%p15) target = $region8
    $region5: #{tpu_custom_call.1} parent=1 // loop_body
      %s19 = ssub.s32 %s14, 1
      %s20 = ssub.s32 %s14, 2
      %s21 = sadd.s32 %s14, 1
      %s22 = ssub.s32 %s14, %s21
      %p23 = scmp.eq.s32.totalorder %s22, 0
      %s25 = sadd.s32 %s24, 1
      %s26 = scalar_select %p23, %s24, %s25
      %p29 = pneg %p23
      %p30 = scmp.eq.s32.totalorder %s14, 1
      %p31 = por %p29, %p30
      %p32 = scmp.ne.s32.totalorder %s24, %s27
      %p33 = scmp.eq.s32.totalorder %s14, 0
      %p34 = por %p32, %p33
      %p35 = scmp.ne.s32.totalorder %s24, %s27
      %p36 = scmp.eq.s32.totalorder %s19, 1
      %p37 = por %p35, %p36
      %p38 = scmp.ne.s32.totalorder %s27, %s28
      %p39 = scmp.eq.s32.totalorder %s19, 0
      %p40 = por %p38, %p39
      %p41 = scmp.ne.s32.totalorder %s27, %s28
      %p42 = scmp.eq.s32.totalorder %s20, 1
      %p43 = por %p41, %p42
      %p45 = scmp.ne.s32.totalorder %s28, %s44
      %p46 = scmp.eq.s32.totalorder %s20, 0
      %p47 = por %p45, %p46
      %s49 = sadd.s32 %s48, 1
      %p52 = scmp.eq.s32.totalorder %s14, 1
      %p53 = scmp.ne.s32.totalorder %s48, %s50
      %p54 = scmp.eq.s32.totalorder %s14, 0
      %p55 = por %p53, %p54
      %p56 = scmp.ne.s32.totalorder %s48, %s50
      %p57 = scmp.eq.s32.totalorder %s19, 1
      %p58 = por %p56, %p57
      %p59 = scmp.ne.s32.totalorder %s50, %s51
      %p60 = scmp.eq.s32.totalorder %s19, 0
      %p61 = por %p59, %p60
      %p62 = scmp.ne.s32.totalorder %s50, %s51
      %p63 = scmp.eq.s32.totalorder %s20, 1
      %p64 = por %p62, %p63
      %p66 = scmp.ne.s32.totalorder %s51, %s65
      %p67 = scmp.eq.s32.totalorder %s20, 0
      %p68 = por %p66, %p67
      %s70 = sadd.s32 %s69, 1
      %p73 = scmp.eq.s32.totalorder %s14, 1
      %p74 = scmp.ne.s32.totalorder %s69, %s71
      %p75 = scmp.eq.s32.totalorder %s14, 0
      %p76 = por %p74, %p75
      %p77 = scmp.ne.s32.totalorder %s69, %s71
      %p78 = scmp.eq.s32.totalorder %s19, 1
      %p79 = por %p77, %p78
      %p80 = scmp.ne.s32.totalorder %s71, %s72
      %p81 = scmp.eq.s32.totalorder %s19, 0
      %p82 = por %p80, %p81
      %p83 = scmp.ne.s32.totalorder %s71, %s72
      %p84 = scmp.eq.s32.totalorder %s20, 1
      %p85 = por %p83, %p84
      %p87 = scmp.ne.s32.totalorder %s72, %s86
      %p88 = scmp.eq.s32.totalorder %s20, 0
      %p89 = por %p87, %p88
      %s91 = sadd.s32 %s90, 1
      %p94 = scmp.eq.s32.totalorder %s14, 1
      %p95 = scmp.ne.s32.totalorder %s90, %s92
      %p96 = scmp.eq.s32.totalorder %s14, 0
      %p97 = por %p95, %p96
      %p98 = scmp.ne.s32.totalorder %s90, %s92
      %p99 = scmp.eq.s32.totalorder %s19, 1
      %p100 = por %p98, %p99
      %p101 = scmp.ne.s32.totalorder %s92, %s93
      %p102 = scmp.eq.s32.totalorder %s19, 0
      %p103 = por %p101, %p102
      %p104 = scmp.ne.s32.totalorder %s92, %s93
      %p105 = scmp.eq.s32.totalorder %s20, 1
      %p106 = por %p104, %p105
      %p108 = scmp.ne.s32.totalorder %s93, %s107
      %p109 = scmp.eq.s32.totalorder %s20, 0
      %p110 = por %p108, %p109
      %s112 = sadd.s32 %s111, 1
      %p115 = scmp.eq.s32.totalorder %s14, 1
      %p116 = scmp.ne.s32.totalorder %s111, %s113
      %p117 = scmp.eq.s32.totalorder %s14, 0
      %p118 = por %p116, %p117
      %p119 = scmp.ne.s32.totalorder %s111, %s113
      %p120 = scmp.eq.s32.totalorder %s19, 1
      %p121 = por %p119, %p120
      %p122 = scmp.ne.s32.totalorder %s113, %s114
      %p123 = scmp.eq.s32.totalorder %s19, 0
      %p124 = por %p122, %p123
      %p125 = scmp.ne.s32.totalorder %s113, %s114
      %p126 = scmp.eq.s32.totalorder %s20, 1
      %p127 = por %p125, %p126
      %p129 = scmp.ne.s32.totalorder %s114, %s128
      %p130 = scmp.eq.s32.totalorder %s20, 0
      %p131 = por %p129, %p130
      %s132 = ssub.s32 %s14, %s21
      %p133 = scmp.eq.s32.totalorder %s132, 0
      %s135 = sadd.s32 %s134, 1
      %s136 = scalar_select %p133, %s134, %s135
      %p139 = pneg %p133
      %p140 = scmp.eq.s32.totalorder %s14, 1
      %p141 = por %p139, %p140
      %p142 = scmp.ne.s32.totalorder %s134, %s137
      %p143 = scmp.eq.s32.totalorder %s14, 0
      %p144 = por %p142, %p143
      %p145 = scmp.ne.s32.totalorder %s134, %s137
      %p146 = scmp.eq.s32.totalorder %s19, 1
      %p147 = por %p145, %p146
      %p148 = scmp.ne.s32.totalorder %s137, %s138
      %p149 = scmp.eq.s32.totalorder %s19, 0
      %p150 = por %p148, %p149
      %p151 = scmp.ne.s32.totalorder %s137, %s138
      %p152 = scmp.eq.s32.totalorder %s20, 1
      %p153 = por %p151, %p152
      %p155 = scmp.ne.s32.totalorder %s138, %s154
      %p156 = scmp.eq.s32.totalorder %s20, 0
      %p157 = por %p155, %p156
      %p158 = scmp.le.s32.totalorder 1, %s14
      %p159 = scmp.lt.s32.totalorder %s14, 3
      %p160 = pnand %p158, %p159
      %p161 = pneg %p160
      // Predicated region
      $region9: #{tpu_custom_call.1} parent=5 // pred_check
        _
      $region10: #{tpu_custom_call.1} parent=5 // pred_check_branch
        %163 = sbr.rel (%p160) target = $region12
      $region11: #{tpu_custom_call.1} parent=5 // pred_region
        %s164 = ssub.s32 %s14, 1
        // Predicated region
        $region13: #{tpu_custom_call.1} parent=11 // pred_check
          %p165 = pneg %p61
        $region14: #{tpu_custom_call.1} parent=11 // pred_check_branch
          %167 = sbr.rel (%p165) target = $region16
        $region15: #{tpu_custom_call.1} parent=11 // pred_region
          _
        $region16: #{tpu_custom_call.1} parent=11 // pred_fallthru
          _
        // Predicated region
        $region17: #{tpu_custom_call.1} parent=11 // pred_check
          %p168 = pneg %p82
        $region18: #{tpu_custom_call.1} parent=11 // pred_check_branch
          %170 = sbr.rel (%p168) target = $region20
        $region19: #{tpu_custom_call.1} parent=11 // pred_region
          _
        $region20: #{tpu_custom_call.1} parent=11 // pred_fallthru
          _
        // Predicated region
        $region21: #{tpu_custom_call.1} parent=11 // pred_check
          %p171 = pneg %p103
        $region22: #{tpu_custom_call.1} parent=11 // pred_check_branch
          %173 = sbr.rel (%p171) target = $region24
        $region23: #{tpu_custom_call.1} parent=11 // pred_region
          _
        $region24: #{tpu_custom_call.1} parent=11 // pred_fallthru
          _
        // Predicated region
        $region25: #{tpu_custom_call.1} parent=11 // pred_check
          %p174 = pneg %p124
        $region26: #{tpu_custom_call.1} parent=11 // pred_check_branch
          %176 = sbr.rel (%p174) target = $region28
        $region27: #{tpu_custom_call.1} parent=11 // pred_region
          _
        $region28: #{tpu_custom_call.1} parent=11 // pred_fallthru
          _
      $region12: #{tpu_custom_call.1} parent=5 // pred_fallthru
        _
      %p177 = scmp.lt.s32.totalorder %s14, 2
      // Predicated region
      $region29: #{tpu_custom_call.1} parent=5 // pred_check
        %p178 = pneg %p177
      $region30: #{tpu_custom_call.1} parent=5 // pred_check_branch
        %180 = sbr.rel (%p178) target = $region32
      $region31: #{tpu_custom_call.1} parent=5 // pred_region
        // Predicated region
        $region33: #{tpu_custom_call.1} parent=31 // pred_check
          %p181 = pneg %p34
        $region34: #{tpu_custom_call.1} parent=31 // pred_check_branch
          %183 = sbr.rel (%p181) target = $region36
        $region35: #{tpu_custom_call.1} parent=31 // pred_region
          %p184 = scmp.lt.s32.totalorder %s14, 1
          %s185 = scalar_select %p184, %s14, 1
          %s186 = smul.addr %s185, 4
          %s187 = scalar_lea.vmem %s0, %s186
        $region36: #{tpu_custom_call.1} parent=31 // pred_fallthru
          _
      $region32: #{tpu_custom_call.1} parent=5 // pred_fallthru
        _
      %p188 = scmp.le.s32.totalorder 1, %s14
      %p189 = scmp.lt.s32.totalorder %s14, 3
      %p190 = pnand %p188, %p189
      %p191 = pneg %p190
      // Predicated region
      $region37: #{tpu_custom_call.1} parent=5 // pred_check
        _
      $region38: #{tpu_custom_call.1} parent=5 // pred_check_branch
        %193 = sbr.rel (%p190) target = $region40
      $region39: #{tpu_custom_call.1} parent=5 // pred_region
        %s194 = ssub.s32 %s14, 1
        %p195 = scmp.lt.s32.totalorder %s19, 1
        %s196 = scalar_select %p195, %s19, 1
        %s197 = smul.addr %s196, 4
        %s198 = scalar_lea.vmem %s0, %s197
        %p199 = pneg %p40
        %p200 = pneg %p37
        %p201 = pneg %p61
        %p202 = pneg %p58
        %p203 = pneg %p82
        %p204 = pneg %p79
        %p205 = pneg %p103
        %p206 = pneg %p100
        %p207 = pneg %p124
        %p208 = pneg %p121
        %p209 = pneg %p150
        %p210 = pneg %p147
        %s211 = sand.u32 %s137, 1
        %s212 = scalar_lea.sflag [#allocation3], %s211
        %s213 = sand.u32 %s137, 1
        %s214 = smul.addr %s213, 8
        %s215 = scalar_lea.vmem [#allocation2], %s214
        %p216 = scmp.lt.s32.totalorder %s19, 1
        %s217 = scalar_select %p216, %s19, 1
        %s218 = smul.addr %s217, 4
        %s219 = scalar_lea.vmem %s0, %s218
        %v221 = vld [vmem:[%s219] sm:$0xf]
        %v222 = vld [vmem:[%s1] sm:$0xf]
        %v223 = vld [vmem:[%s1 + $0x4] sm:$0xf]
        %v224 = vld [vmem:[%s1 + $0x8] sm:$0xf]
        %v225 = vld [vmem:[%s1 + $0xc] sm:$0xf]
        %v226 = vld [vmem:[%s1 + $0x10] sm:$0xf]
        %v227 = vld [vmem:[%s1 + $0x14] sm:$0xf]
        %v228 = vld [vmem:[%s1 + $0x18] sm:$0xf]
        %v229 = vld [vmem:[%s1 + $0x1c] sm:$0xf]
        %v230 = vld [vmem:[%s1 + $0x20] sm:$0xf]
        %v231 = vld [vmem:[%s1 + $0x24] sm:$0xf]
        %v232 = vld [vmem:[%s1 + $0x28] sm:$0xf]
        %v233 = vld [vmem:[%s1 + $0x2c] sm:$0xf]
        %v234 = vld [vmem:[%s1 + $0x30] sm:$0xf]
        %v235 = vld [vmem:[%s1 + $0x34] sm:$0xf]
        %v236 = vld [vmem:[%s1 + $0x38] sm:$0xf]
        %v237 = vld [vmem:[%s1 + $0x3c] sm:$0xf]
        %v238 = vld [vmem:[%s2] sm:$0x1]
        %v239 = vld [vmem:[%s2 + $0x1] sm:$0x1]
        %v240 = vld [vmem:[%s2 + $0x2] sm:$0x1]
        %v241 = vld [vmem:[%s2 + $0x3] sm:$0x1]
        %v246 = vlaneseq
        %v247 = vshrl.u32 %v246, 7
        %v248 = vsub.s32 0, %v247
        %v249 = vrot.slane %v238, %v248
        %v250 = vlaneseq
        %v251 = vshrl.u32 %v250, 7
        %v252 = vsub.s32 0, %v251
        %v253 = vrot.slane %v239, %v252
        %v254 = vlaneseq
        %v255 = vshrl.u32 %v254, 7
        %v256 = vsub.s32 0, %v255
        %v257 = vrot.slane %v240, %v256
        %v258 = vlaneseq
        %v259 = vshrl.u32 %v258, 7
        %v260 = vsub.s32 0, %v259
        %v261 = vrot.slane %v241, %v260
        %v270 = vunpack.c.l.b16 %v222
        %v271 = vunpack.c.l.b16 %v223
        %v272 = vunpack.c.l.b16 %v224
        %v273 = vunpack.c.l.b16 %v225
        %v274 = vpack.c.b16 %v271, %v270
        %v275 = vpack.c.b16 %v273, %v272
        %vm278 = vcmask 261120
        %v280 = vsel %vm278, %v221, 0
        %282 = vmatprep.subr.bf16.mxu0 0
        %283 = vmatpush1.bf16.msra.mxu0 %v274
        %284 = vmatprep.subr.bf16.mxu0 0
        %285 = vmatpush1.bf16.msra.mxu0 %v275
        %286 = vmatprep.subr.bf16.mxu0 0
        %287 = vmatpush1.bf16.msra.mxu0 0
        %288 = vmatprep.subr.bf16.mxu0 0
        %289 = vmatpush1.bf16.msra.mxu0 0
        %290 = vmatprep.subr.bf16.mxu0 0
        %291 = vmatpush1.bf16.msra.mxu0 0
        %292 = vmatprep.subr.bf16.mxu0 0
        %293 = vmatpush1.bf16.msra.mxu0 0
        %294 = vmatprep.subr.bf16.mxu0 0
        %295 = vmatpush1.bf16.msra.mxu0 0
        %296 = vmatprep.subr.bf16.mxu0 0
        %297 = vmatpush1.bf16.msra.mxu0 0
        %298 = vmatprep.subr.bf16.mxu0 0
        %299 = vmatpush1.bf16.msra.mxu0 0
        %300 = vmatprep.subr.bf16.mxu0 0
        %301 = vmatpush1.bf16.msra.mxu0 0
        %302 = vmatprep.subr.bf16.mxu0 0
        %303 = vmatpush1.bf16.msra.mxu0 0
        %304 = vmatprep.subr.bf16.mxu0 0
        %305 = vmatpush1.bf16.msra.mxu0 0
        %306 = vmatprep.subr.bf16.mxu0 0
        %307 = vmatpush1.bf16.msra.mxu0 0
        %308 = vmatprep.subr.bf16.mxu0 0
        %309 = vmatpush1.bf16.msra.mxu0 0
        %310 = vmatprep.subr.bf16.mxu0 0
        %311 = vmatpush1.bf16.msra.mxu0 0
        %312 = vmatprep.subr.bf16.mxu0 0
        %313 = vmatpush1.bf16.msra.mxu0 0
        %314 = vmatprep.mubr.bf16.mxu0 0
        %315 = vmatmul.mubr.bf16.gmra.mrb[0].mxu0 %v280
        %v316 = vpop.f32.mrb[0].mxu0
        %v317 = vadd.f32 %v249, %v316
        %v318 = vpop.f32.mrb[0].mxu0
        %v319 = vpop.f32.mrb[0].mxu0
        %v320 = vpop.f32.mrb[0].mxu0
        %321 = vdwg.mxu0
        %v326 = vunpack.c.l.b16 %v226
        %v327 = vunpack.c.l.b16 %v227
        %v328 = vunpack.c.l.b16 %v228
        %v329 = vunpack.c.l.b16 %v229
        %v330 = vpack.c.b16 %v327, %v326
        %v331 = vpack.c.b16 %v329, %v328
        %334 = vmatprep.subr.bf16.mxu0 0
        %335 = vmatpush1.bf16.msra.mxu0 %v330
        %336 = vmatprep.subr.bf16.mxu0 0
        %337 = vmatpush1.bf16.msra.mxu0 %v331
        %338 = vmatprep.subr.bf16.mxu0 0
        %339 = vmatpush1.bf16.msra.mxu0 0
        %340 = vmatprep.subr.bf16.mxu0 0
        %341 = vmatpush1.bf16.msra.mxu0 0
        %342 = vmatprep.subr.bf16.mxu0 0
        %343 = vmatpush1.bf16.msra.mxu0 0
        %344 = vmatprep.subr.bf16.mxu0 0
        %345 = vmatpush1.bf16.msra.mxu0 0
        %346 = vmatprep.subr.bf16.mxu0 0
        %347 = vmatpush1.bf16.msra.mxu0 0
        %348 = vmatprep.subr.bf16.mxu0 0
        %349 = vmatpush1.bf16.msra.mxu0 0
        %350 = vmatprep.subr.bf16.mxu0 0
        %351 = vmatpush1.bf16.msra.mxu0 0
        %352 = vmatprep.subr.bf16.mxu0 0
        %353 = vmatpush1.bf16.msra.mxu0 0
        %354 = vmatprep.subr.bf16.mxu0 0
        %355 = vmatpush1.bf16.msra.mxu0 0
        %356 = vmatprep.subr.bf16.mxu0 0
        %357 = vmatpush1.bf16.msra.mxu0 0
        %358 = vmatprep.subr.bf16.mxu0 0
        %359 = vmatpush1.bf16.msra.mxu0 0
        %360 = vmatprep.subr.bf16.mxu0 0
        %361 = vmatpush1.bf16.msra.mxu0 0
        %362 = vmatprep.subr.bf16.mxu0 0
        %363 = vmatpush1.bf16.msra.mxu0 0
        %364 = vmatprep.subr.bf16.mxu0 0
        %365 = vmatpush1.bf16.msra.mxu0 0
        %366 = vmatprep.mubr.bf16.mxu0 0
        %367 = vmatmul.mubr.bf16.gmra.mrb[0].mxu0 %v280
        %v368 = vpop.f32.mrb[0].mxu0
        %v369 = vadd.f32 %v253, %v368
        %v370 = vpop.f32.mrb[0].mxu0
        %v371 = vpop.f32.mrb[0].mxu0
        %v372 = vpop.f32.mrb[0].mxu0
        %373 = vdwg.mxu0
        %v378 = vunpack.c.l.b16 %v230
        %v379 = vunpack.c.l.b16 %v231
        %v380 = vunpack.c.l.b16 %v232
        %v381 = vunpack.c.l.b16 %v233
        %v382 = vpack.c.b16 %v379, %v378
        %v383 = vpack.c.b16 %v381, %v380
        %386 = vmatprep.subr.bf16.mxu0 0
        %387 = vmatpush1.bf16.msra.mxu0 %v382
        %388 = vmatprep.subr.bf16.mxu0 0
        %389 = vmatpush1.bf16.msra.mxu0 %v383
        %390 = vmatprep.subr.bf16.mxu0 0
        %391 = vmatpush1.bf16.msra.mxu0 0
        %392 = vmatprep.subr.bf16.mxu0 0
        %393 = vmatpush1.bf16.msra.mxu0 0
        %394 = vmatprep.subr.bf16.mxu0 0
        %395 = vmatpush1.bf16.msra.mxu0 0
        %396 = vmatprep.subr.bf16.mxu0 0
        %397 = vmatpush1.bf16.msra.mxu0 0
        %398 = vmatprep.subr.bf16.mxu0 0
        %399 = vmatpush1.bf16.msra.mxu0 0
        %400 = vmatprep.subr.bf16.mxu0 0
        %401 = vmatpush1.bf16.msra.mxu0 0
        %402 = vmatprep.subr.bf16.mxu0 0
        %403 = vmatpush1.bf16.msra.mxu0 0
        %404 = vmatprep.subr.bf16.mxu0 0
        %405 = vmatpush1.bf16.msra.mxu0 0
        %406 = vmatprep.subr.bf16.mxu0 0
        %407 = vmatpush1.bf16.msra.mxu0 0
        %408 = vmatprep.subr.bf16.mxu0 0
        %409 = vmatpush1.bf16.msra.mxu0 0
        %410 = vmatprep.subr.bf16.mxu0 0
        %411 = vmatpush1.bf16.msra.mxu0 0
        %412 = vmatprep.subr.bf16.mxu0 0
        %413 = vmatpush1.bf16.msra.mxu0 0
        %414 = vmatprep.subr.bf16.mxu0 0
        %415 = vmatpush1.bf16.msra.mxu0 0
        %416 = vmatprep.subr.bf16.mxu0 0
        %417 = vmatpush1.bf16.msra.mxu0 0
        %418 = vmatprep.mubr.bf16.mxu0 0
        %419 = vmatmul.mubr.bf16.gmra.mrb[0].mxu0 %v280
        %v420 = vpop.f32.mrb[0].mxu0
        %v421 = vadd.f32 %v257, %v420
        %v422 = vpop.f32.mrb[0].mxu0
        %v423 = vpop.f32.mrb[0].mxu0
        %v424 = vpop.f32.mrb[0].mxu0
        %425 = vdwg.mxu0
        %v430 = vunpack.c.l.b16 %v234
        %v431 = vunpack.c.l.b16 %v235
        %v432 = vunpack.c.l.b16 %v236
        %v433 = vunpack.c.l.b16 %v237
        %v434 = vpack.c.b16 %v431, %v430
        %v435 = vpack.c.b16 %v433, %v432
        %438 = vmatprep.subr.bf16.mxu0 0
        %439 = vmatpush1.bf16.msra.mxu0 %v434
        %440 = vmatprep.subr.bf16.mxu0 0
        %441 = vmatpush1.bf16.msra.mxu0 %v435
        %442 = vmatprep.subr.bf16.mxu0 0
        %443 = vmatpush1.bf16.msra.mxu0 0
        %444 = vmatprep.subr.bf16.mxu0 0
        %445 = vmatpush1.bf16.msra.mxu0 0
        %446 = vmatprep.subr.bf16.mxu0 0
        %447 = vmatpush1.bf16.msra.mxu0 0
        %448 = vmatprep.subr.bf16.mxu0 0
        %449 = vmatpush1.bf16.msra.mxu0 0
        %450 = vmatprep.subr.bf16.mxu0 0
        %451 = vmatpush1.bf16.msra.mxu0 0
        %452 = vmatprep.subr.bf16.mxu0 0
        %453 = vmatpush1.bf16.msra.mxu0 0
        %454 = vmatprep.subr.bf16.mxu0 0
        %455 = vmatpush1.bf16.msra.mxu0 0
        %456 = vmatprep.subr.bf16.mxu0 0
        %457 = vmatpush1.bf16.msra.mxu0 0
        %458 = vmatprep.subr.bf16.mxu0 0
        %459 = vmatpush1.bf16.msra.mxu0 0
        %460 = vmatprep.subr.bf16.mxu0 0
        %461 = vmatpush1.bf16.msra.mxu0 0
        %462 = vmatprep.subr.bf16.mxu0 0
        %463 = vmatpush1.bf16.msra.mxu0 0
        %464 = vmatprep.subr.bf16.mxu0 0
        %465 = vmatpush1.bf16.msra.mxu0 0
        %466 = vmatprep.subr.bf16.mxu0 0
        %467 = vmatpush1.bf16.msra.mxu0 0
        %468 = vmatprep.subr.bf16.mxu0 0
        %469 = vmatpush1.bf16.msra.mxu0 0
        %470 = vmatprep.mubr.bf16.mxu0 0
        %471 = vmatmul.mubr.bf16.gmra.mrb[0].mxu0 %v280
        %v472 = vpop.f32.mrb[0].mxu0
        %v473 = vadd.f32 %v261, %v472
        %v474 = vpop.f32.mrb[0].mxu0
        %v475 = vpop.f32.mrb[0].mxu0
        %v476 = vpop.f32.mrb[0].mxu0
        %477 = vdwg.mxu0
        %s478 = scalar_lea.vmem %s1, 64
        %v479 = vld [vmem:[%s478] sm:$0xf]
        %v480 = vld [vmem:[%s478 + $0x4] sm:$0xf]
        %v481 = vld [vmem:[%s478 + $0x8] sm:$0xf]
        %v482 = vld [vmem:[%s478 + $0xc] sm:$0xf]
        %v483 = vld [vmem:[%s478 + $0x10] sm:$0xf]
        %v484 = vld [vmem:[%s478 + $0x14] sm:$0xf]
        %v485 = vld [vmem:[%s478 + $0x18] sm:$0xf]
        %v486 = vld [vmem:[%s478 + $0x1c] sm:$0xf]
        %v487 = vld [vmem:[%s478 + $0x20] sm:$0xf]
        %v488 = vld [vmem:[%s478 + $0x24] sm:$0xf]
        %v489 = vld [vmem:[%s478 + $0x28] sm:$0xf]
        %v490 = vld [vmem:[%s478 + $0x2c] sm:$0xf]
        %v491 = vld [vmem:[%s478 + $0x30] sm:$0xf]
        %v492 = vld [vmem:[%s478 + $0x34] sm:$0xf]
        %v493 = vld [vmem:[%s478 + $0x38] sm:$0xf]
        %v494 = vld [vmem:[%s478 + $0x3c] sm:$0xf]
        %s495 = scalar_lea.vmem %s2, 4
        %v496 = vld [vmem:[%s495] sm:$0x1]
        %v497 = vld [vmem:[%s495 + $0x1] sm:$0x1]
        %v498 = vld [vmem:[%s495 + $0x2] sm:$0x1]
        %v499 = vld [vmem:[%s495 + $0x3] sm:$0x1]
        %v504 = vlaneseq
        %v505 = vshrl.u32 %v504, 7
        %v506 = vsub.s32 0, %v505
        %v507 = vrot.slane %v496, %v506
        %v508 = vlaneseq
        %v509 = vshrl.u32 %v508, 7
        %v510 = vsub.s32 0, %v509
        %v511 = vrot.slane %v497, %v510
        %v512 = vlaneseq
        %v513 = vshrl.u32 %v512, 7
        %v514 = vsub.s32 0, %v513
        %v515 = vrot.slane %v498, %v514
        %v516 = vlaneseq
        %v517 = vshrl.u32 %v516, 7
        %v518 = vsub.s32 0, %v517
        %v519 = vrot.slane %v499, %v518
        %v528 = vunpack.c.l.b16 %v479
        %v529 = vunpack.c.l.b16 %v480
        %v530 = vunpack.c.l.b16 %v481
        %v531 = vunpack.c.l.b16 %v482
        %v532 = vpack.c.b16 %v529, %v528
        %v533 = vpack.c.b16 %v531, %v530
        %536 = vmatprep.subr.bf16.mxu0 0
        %537 = vmatpush1.bf16.msra.mxu0 %v532
        %538 = vmatprep.subr.bf16.mxu0 0
        %539 = vmatpush1.bf16.msra.mxu0 %v533
        %540 = vmatprep.subr.bf16.mxu0 0
        %541 = vmatpush1.bf16.msra.mxu0 0
        %542 = vmatprep.subr.bf16.mxu0 0
        %543 = vmatpush1.bf16.msra.mxu0 0
        %544 = vmatprep.subr.bf16.mxu0 0
        %545 = vmatpush1.bf16.msra.mxu0 0
        %546 = vmatprep.subr.bf16.mxu0 0
        %547 = vmatpush1.bf16.msra.mxu0 0
        %548 = vmatprep.subr.bf16.mxu0 0
        %549 = vmatpush1.bf16.msra.mxu0 0
        %550 = vmatprep.subr.bf16.mxu0 0
        %551 = vmatpush1.bf16.msra.mxu0 0
        %552 = vmatprep.subr.bf16.mxu0 0
        %553 = vmatpush1.bf16.msra.mxu0 0
        %554 = vmatprep.subr.bf16.mxu0 0
        %555 = vmatpush1.bf16.msra.mxu0 0
        %556 = vmatprep.subr.bf16.mxu0 0
        %557 = vmatpush1.bf16.msra.mxu0 0
        %558 = vmatprep.subr.bf16.mxu0 0
        %559 = vmatpush1.bf16.msra.mxu0 0
        %560 = vmatprep.subr.bf16.mxu0 0
        %561 = vmatpush1.bf16.msra.mxu0 0
        %562 = vmatprep.subr.bf16.mxu0 0
        %563 = vmatpush1.bf16.msra.mxu0 0
        %564 = vmatprep.subr.bf16.mxu0 0
        %565 = vmatpush1.bf16.msra.mxu0 0
        %566 = vmatprep.subr.bf16.mxu0 0
        %567 = vmatpush1.bf16.msra.mxu0 0
        %568 = vmatprep.mubr.bf16.mxu0 0
        %569 = vmatmul.mubr.bf16.gmra.mrb[0].mxu0 %v280
        %v570 = vpop.f32.mrb[0].mxu0
        %v571 = vadd.f32 %v507, %v570
        %v572 = vpop.f32.mrb[0].mxu0
        %v573 = vpop.f32.mrb[0].mxu0
        %v574 = vpop.f32.mrb[0].mxu0
        %575 = vdwg.mxu0
        %v580 = vunpack.c.l.b16 %v483
        %v581 = vunpack.c.l.b16 %v484
        %v582 = vunpack.c.l.b16 %v485
        %v583 = vunpack.c.l.b16 %v486
        %v584 = vpack.c.b16 %v581, %v580
        %v585 = vpack.c.b16 %v583, %v582
        %588 = vmatprep.subr.bf16.mxu0 0
        %589 = vmatpush1.bf16.msra.mxu0 %v584
        %590 = vmatprep.subr.bf16.mxu0 0
        %591 = vmatpush1.bf16.msra.mxu0 %v585
        %592 = vmatprep.subr.bf16.mxu0 0
        %593 = vmatpush1.bf16.msra.mxu0 0
        %594 = vmatprep.subr.bf16.mxu0 0
        %595 = vmatpush1.bf16.msra.mxu0 0
        %596 = vmatprep.subr.bf16.mxu0 0
        %597 = vmatpush1.bf16.msra.mxu0 0
        %598 = vmatprep.subr.bf16.mxu0 0
        %599 = vmatpush1.bf16.msra.mxu0 0
        %600 = vmatprep.subr.bf16.mxu0 0
        %601 = vmatpush1.bf16.msra.mxu0 0
        %602 = vmatprep.subr.bf16.mxu0 0
        %603 = vmatpush1.bf16.msra.mxu0 0
        %604 = vmatprep.subr.bf16.mxu0 0
        %605 = vmatpush1.bf16.msra.mxu0 0
        %606 = vmatprep.subr.bf16.mxu0 0
        %607 = vmatpush1.bf16.msra.mxu0 0
        %608 = vmatprep.subr.bf16.mxu0 0
        %609 = vmatpush1.bf16.msra.mxu0 0
        %610 = vmatprep.subr.bf16.mxu0 0
        %611 = vmatpush1.bf16.msra.mxu0 0
        %612 = vmatprep.subr.bf16.mxu0 0
        %613 = vmatpush1.bf16.msra.mxu0 0
        %614 = vmatprep.subr.bf16.mxu0 0
        %615 = vmatpush1.bf16.msra.mxu0 0
        %616 = vmatprep.subr.bf16.mxu0 0
        %617 = vmatpush1.bf16.msra.mxu0 0
        %618 = vmatprep.subr.bf16.mxu0 0
        %619 = vmatpush1.bf16.msra.mxu0 0
        %620 = vmatprep.mubr.bf16.mxu0 0
        %621 = vmatmul.mubr.bf16.gmra.mrb[0].mxu0 %v280
        %v622 = vpop.f32.mrb[0].mxu0
        %v623 = vadd.f32 %v511, %v622
        %v624 = vpop.f32.mrb[0].mxu0
        %v625 = vpop.f32.mrb[0].mxu0
        %v626 = vpop.f32.mrb[0].mxu0
        %627 = vdwg.mxu0
        %v632 = vunpack.c.l.b16 %v487
        %v633 = vunpack.c.l.b16 %v488
        %v634 = vunpack.c.l.b16 %v489
        %v635 = vunpack.c.l.b16 %v490
        %v636 = vpack.c.b16 %v633, %v632
        %v637 = vpack.c.b16 %v635, %v634
        %640 = vmatprep.subr.bf16.mxu0 0
        %641 = vmatpush1.bf16.msra.mxu0 %v636
        %642 = vmatprep.subr.bf16.mxu0 0
        %643 = vmatpush1.bf16.msra.mxu0 %v637
        %644 = vmatprep.subr.bf16.mxu0 0
        %645 = vmatpush1.bf16.msra.mxu0 0
        %646 = vmatprep.subr.bf16.mxu0 0
        %647 = vmatpush1.bf16.msra.mxu0 0
        %648 = vmatprep.subr.bf16.mxu0 0
        %649 = vmatpush1.bf16.msra.mxu0 0
        %650 = vmatprep.subr.bf16.mxu0 0
        %651 = vmatpush1.bf16.msra.mxu0 0
        %652 = vmatprep.subr.bf16.mxu0 0
        %653 = vmatpush1.bf16.msra.mxu0 0
        %654 = vmatprep.subr.bf16.mxu0 0
        %655 = vmatpush1.bf16.msra.mxu0 0
        %656 = vmatprep.subr.bf16.mxu0 0
        %657 = vmatpush1.bf16.msra.mxu0 0
        %658 = vmatprep.subr.bf16.mxu0 0
        %659 = vmatpush1.bf16.msra.mxu0 0
        %660 = vmatprep.subr.bf16.mxu0 0
        %661 = vmatpush1.bf16.msra.mxu0 0
        %662 = vmatprep.subr.bf16.mxu0 0
        %663 = vmatpush1.bf16.msra.mxu0 0
        %664 = vmatprep.subr.bf16.mxu0 0
        %665 = vmatpush1.bf16.msra.mxu0 0
        %666 = vmatprep.subr.bf16.mxu0 0
        %667 = vmatpush1.bf16.msra.mxu0 0
        %668 = vmatprep.subr.bf16.mxu0 0
        %669 = vmatpush1.bf16.msra.mxu0 0
        %670 = vmatprep.subr.bf16.mxu0 0
        %671 = vmatpush1.bf16.msra.mxu0 0
        %672 = vmatprep.mubr.bf16.mxu0 0
        %673 = vmatmul.mubr.bf16.gmra.mrb[0].mxu0 %v280
        %v674 = vpop.f32.mrb[0].mxu0
        %v675 = vadd.f32 %v515, %v674
        %v676 = vpop.f32.mrb[0].mxu0
        %v677 = vpop.f32.mrb[0].mxu0
        %v678 = vpop.f32.mrb[0].mxu0
        %679 = vdwg.mxu0
        %v684 = vunpack.c.l.b16 %v491
        %v685 = vunpack.c.l.b16 %v492
        %v686 = vunpack.c.l.b16 %v493
        %v687 = vunpack.c.l.b16 %v494
        %v688 = vpack.c.b16 %v685, %v684
        %v689 = vpack.c.b16 %v687, %v686
        %692 = vmatprep.subr.bf16.mxu0 0
        %693 = vmatpush1.bf16.msra.mxu0 %v688
        %694 = vmatprep.subr.bf16.mxu0 0
        %695 = vmatpush1.bf16.msra.mxu0 %v689
        %696 = vmatprep.subr.bf16.mxu0 0
        %697 = vmatpush1.bf16.msra.mxu0 0
        %698 = vmatprep.subr.bf16.mxu0 0
        %699 = vmatpush1.bf16.msra.mxu0 0
        %700 = vmatprep.subr.bf16.mxu0 0
        %701 = vmatpush1.bf16.msra.mxu0 0
        %702 = vmatprep.subr.bf16.mxu0 0
        %703 = vmatpush1.bf16.msra.mxu0 0
        %704 = vmatprep.subr.bf16.mxu0 0
        %705 = vmatpush1.bf16.msra.mxu0 0
        %706 = vmatprep.subr.bf16.mxu0 0
        %707 = vmatpush1.bf16.msra.mxu0 0
        %708 = vmatprep.subr.bf16.mxu0 0
        %709 = vmatpush1.bf16.msra.mxu0 0
        %710 = vmatprep.subr.bf16.mxu0 0
        %711 = vmatpush1.bf16.msra.mxu0 0
        %712 = vmatprep.subr.bf16.mxu0 0
        %713 = vmatpush1.bf16.msra.mxu0 0
        %714 = vmatprep.subr.bf16.mxu0 0
        %715 = vmatpush1.bf16.msra.mxu0 0
        %716 = vmatprep.subr.bf16.mxu0 0
        %717 = vmatpush1.bf16.msra.mxu0 0
        %718 = vmatprep.subr.bf16.mxu0 0
        %719 = vmatpush1.bf16.msra.mxu0 0
        %720 = vmatprep.subr.bf16.mxu0 0
        %721 = vmatpush1.bf16.msra.mxu0 0
        %722 = vmatprep.subr.bf16.mxu0 0
        %723 = vmatpush1.bf16.msra.mxu0 0
        %724 = vmatprep.mubr.bf16.mxu0 0
        %725 = vmatmul.mubr.bf16.gmra.mrb[0].mxu0 %v280
        %v726 = vpop.f32.mrb[0].mxu0
        %v727 = vadd.f32 %v519, %v726
        %v728 = vpop.f32.mrb[0].mxu0
        %v729 = vpop.f32.mrb[0].mxu0
        %v730 = vpop.f32.mrb[0].mxu0
        %731 = vdwg.mxu0
        %s732 = scalar_lea.vmem %s1, 128
        %v733 = vld [vmem:[%s732] sm:$0xf]
        %v734 = vld [vmem:[%s732 + $0x4] sm:$0xf]
        %v735 = vld [vmem:[%s732 + $0x8] sm:$0xf]
        %v736 = vld [vmem:[%s732 + $0xc] sm:$0xf]
        %v737 = vld [vmem:[%s732 + $0x10] sm:$0xf]
        %v738 = vld [vmem:[%s732 + $0x14] sm:$0xf]
        %v739 = vld [vmem:[%s732 + $0x18] sm:$0xf]
        %v740 = vld [vmem:[%s732 + $0x1c] sm:$0xf]
        %v741 = vld [vmem:[%s732 + $0x20] sm:$0xf]
        %v742 = vld [vmem:[%s732 + $0x24] sm:$0xf]
        %v743 = vld [vmem:[%s732 + $0x28] sm:$0xf]
        %v744 = vld [vmem:[%s732 + $0x2c] sm:$0xf]
        %v745 = vld [vmem:[%s732 + $0x30] sm:$0xf]
        %v746 = vld [vmem:[%s732 + $0x34] sm:$0xf]
        %v747 = vld [vmem:[%s732 + $0x38] sm:$0xf]
        %v748 = vld [vmem:[%s732 + $0x3c] sm:$0xf]
        %s749 = scalar_lea.vmem %s2, 8
        %v750 = vld [vmem:[%s749] sm:$0x1]
        %v751 = vld [vmem:[%s749 + $0x1] sm:$0x1]
        %v752 = vld [vmem:[%s749 + $0x2] sm:$0x1]
        %v753 = vld [vmem:[%s749 + $0x3] sm:$0x1]
        %v758 = vlaneseq
        %v759 = vshrl.u32 %v758, 7
        %v760 = vsub.s32 0, %v759
        %v761 = vrot.slane %v750, %v760
        %v762 = vlaneseq
        %v763 = vshrl.u32 %v762, 7
        %v764 = vsub.s32 0, %v763
        %v765 = vrot.slane %v751, %v764
        %v766 = vlaneseq
        %v767 = vshrl.u32 %v766, 7
        %v768 = vsub.s32 0, %v767
        %v769 = vrot.slane %v752, %v768
        %v770 = vlaneseq
        %v771 = vshrl.u32 %v770, 7
        %v772 = vsub.s32 0, %v771
        %v773 = vrot.slane %v753, %v772
        %v782 = vunpack.c.l.b16 %v733
        %v783 = vunpack.c.l.b16 %v734
        %v784 = vunpack.c.l.b16 %v735
        %v785 = vunpack.c.l.b16 %v736
        %v786 = vpack.c.b16 %v783, %v782
        %v787 = vpack.c.b16 %v785, %v784
        %790 = vmatprep.subr.bf16.mxu0 0
        %791 = vmatpush1.bf16.msra.mxu0 %v786
        %792 = vmatprep.subr.bf16.mxu0 0
        %793 = vmatpush1.bf16.msra.mxu0 %v787
        %794 = vmatprep.subr.bf16.mxu0 0
        %795 = vmatpush1.bf16.msra.mxu0 0
        %796 = vmatprep.subr.bf16.mxu0 0
        %797 = vmatpush1.bf16.msra.mxu0 0
        %798 = vmatprep.subr.bf16.mxu0 0
        %799 = vmatpush1.bf16.msra.mxu0 0
        %800 = vmatprep.subr.bf16.mxu0 0
        %801 = vmatpush1.bf16.msra.mxu0 0
        %802 = vmatprep.subr.bf16.mxu0 0
        %803 = vmatpush1.bf16.msra.mxu0 0
        %804 = vmatprep.subr.bf16.mxu0 0
        %805 = vmatpush1.bf16.msra.mxu0 0
        %806 = vmatprep.subr.bf16.mxu0 0
        %807 = vmatpush1.bf16.msra.mxu0 0
        %808 = vmatprep.subr.bf16.mxu0 0
        %809 = vmatpush1.bf16.msra.mxu0 0
        %810 = vmatprep.subr.bf16.mxu0 0
        %811 = vmatpush1.bf16.msra.mxu0 0
        %812 = vmatprep.subr.bf16.mxu0 0
        %813 = vmatpush1.bf16.msra.mxu0 0
        %814 = vmatprep.subr.bf16.mxu0 0
        %815 = vmatpush1.bf16.msra.mxu0 0
        %816 = vmatprep.subr.bf16.mxu0 0
        %817 = vmatpush1.bf16.msra.mxu0 0
        %818 = vmatprep.subr.bf16.mxu0 0
        %819 = vmatpush1.bf16.msra.mxu0 0
        %820 = vmatprep.subr.bf16.mxu0 0
        %821 = vmatpush1.bf16.msra.mxu0 0
        %822 = vmatprep.mubr.bf16.mxu0 0
        %823 = vmatmul.mubr.bf16.gmra.mrb[0].mxu0 %v280
        %v824 = vpop.f32.mrb[0].mxu0
        %v825 = vadd.f32 %v761, %v824
        %v826 = vpop.f32.mrb[0].mxu0
        %v827 = vpop.f32.mrb[0].mxu0
        %v828 = vpop.f32.mrb[0].mxu0
        %829 = vdwg.mxu0
        %v834 = vunpack.c.l.b16 %v737
        %v835 = vunpack.c.l.b16 %v738
        %v836 = vunpack.c.l.b16 %v739
        %v837 = vunpack.c.l.b16 %v740
        %v838 = vpack.c.b16 %v835, %v834
        %v839 = vpack.c.b16 %v837, %v836
        %842 = vmatprep.subr.bf16.mxu0 0
        %843 = vmatpush1.bf16.msra.mxu0 %v838
        %844 = vmatprep.subr.bf16.mxu0 0
        %845 = vmatpush1.bf16.msra.mxu0 %v839
        %846 = vmatprep.subr.bf16.mxu0 0
        %847 = vmatpush1.bf16.msra.mxu0 0
        %848 = vmatprep.subr.bf16.mxu0 0
        %849 = vmatpush1.bf16.msra.mxu0 0
        %850 = vmatprep.subr.bf16.mxu0 0
        %851 = vmatpush1.bf16.msra.mxu0 0
        %852 = vmatprep.subr.bf16.mxu0 0
        %853 = vmatpush1.bf16.msra.mxu0 0
        %854 = vmatprep.subr.bf16.mxu0 0
        %855 = vmatpush1.bf16.msra.mxu0 0
        %856 = vmatprep.subr.bf16.mxu0 0
        %857 = vmatpush1.bf16.msra.mxu0 0
        %858 = vmatprep.subr.bf16.mxu0 0
        %859 = vmatpush1.bf16.msra.mxu0 0
        %860 = vmatprep.subr.bf16.mxu0 0
        %861 = vmatpush1.bf16.msra.mxu0 0
        %862 = vmatprep.subr.bf16.mxu0 0
        %863 = vmatpush1.bf16.msra.mxu0 0
        %864 = vmatprep.subr.bf16.mxu0 0
        %865 = vmatpush1.bf16.msra.mxu0 0
        %866 = vmatprep.subr.bf16.mxu0 0
        %867 = vmatpush1.bf16.msra.mxu0 0
        %868 = vmatprep.subr.bf16.mxu0 0
        %869 = vmatpush1.bf16.msra.mxu0 0
        %870 = vmatprep.subr.bf16.mxu0 0
        %871 = vmatpush1.bf16.msra.mxu0 0
        %872 = vmatprep.subr.bf16.mxu0 0
        %873 = vmatpush1.bf16.msra.mxu0 0
        %874 = vmatprep.mubr.bf16.mxu0 0
        %875 = vmatmul.mubr.bf16.gmra.mrb[0].mxu0 %v280
        %v876 = vpop.f32.mrb[0].mxu0
        %v877 = vadd.f32 %v765, %v876
        %v878 = vpop.f32.mrb[0].mxu0
        %v879 = vpop.f32.mrb[0].mxu0
        %v880 = vpop.f32.mrb[0].mxu0
        %881 = vdwg.mxu0
        %v886 = vunpack.c.l.b16 %v741
        %v887 = vunpack.c.l.b16 %v742
        %v888 = vunpack.c.l.b16 %v743
        %v889 = vunpack.c.l.b16 %v744
        %v890 = vpack.c.b16 %v887, %v886
        %v891 = vpack.c.b16 %v889, %v888
        %894 = vmatprep.subr.bf16.mxu0 0
        %895 = vmatpush1.bf16.msra.mxu0 %v890
        %896 = vmatprep.subr.bf16.mxu0 0
        %897 = vmatpush1.bf16.msra.mxu0 %v891
        %898 = vmatprep.subr.bf16.mxu0 0
        %899 = vmatpush1.bf16.msra.mxu0 0
        %900 = vmatprep.subr.bf16.mxu0 0
        %901 = vmatpush1.bf16.msra.mxu0 0
        %902 = vmatprep.subr.bf16.mxu0 0
        %903 = vmatpush1.bf16.msra.mxu0 0
        %904 = vmatprep.subr.bf16.mxu0 0
        %905 = vmatpush1.bf16.msra.mxu0 0
        %906 = vmatprep.subr.bf16.mxu0 0
        %907 = vmatpush1.bf16.msra.mxu0 0
        %908 = vmatprep.subr.bf16.mxu0 0
        %909 = vmatpush1.bf16.msra.mxu0 0
        %910 = vmatprep.subr.bf16.mxu0 0
        %911 = vmatpush1.bf16.msra.mxu0 0
        %912 = vmatprep.subr.bf16.mxu0 0
        %913 = vmatpush1.bf16.msra.mxu0 0
        %914 = vmatprep.subr.bf16.mxu0 0
        %915 = vmatpush1.bf16.msra.mxu0 0
        %916 = vmatprep.subr.bf16.mxu0 0
        %917 = vmatpush1.bf16.msra.mxu0 0
        %918 = vmatprep.subr.bf16.mxu0 0
        %919 = vmatpush1.bf16.msra.mxu0 0
        %920 = vmatprep.subr.bf16.mxu0 0
        %921 = vmatpush1.bf16.msra.mxu0 0
        %922 = vmatprep.subr.bf16.mxu0 0
        %923 = vmatpush1.bf16.msra.mxu0 0
        %924 = vmatprep.subr.bf16.mxu0 0
        %925 = vmatpush1.bf16.msra.mxu0 0
        %926 = vmatprep.mubr.bf16.mxu0 0
        %927 = vmatmul.mubr.bf16.gmra.mrb[0].mxu0 %v280
        %v928 = vpop.f32.mrb[0].mxu0
        %v929 = vadd.f32 %v769, %v928
        %v930 = vpop.f32.mrb[0].mxu0
        %v931 = vpop.f32.mrb[0].mxu0
        %v932 = vpop.f32.mrb[0].mxu0
        %933 = vdwg.mxu0
        %v938 = vunpack.c.l.b16 %v745
        %v939 = vunpack.c.l.b16 %v746
        %v940 = vunpack.c.l.b16 %v747
        %v941 = vunpack.c.l.b16 %v748
        %v942 = vpack.c.b16 %v939, %v938
        %v943 = vpack.c.b16 %v941, %v940
        %946 = vmatprep.subr.bf16.mxu0 0
        %947 = vmatpush1.bf16.msra.mxu0 %v942
        %948 = vmatprep.subr.bf16.mxu0 0
        %949 = vmatpush1.bf16.msra.mxu0 %v943
        %950 = vmatprep.subr.bf16.mxu0 0
        %951 = vmatpush1.bf16.msra.mxu0 0
        %952 = vmatprep.subr.bf16.mxu0 0
        %953 = vmatpush1.bf16.msra.mxu0 0
        %954 = vmatprep.subr.bf16.mxu0 0
        %955 = vmatpush1.bf16.msra.mxu0 0
        %956 = vmatprep.subr.bf16.mxu0 0
        %957 = vmatpush1.bf16.msra.mxu0 0
        %958 = vmatprep.subr.bf16.mxu0 0
        %959 = vmatpush1.bf16.msra.mxu0 0
        %960 = vmatprep.subr.bf16.mxu0 0
        %961 = vmatpush1.bf16.msra.mxu0 0
        %962 = vmatprep.subr.bf16.mxu0 0
        %963 = vmatpush1.bf16.msra.mxu0 0
        %964 = vmatprep.subr.bf16.mxu0 0
        %965 = vmatpush1.bf16.msra.mxu0 0
        %966 = vmatprep.subr.bf16.mxu0 0
        %967 = vmatpush1.bf16.msra.mxu0 0
        %968 = vmatprep.subr.bf16.mxu0 0
        %969 = vmatpush1.bf16.msra.mxu0 0
        %970 = vmatprep.subr.bf16.mxu0 0
        %971 = vmatpush1.bf16.msra.mxu0 0
        %972 = vmatprep.subr.bf16.mxu0 0
        %973 = vmatpush1.bf16.msra.mxu0 0
        %974 = vmatprep.subr.bf16.mxu0 0
        %975 = vmatpush1.bf16.msra.mxu0 0
        %976 = vmatprep.subr.bf16.mxu0 0
        %977 = vmatpush1.bf16.msra.mxu0 0
        %978 = vmatprep.mubr.bf16.mxu0 0
        %979 = vmatmul.mubr.bf16.gmra.mrb[0].mxu0 %v280
        %v980 = vpop.f32.mrb[0].mxu0
        %v981 = vadd.f32 %v773, %v980
        %v982 = vpop.f32.mrb[0].mxu0
        %v983 = vpop.f32.mrb[0].mxu0
        %v984 = vpop.f32.mrb[0].mxu0
        %985 = vdwg.mxu0
        %v986 = vmul.f32 %v317, 0.35355338
        %v987 = vmul.f32 %v369, 0.35355338
        %v988 = vmul.f32 %v421, 0.35355338
        %v989 = vmul.f32 %v473, 0.35355338
        %v990 = vpack.c.bf16 %v986, %v986
        %v991 = vpack.c.bf16 %v987, %v987
        %v992 = vpack.c.bf16 %v988, %v988
        %v993 = vpack.c.bf16 %v989, %v989
        %v994 = vpack.c.bf16 %v571, %v571
        %v995 = vpack.c.bf16 %v623, %v623
        %v996 = vpack.c.bf16 %v675, %v675
        %v997 = vpack.c.bf16 %v727, %v727
        %v998 = vlaneseq
        %v999 = vshrl.u32 %v998, 7
        %v1000 = vlaneseq
        %v1001 = vand.u32 %v1000, 127
        %vm1002 = vcmp.ge.s32.totalorder %v999, %v1001
        %v1003 = vsel %vm1002, 0.0, -1e+30
        %vm1004 = vcmask 64512
        %v1006 = vsel %vm1004, %v990, 0
        %v1009 = vsel %vm1004, %v994, 0
        %1011 = vmatprep.subr.bf16.mxu0 0
        %1012 = vmatpush1.bf16.xpose.msra.mxu0 %v1009
        %1013 = vmatprep.subr.bf16.mxu0 0
        %1014 = vmatpush1.bf16.xpose.msra.mxu0 0
        %1015 = vmatprep.subr.bf16.mxu0 0
        %1016 = vmatpush1.bf16.xpose.msra.mxu0 0
        %1017 = vmatprep.subr.bf16.mxu0 0
        %1018 = vmatpush1.bf16.xpose.msra.mxu0 0
        %1019 = vmatprep.subr.bf16.mxu0 0
        %1020 = vmatpush1.bf16.xpose.msra.mxu0 0
        %1021 = vmatprep.subr.bf16.mxu0 0
        %1022 = vmatpush1.bf16.xpose.msra.mxu0 0
        %1023 = vmatprep.subr.bf16.mxu0 0
        %1024 = vmatpush1.bf16.xpose.msra.mxu0 0
        %1025 = vmatprep.subr.bf16.mxu0 0
        %1026 = vmatpush1.bf16.xpose.msra.mxu0 0
        %1027 = vmatprep.subr.bf16.mxu0 0
        %1028 = vmatpush1.bf16.xpose.msra.mxu0 0
        %1029 = vmatprep.subr.bf16.mxu0 0
        %1030 = vmatpush1.bf16.xpose.msra.mxu0 0
        %1031 = vmatprep.subr.bf16.mxu0 0
        %1032 = vmatpush1.bf16.xpose.msra.mxu0 0
        %1033 = vmatprep.subr.bf16.mxu0 0
        %1034 = vmatpush1.bf16.xpose.msra.mxu0 0
        %1035 = vmatprep.subr.bf16.mxu0 0
        %1036 = vmatpush1.bf16.xpose.msra.mxu0 0
        %1037 = vmatprep.subr.bf16.mxu0 0
        %1038 = vmatpush1.bf16.xpose.msra.mxu0 0
        %1039 = vmatprep.subr.bf16.mxu0 0
        %1040 = vmatpush1.bf16.xpose.msra.mxu0 0
        %1041 = vmatprep.subr.bf16.mxu0 0
        %1042 = vmatpush1.bf16.xpose.msra.mxu0 0
        %1043 = vmatprep.mubr.bf16.mxu0 0
        %1044 = vmatmul.mubr.bf16.gmra.mrb[0].mxu0 %v1006
        %v1045 = vpop.f32.mrb[0].mxu0
        %v1046 = vadd.f32 %v1003, %v1045
        %v1047 = vpop.f32.mrb[0].mxu0
        %v1048 = vpop.f32.mrb[0].mxu0
        %v1049 = vpop.f32.mrb[0].mxu0
        %1050 = vdwg.mxu0
        %v1052 = vsel %vm1004, %v991, 0
        %v1055 = vsel %vm1004, %v995, 0
        %1057 = vmatprep.subr.bf16.mxu0 0
        %1058 = vmatpush1.bf16.xpose.msra.mxu0 %v1055
        %1059 = vmatprep.subr.bf16.mxu0 0
        %1060 = vmatpush1.bf16.xpose.msra.mxu0 0
        %1061 = vmatprep.subr.bf16.mxu0 0
        %1062 = vmatpush1.bf16.xpose.msra.mxu0 0
        %1063 = vmatprep.subr.bf16.mxu0 0
        %1064 = vmatpush1.bf16.xpose.msra.mxu0 0
        %1065 = vmatprep.subr.bf16.mxu0 0
        %1066 = vmatpush1.bf16.xpose.msra.mxu0 0
        %1067 = vmatprep.subr.bf16.mxu0 0
        %1068 = vmatpush1.bf16.xpose.msra.mxu0 0
        %1069 = vmatprep.subr.bf16.mxu0 0
        %1070 = vmatpush1.bf16.xpose.msra.mxu0 0
        %1071 = vmatprep.subr.bf16.mxu0 0
        %1072 = vmatpush1.bf16.xpose.msra.mxu0 0
        %1073 = vmatprep.subr.bf16.mxu0 0
        %1074 = vmatpush1.bf16.xpose.msra.mxu0 0
        %1075 = vmatprep.subr.bf16.mxu0 0
        %1076 = vmatpush1.bf16.xpose.msra.mxu0 0
        %1077 = vmatprep.subr.bf16.mxu0 0
        %1078 = vmatpush1.bf16.xpose.msra.mxu0 0
        %1079 = vmatprep.subr.bf16.mxu0 0
        %1080 = vmatpush1.bf16.xpose.msra.mxu0 0
        %1081 = vmatprep.subr.bf16.mxu0 0
        %1082 = vmatpush1.bf16.xpose.msra.mxu0 0
        %1083 = vmatprep.subr.bf16.mxu0 0
        %1084 = vmatpush1.bf16.xpose.msra.mxu0 0
        %1085 = vmatprep.subr.bf16.mxu0 0
        %1086 = vmatpush1.bf16.xpose.msra.mxu0 0
        %1087 = vmatprep.subr.bf16.mxu0 0
        %1088 = vmatpush1.bf16.xpose.msra.mxu0 0
        %1089 = vmatprep.mubr.bf16.mxu0 0
        %1090 = vmatmul.mubr.bf16.gmra.mrb[0].mxu0 %v1052
        %v1091 = vpop.f32.mrb[0].mxu0
        %v1092 = vadd.f32 %v1003, %v1091
        %v1093 = vpop.f32.mrb[0].mxu0
        %v1094 = vpop.f32.mrb[0].mxu0
        %v1095 = vpop.f32.mrb[0].mxu0
        %1096 = vdwg.mxu0
        %v1098 = vsel %vm1004, %v992, 0
        %v1101 = vsel %vm1004, %v996, 0
        %1103 = vmatprep.subr.bf16.mxu0 0
        %1104 = vmatpush1.bf16.xpose.msra.mxu0 %v1101
        %1105 = vmatprep.subr.bf16.mxu0 0
        %1106 = vmatpush1.bf16.xpose.msra.mxu0 0
        %1107 = vmatprep.subr.bf16.mxu0 0
        %1108 = vmatpush1.bf16.xpose.msra.mxu0 0
        %1109 = vmatprep.subr.bf16.mxu0 0
        %1110 = vmatpush1.bf16.xpose.msra.mxu0 0
        %1111 = vmatprep.subr.bf16.mxu0 0
        %1112 = vmatpush1.bf16.xpose.msra.mxu0 0
        %1113 = vmatprep.subr.bf16.mxu0 0
        %1114 = vmatpush1.bf16.xpose.msra.mxu0 0
        %1115 = vmatprep.subr.bf16.mxu0 0
        %1116 = vmatpush1.bf16.xpose.msra.mxu0 0
        %1117 = vmatprep.subr.bf16.mxu0 0
        %1118 = vmatpush1.bf16.xpose.msra.mxu0 0
        %1119 = vmatprep.subr.bf16.mxu0 0
        %1120 = vmatpush1.bf16.xpose.msra.mxu0 0
        %1121 = vmatprep.subr.bf16.mxu0 0
        %1122 = vmatpush1.bf16.xpose.msra.mxu0 0
        %1123 = vmatprep.subr.bf16.mxu0 0
        %1124 = vmatpush1.bf16.xpose.msra.mxu0 0
        %1125 = vmatprep.subr.bf16.mxu0 0
        %1126 = vmatpush1.bf16.xpose.msra.mxu0 0
        %1127 = vmatprep.subr.bf16.mxu0 0
        %1128 = vmatpush1.bf16.xpose.msra.mxu0 0
        %1129 = vmatprep.subr.bf16.mxu0 0
        %1130 = vmatpush1.bf16.xpose.msra.mxu0 0
        %1131 = vmatprep.subr.bf16.mxu0 0
        %1132 = vmatpush1.bf16.xpose.msra.mxu0 0
        %1133 = vmatprep.subr.bf16.mxu0 0
        %1134 = vmatpush1.bf16.xpose.msra.mxu0 0
        %1135 = vmatprep.mubr.bf16.mxu0 0
        %1136 = vmatmul.mubr.bf16.gmra.mrb[0].mxu0 %v1098
        %v1137 = vpop.f32.mrb[0].mxu0
        %v1138 = vadd.f32 %v1003, %v1137
        %v1139 = vpop.f32.mrb[0].mxu0
        %v1140 = vpop.f32.mrb[0].mxu0
        %v1141 = vpop.f32.mrb[0].mxu0
        %1142 = vdwg.mxu0
        %v1144 = vsel %vm1004, %v993, 0
        %v1147 = vsel %vm1004, %v997, 0
        %1149 = vmatprep.subr.bf16.mxu0 0
        %1150 = vmatpush1.bf16.xpose.msra.mxu0 %v1147
        %1151 = vmatprep.subr.bf16.mxu0 0
        %1152 = vmatpush1.bf16.xpose.msra.mxu0 0
        %1153 = vmatprep.subr.bf16.mxu0 0
        %1154 = vmatpush1.bf16.xpose.msra.mxu0 0
        %1155 = vmatprep.subr.bf16.mxu0 0
        %1156 = vmatpush1.bf16.xpose.msra.mxu0 0
        %1157 = vmatprep.subr.bf16.mxu0 0
        %1158 = vmatpush1.bf16.xpose.msra.mxu0 0
        %1159 = vmatprep.subr.bf16.mxu0 0
        %1160 = vmatpush1.bf16.xpose.msra.mxu0 0
        %1161 = vmatprep.subr.bf16.mxu0 0
        %1162 = vmatpush1.bf16.xpose.msra.mxu0 0
        %1163 = vmatprep.subr.bf16.mxu0 0
        %1164 = vmatpush1.bf16.xpose.msra.mxu0 0
        %1165 = vmatprep.subr.bf16.mxu0 0
        %1166 = vmatpush1.bf16.xpose.msra.mxu0 0
        %1167 = vmatprep.subr.bf16.mxu0 0
        %1168 = vmatpush1.bf16.xpose.msra.mxu0 0
        %1169 = vmatprep.subr.bf16.mxu0 0
        %1170 = vmatpush1.bf16.xpose.msra.mxu0 0
        %1171 = vmatprep.subr.bf16.mxu0 0
        %1172 = vmatpush1.bf16.xpose.msra.mxu0 0
        %1173 = vmatprep.subr.bf16.mxu0 0
        %1174 = vmatpush1.bf16.xpose.msra.mxu0 0
        %1175 = vmatprep.subr.bf16.mxu0 0
        %1176 = vmatpush1.bf16.xpose.msra.mxu0 0
        %1177 = vmatprep.subr.bf16.mxu0 0
        %1178 = vmatpush1.bf16.xpose.msra.mxu0 0
        %1179 = vmatprep.subr.bf16.mxu0 0
        %1180 = vmatpush1.bf16.xpose.msra.mxu0 0
        %1181 = vmatprep.mubr.bf16.mxu0 0
        %1182 = vmatmul.mubr.bf16.gmra.mrb[0].mxu0 %v1144
        %v1183 = vpop.f32.mrb[0].mxu0
        %v1184 = vadd.f32 %v1003, %v1183
        %v1185 = vpop.f32.mrb[0].mxu0
        %v1186 = vpop.f32.mrb[0].mxu0
        %v1187 = vpop.f32.mrb[0].mxu0
        %1188 = vdwg.mxu0
        %v1189 = vsel %vm1004, %v1046, -inf
        %1190 = vmax.xlane.f32.xlu0 %v1189
        %v1191 = vpop.xlane.xlu0 %1190
        %v1192 = vsel %vm1004, %v1092, -inf
        %1193 = vmax.xlane.f32.xlu0 %v1192
        %v1194 = vpop.xlane.xlu0 %1193
        %v1195 = vsel %vm1004, %v1138, -inf
        %1196 = vmax.xlane.f32.xlu0 %v1195
        %v1197 = vpop.xlane.xlu0 %1196
        %v1198 = vsel %vm1004, %v1184, -inf
        %1199 = vmax.xlane.f32.xlu0 %v1198
        %v1200 = vpop.xlane.xlu0 %1199
        %v1201 = vsub.f32 %v1046, %v1191
        %v1202 = vsub.f32 %v1092, %v1194
        %v1203 = vsub.f32 %v1138, %v1197
        %v1204 = vsub.f32 %v1184, %v1200
        %v1205 = vmul.f32 %v1201, 1.442695
        %v1206 = vpow.pop %v1205
        %v1207 = vmul.f32 %v1202, 1.442695
        %v1208 = vpow.pop %v1207
        %v1209 = vmul.f32 %v1203, 1.442695
        %v1210 = vpow.pop %v1209
        %v1211 = vmul.f32 %v1204, 1.442695
        %v1212 = vpow.pop %v1211
        %v1213 = vsel %vm1004, %v1206, 0.0
        %1214 = vadd.xlane.f32.xlu0 %v1213
        %v1215 = vpop.xlane.xlu0 %1214
        %v1216 = vsel %vm1004, %v1208, 0.0
        %1217 = vadd.xlane.f32.xlu0 %v1216
        %v1218 = vpop.xlane.xlu0 %1217
        %v1219 = vsel %vm1004, %v1210, 0.0
        %1220 = vadd.xlane.f32.xlu0 %v1219
        %v1221 = vpop.xlane.xlu0 %1220
        %v1222 = vsel %vm1004, %v1212, 0.0
        %1223 = vadd.xlane.f32.xlu0 %v1222
        %v1224 = vpop.xlane.xlu0 %1223
        %v1225 = vpack.c.bf16 %v1206, %v1206
        %v1226 = vpack.c.bf16 %v1208, %v1208
        %v1227 = vpack.c.bf16 %v1210, %v1210
        %v1228 = vpack.c.bf16 %v1212, %v1212
        %v1229 = vpack.c.bf16 %v825, %v825
        %v1230 = vpack.c.bf16 %v877, %v877
        %v1231 = vpack.c.bf16 %v929, %v929
        %v1232 = vpack.c.bf16 %v981, %v981
        %v1234 = vsel %vm1004, %v1225, 0
        %vm1236 = vcmask 1043456
        %v1238 = vsel %vm1236, %v1229, 0
        %1240 = vmatprep.subr.bf16.mxu0 0
        %1241 = vmatpush1.bf16.msra.mxu0 %v1238
        %1242 = vmatprep.subr.bf16.mxu0 0
        %1243 = vmatpush1.bf16.msra.mxu0 0
        %1244 = vmatprep.subr.bf16.mxu0 0
        %1245 = vmatpush1.bf16.msra.mxu0 0
        %1246 = vmatprep.subr.bf16.mxu0 0
        %1247 = vmatpush1.bf16.msra.mxu0 0
        %1248 = vmatprep.subr.bf16.mxu0 0
        %1249 = vmatpush1.bf16.msra.mxu0 0
        %1250 = vmatprep.subr.bf16.mxu0 0
        %1251 = vmatpush1.bf16.msra.mxu0 0
        %1252 = vmatprep.subr.bf16.mxu0 0
        %1253 = vmatpush1.bf16.msra.mxu0 0
        %1254 = vmatprep.subr.bf16.mxu0 0
        %1255 = vmatpush1.bf16.msra.mxu0 0
        %1256 = vmatprep.subr.bf16.mxu0 0
        %1257 = vmatpush1.bf16.msra.mxu0 0
        %1258 = vmatprep.subr.bf16.mxu0 0
        %1259 = vmatpush1.bf16.msra.mxu0 0
        %1260 = vmatprep.subr.bf16.mxu0 0
        %1261 = vmatpush1.bf16.msra.mxu0 0
        %1262 = vmatprep.subr.bf16.mxu0 0
        %1263 = vmatpush1.bf16.msra.mxu0 0
        %1264 = vmatprep.subr.bf16.mxu0 0
        %1265 = vmatpush1.bf16.msra.mxu0 0
        %1266 = vmatprep.subr.bf16.mxu0 0
        %1267 = vmatpush1.bf16.msra.mxu0 0
        %1268 = vmatprep.subr.bf16.mxu0 0
        %1269 = vmatpush1.bf16.msra.mxu0 0
        %1270 = vmatprep.subr.bf16.mxu0 0
        %1271 = vmatpush1.bf16.msra.mxu0 0
        %1272 = vmatprep.mubr.bf16.mxu0 0
        %1273 = vmatmul.mubr.bf16.gmra.mrb[0].mxu0 %v1234
        %v1274 = vpop.f32.mrb[0].mxu0
        %v1275 = vadd.f32 0.0, %v1274
        %v1276 = vpop.f32.mrb[0].mxu0
        %v1277 = vpop.f32.mrb[0].mxu0
        %v1278 = vpop.f32.mrb[0].mxu0
        %1279 = vdwg.mxu0
        %v1281 = vsel %vm1004, %v1226, 0
        %v1284 = vsel %vm1236, %v1230, 0
        %1286 = vmatprep.subr.bf16.mxu0 0
        %1287 = vmatpush1.bf16.msra.mxu0 %v1284
        %1288 = vmatprep.subr.bf16.mxu0 0
        %1289 = vmatpush1.bf16.msra.mxu0 0
        %1290 = vmatprep.subr.bf16.mxu0 0
        %1291 = vmatpush1.bf16.msra.mxu0 0
        %1292 = vmatprep.subr.bf16.mxu0 0
        %1293 = vmatpush1.bf16.msra.mxu0 0
        %1294 = vmatprep.subr.bf16.mxu0 0
        %1295 = vmatpush1.bf16.msra.mxu0 0
        %1296 = vmatprep.subr.bf16.mxu0 0
        %1297 = vmatpush1.bf16.msra.mxu0 0
        %1298 = vmatprep.subr.bf16.mxu0 0
        %1299 = vmatpush1.bf16.msra.mxu0 0
        %1300 = vmatprep.subr.bf16.mxu0 0
        %1301 = vmatpush1.bf16.msra.mxu0 0
        %1302 = vmatprep.subr.bf16.mxu0 0
        %1303 = vmatpush1.bf16.msra.mxu0 0
        %1304 = vmatprep.subr.bf16.mxu0 0
        %1305 = vmatpush1.bf16.msra.mxu0 0
        %1306 = vmatprep.subr.bf16.mxu0 0
        %1307 = vmatpush1.bf16.msra.mxu0 0
        %1308 = vmatprep.subr.bf16.mxu0 0
        %1309 = vmatpush1.bf16.msra.mxu0 0
        %1310 = vmatprep.subr.bf16.mxu0 0
        %1311 = vmatpush1.bf16.msra.mxu0 0
        %1312 = vmatprep.subr.bf16.mxu0 0
        %1313 = vmatpush1.bf16.msra.mxu0 0
        %1314 = vmatprep.subr.bf16.mxu0 0
        %1315 = vmatpush1.bf16.msra.mxu0 0
        %1316 = vmatprep.subr.bf16.mxu0 0
        %1317 = vmatpush1.bf16.msra.mxu0 0
        %1318 = vmatprep.mubr.bf16.mxu0 0
        %1319 = vmatmul.mubr.bf16.gmra.mrb[0].mxu0 %v1281
        %v1320 = vpop.f32.mrb[0].mxu0
        %v1321 = vadd.f32 0.0, %v1320
        %v1322 = vpop.f32.mrb[0].mxu0
        %v1323 = vpop.f32.mrb[0].mxu0
        %v1324 = vpop.f32.mrb[0].mxu0
        %1325 = vdwg.mxu0
        %v1327 = vsel %vm1004, %v1227, 0
        %v1330 = vsel %vm1236, %v1231, 0
        %1332 = vmatprep.subr.bf16.mxu0 0
        %1333 = vmatpush1.bf16.msra.mxu0 %v1330
        %1334 = vmatprep.subr.bf16.mxu0 0
        %1335 = vmatpush1.bf16.msra.mxu0 0
        %1336 = vmatprep.subr.bf16.mxu0 0
        %1337 = vmatpush1.bf16.msra.mxu0 0
        %1338 = vmatprep.subr.bf16.mxu0 0
        %1339 = vmatpush1.bf16.msra.mxu0 0
        %1340 = vmatprep.subr.bf16.mxu0 0
        %1341 = vmatpush1.bf16.msra.mxu0 0
        %1342 = vmatprep.subr.bf16.mxu0 0
        %1343 = vmatpush1.bf16.msra.mxu0 0
        %1344 = vmatprep.subr.bf16.mxu0 0
        %1345 = vmatpush1.bf16.msra.mxu0 0
        %1346 = vmatprep.subr.bf16.mxu0 0
        %1347 = vmatpush1.bf16.msra.mxu0 0
        %1348 = vmatprep.subr.bf16.mxu0 0
        %1349 = vmatpush1.bf16.msra.mxu0 0
        %1350 = vmatprep.subr.bf16.mxu0 0
        %1351 = vmatpush1.bf16.msra.mxu0 0
        %1352 = vmatprep.subr.bf16.mxu0 0
        %1353 = vmatpush1.bf16.msra.mxu0 0
        %1354 = vmatprep.subr.bf16.mxu0 0
        %1355 = vmatpush1.bf16.msra.mxu0 0
        %1356 = vmatprep.subr.bf16.mxu0 0
        %1357 = vmatpush1.bf16.msra.mxu0 0
        %1358 = vmatprep.subr.bf16.mxu0 0
        %1359 = vmatpush1.bf16.msra.mxu0 0
        %1360 = vmatprep.subr.bf16.mxu0 0
        %1361 = vmatpush1.bf16.msra.mxu0 0
        %1362 = vmatprep.subr.bf16.mxu0 0
        %1363 = vmatpush1.bf16.msra.mxu0 0
        %1364 = vmatprep.mubr.bf16.mxu0 0
        %1365 = vmatmul.mubr.bf16.gmra.mrb[0].mxu0 %v1327
        %v1366 = vpop.f32.mrb[0].mxu0
        %v1367 = vadd.f32 0.0, %v1366
        %v1368 = vpop.f32.mrb[0].mxu0
        %v1369 = vpop.f32.mrb[0].mxu0
        %v1370 = vpop.f32.mrb[0].mxu0
        %1371 = vdwg.mxu0
        %v1373 = vsel %vm1004, %v1228, 0
        %v1376 = vsel %vm1236, %v1232, 0
        %1378 = vmatprep.subr.bf16.mxu0 0
        %1379 = vmatpush1.bf16.msra.mxu0 %v1376
        %1380 = vmatprep.subr.bf16.mxu0 0
        %1381 = vmatpush1.bf16.msra.mxu0 0
        %1382 = vmatprep.subr.bf16.mxu0 0
        %1383 = vmatpush1.bf16.msra.mxu0 0
        %1384 = vmatprep.subr.bf16.mxu0 0
        %1385 = vmatpush1.bf16.msra.mxu0 0
        %1386 = vmatprep.subr.bf16.mxu0 0
        %1387 = vmatpush1.bf16.msra.mxu0 0
        %1388 = vmatprep.subr.bf16.mxu0 0
        %1389 = vmatpush1.bf16.msra.mxu0 0
        %1390 = vmatprep.subr.bf16.mxu0 0
        %1391 = vmatpush1.bf16.msra.mxu0 0
        %1392 = vmatprep.subr.bf16.mxu0 0
        %1393 = vmatpush1.bf16.msra.mxu0 0
        %1394 = vmatprep.subr.bf16.mxu0 0
        %1395 = vmatpush1.bf16.msra.mxu0 0
        %1396 = vmatprep.subr.bf16.mxu0 0
        %1397 = vmatpush1.bf16.msra.mxu0 0
        %1398 = vmatprep.subr.bf16.mxu0 0
        %1399 = vmatpush1.bf16.msra.mxu0 0
        %1400 = vmatprep.subr.bf16.mxu0 0
        %1401 = vmatpush1.bf16.msra.mxu0 0
        %1402 = vmatprep.subr.bf16.mxu0 0
        %1403 = vmatpush1.bf16.msra.mxu0 0
        %1404 = vmatprep.subr.bf16.mxu0 0
        %1405 = vmatpush1.bf16.msra.mxu0 0
        %1406 = vmatprep.subr.bf16.mxu0 0
        %1407 = vmatpush1.bf16.msra.mxu0 0
        %1408 = vmatprep.subr.bf16.mxu0 0
        %1409 = vmatpush1.bf16.msra.mxu0 0
        %1410 = vmatprep.mubr.bf16.mxu0 0
        %1411 = vmatmul.mubr.bf16.gmra.mrb[0].mxu0 %v1373
        %v1412 = vpop.f32.mrb[0].mxu0
        %v1413 = vadd.f32 0.0, %v1412
        %v1414 = vpop.f32.mrb[0].mxu0
        %v1415 = vpop.f32.mrb[0].mxu0
        %v1416 = vpop.f32.mrb[0].mxu0
        %1417 = vdwg.mxu0
        %v1418 = vrcp.pop %v1215
        %v1419 = vrcp.pop %v1218
        %v1420 = vrcp.pop %v1221
        %v1421 = vrcp.pop %v1224
        %v1422 = vmul.f32 %v1275, %v1418
        %v1423 = vmul.f32 %v1321, %v1419
        %v1424 = vmul.f32 %v1367, %v1420
        %v1425 = vmul.f32 %v1413, %v1421
        %v1426 = vpack.c.bf16 %v1422, %v1422
        %v1427 = vpack.c.bf16 %v1423, %v1423
        %v1428 = vpack.c.bf16 %v1424, %v1424
        %v1429 = vpack.c.bf16 %v1425, %v1425
        %v1430 = vld [vmem:[%s3] sm:$0xf]
        %v1431 = vld [vmem:[%s3 + $0x4] sm:$0xf]
        %v1432 = vld [vmem:[%s3 + $0x8] sm:$0xf]
        %v1433 = vld [vmem:[%s3 + $0xc] sm:$0xf]
        %v1435 = vsel %vm1004, %v1426, 0
        %v1438 = vsel %vm1236, %v1430, 0
        %1440 = vmatprep.subr.bf16.mxu0 0
        %1441 = vmatpush1.bf16.msra.mxu0 %v1438
        %1442 = vmatprep.subr.bf16.mxu0 0
        %1443 = vmatpush1.bf16.msra.mxu0 0
        %1444 = vmatprep.subr.bf16.mxu0 0
        %1445 = vmatpush1.bf16.msra.mxu0 0
        %1446 = vmatprep.subr.bf16.mxu0 0
        %1447 = vmatpush1.bf16.msra.mxu0 0
        %1448 = vmatprep.subr.bf16.mxu0 0
        %1449 = vmatpush1.bf16.msra.mxu0 0
        %1450 = vmatprep.subr.bf16.mxu0 0
        %1451 = vmatpush1.bf16.msra.mxu0 0
        %1452 = vmatprep.subr.bf16.mxu0 0
        %1453 = vmatpush1.bf16.msra.mxu0 0
        %1454 = vmatprep.subr.bf16.mxu0 0
        %1455 = vmatpush1.bf16.msra.mxu0 0
        %1456 = vmatprep.subr.bf16.mxu0 0
        %1457 = vmatpush1.bf16.msra.mxu0 0
        %1458 = vmatprep.subr.bf16.mxu0 0
        %1459 = vmatpush1.bf16.msra.mxu0 0
        %1460 = vmatprep.subr.bf16.mxu0 0
        %1461 = vmatpush1.bf16.msra.mxu0 0
        %1462 = vmatprep.subr.bf16.mxu0 0
        %1463 = vmatpush1.bf16.msra.mxu0 0
        %1464 = vmatprep.subr.bf16.mxu0 0
        %1465 = vmatpush1.bf16.msra.mxu0 0
        %1466 = vmatprep.subr.bf16.mxu0 0
        %1467 = vmatpush1.bf16.msra.mxu0 0
        %1468 = vmatprep.subr.bf16.mxu0 0
        %1469 = vmatpush1.bf16.msra.mxu0 0
        %1470 = vmatprep.subr.bf16.mxu0 0
        %1471 = vmatpush1.bf16.msra.mxu0 0
        %1472 = vmatprep.mubr.bf16.mxu0 0
        %1473 = vmatmul.mubr.bf16.gmra.mrb[0].mxu0 %v1435
        %v1474 = vpop.f32.mrb[0].mxu0
        %v1475 = vadd.f32 0.0, %v1474
        %v1476 = vpop.f32.mrb[0].mxu0
        %v1477 = vpop.f32.mrb[0].mxu0
        %v1478 = vpop.f32.mrb[0].mxu0
        %1479 = vdwg.mxu0
        %v1481 = vsel %vm1004, %v1427, 0
        %v1484 = vsel %vm1236, %v1431, 0
        %1486 = vmatprep.subr.bf16.mxu0 0
        %1487 = vmatpush1.bf16.msra.mxu0 %v1484
        %1488 = vmatprep.subr.bf16.mxu0 0
        %1489 = vmatpush1.bf16.msra.mxu0 0
        %1490 = vmatprep.subr.bf16.mxu0 0
        %1491 = vmatpush1.bf16.msra.mxu0 0
        %1492 = vmatprep.subr.bf16.mxu0 0
        %1493 = vmatpush1.bf16.msra.mxu0 0
        %1494 = vmatprep.subr.bf16.mxu0 0
        %1495 = vmatpush1.bf16.msra.mxu0 0
        %1496 = vmatprep.subr.bf16.mxu0 0
        %1497 = vmatpush1.bf16.msra.mxu0 0
        %1498 = vmatprep.subr.bf16.mxu0 0
        %1499 = vmatpush1.bf16.msra.mxu0 0
        %1500 = vmatprep.subr.bf16.mxu0 0
        %1501 = vmatpush1.bf16.msra.mxu0 0
        %1502 = vmatprep.subr.bf16.mxu0 0
        %1503 = vmatpush1.bf16.msra.mxu0 0
        %1504 = vmatprep.subr.bf16.mxu0 0
        %1505 = vmatpush1.bf16.msra.mxu0 0
        %1506 = vmatprep.subr.bf16.mxu0 0
        %1507 = vmatpush1.bf16.msra.mxu0 0
        %1508 = vmatprep.subr.bf16.mxu0 0
        %1509 = vmatpush1.bf16.msra.mxu0 0
        %1510 = vmatprep.subr.bf16.mxu0 0
        %1511 = vmatpush1.bf16.msra.mxu0 0
        %1512 = vmatprep.subr.bf16.mxu0 0
        %1513 = vmatpush1.bf16.msra.mxu0 0
        %1514 = vmatprep.subr.bf16.mxu0 0
        %1515 = vmatpush1.bf16.msra.mxu0 0
        %1516 = vmatprep.subr.bf16.mxu0 0
        %1517 = vmatpush1.bf16.msra.mxu0 0
        %1518 = vmatprep.mubr.bf16.mxu0 0
        %1519 = vmatmul.mubr.bf16.gmra.mrb[0].mxu0 %v1481
        %v1520 = vpop.f32.mrb[0].mxu0
        %v1521 = vadd.f32 0.0, %v1520
        %v1522 = vpop.f32.mrb[0].mxu0
        %v1523 = vpop.f32.mrb[0].mxu0
        %v1524 = vpop.f32.mrb[0].mxu0
        %1525 = vdwg.mxu0
        %v1527 = vsel %vm1004, %v1428, 0
        %v1530 = vsel %vm1236, %v1432, 0
        %1532 = vmatprep.subr.bf16.mxu0 0
        %1533 = vmatpush1.bf16.msra.mxu0 %v1530
        %1534 = vmatprep.subr.bf16.mxu0 0
        %1535 = vmatpush1.bf16.msra.mxu0 0
        %1536 = vmatprep.subr.bf16.mxu0 0
        %1537 = vmatpush1.bf16.msra.mxu0 0
        %1538 = vmatprep.subr.bf16.mxu0 0
        %1539 = vmatpush1.bf16.msra.mxu0 0
        %1540 = vmatprep.subr.bf16.mxu0 0
        %1541 = vmatpush1.bf16.msra.mxu0 0
        %1542 = vmatprep.subr.bf16.mxu0 0
        %1543 = vmatpush1.bf16.msra.mxu0 0
        %1544 = vmatprep.subr.bf16.mxu0 0
        %1545 = vmatpush1.bf16.msra.mxu0 0
        %1546 = vmatprep.subr.bf16.mxu0 0
        %1547 = vmatpush1.bf16.msra.mxu0 0
        %1548 = vmatprep.subr.bf16.mxu0 0
        %1549 = vmatpush1.bf16.msra.mxu0 0
        %1550 = vmatprep.subr.bf16.mxu0 0
        %1551 = vmatpush1.bf16.msra.mxu0 0
        %1552 = vmatprep.subr.bf16.mxu0 0
        %1553 = vmatpush1.bf16.msra.mxu0 0
        %1554 = vmatprep.subr.bf16.mxu0 0
        %1555 = vmatpush1.bf16.msra.mxu0 0
        %1556 = vmatprep.subr.bf16.mxu0 0
        %1557 = vmatpush1.bf16.msra.mxu0 0
        %1558 = vmatprep.subr.bf16.mxu0 0
        %1559 = vmatpush1.bf16.msra.mxu0 0
        %1560 = vmatprep.subr.bf16.mxu0 0
        %1561 = vmatpush1.bf16.msra.mxu0 0
        %1562 = vmatprep.subr.bf16.mxu0 0
        %1563 = vmatpush1.bf16.msra.mxu0 0
        %1564 = vmatprep.mubr.bf16.mxu0 0
        %1565 = vmatmul.mubr.bf16.gmra.mrb[0].mxu0 %v1527
        %v1566 = vpop.f32.mrb[0].mxu0
        %v1567 = vadd.f32 0.0, %v1566
        %v1568 = vpop.f32.mrb[0].mxu0
        %v1569 = vpop.f32.mrb[0].mxu0
        %v1570 = vpop.f32.mrb[0].mxu0
        %1571 = vdwg.mxu0
        %v1573 = vsel %vm1004, %v1429, 0
        %v1576 = vsel %vm1236, %v1433, 0
        %1578 = vmatprep.subr.bf16.mxu0 0
        %1579 = vmatpush1.bf16.msra.mxu0 %v1576
        %1580 = vmatprep.subr.bf16.mxu0 0
        %1581 = vmatpush1.bf16.msra.mxu0 0
        %1582 = vmatprep.subr.bf16.mxu0 0
        %1583 = vmatpush1.bf16.msra.mxu0 0
        %1584 = vmatprep.subr.bf16.mxu0 0
        %1585 = vmatpush1.bf16.msra.mxu0 0
        %1586 = vmatprep.subr.bf16.mxu0 0
        %1587 = vmatpush1.bf16.msra.mxu0 0
        %1588 = vmatprep.subr.bf16.mxu0 0
        %1589 = vmatpush1.bf16.msra.mxu0 0
        %1590 = vmatprep.subr.bf16.mxu0 0
        %1591 = vmatpush1.bf16.msra.mxu0 0
        %1592 = vmatprep.subr.bf16.mxu0 0
        %1593 = vmatpush1.bf16.msra.mxu0 0
        %1594 = vmatprep.subr.bf16.mxu0 0
        %1595 = vmatpush1.bf16.msra.mxu0 0
        %1596 = vmatprep.subr.bf16.mxu0 0
        %1597 = vmatpush1.bf16.msra.mxu0 0
        %1598 = vmatprep.subr.bf16.mxu0 0
        %1599 = vmatpush1.bf16.msra.mxu0 0
        %1600 = vmatprep.subr.bf16.mxu0 0
        %1601 = vmatpush1.bf16.msra.mxu0 0
        %1602 = vmatprep.subr.bf16.mxu0 0
        %1603 = vmatpush1.bf16.msra.mxu0 0
        %1604 = vmatprep.subr.bf16.mxu0 0
        %1605 = vmatpush1.bf16.msra.mxu0 0
        %1606 = vmatprep.subr.bf16.mxu0 0
        %1607 = vmatpush1.bf16.msra.mxu0 0
        %1608 = vmatprep.subr.bf16.mxu0 0
        %1609 = vmatpush1.bf16.msra.mxu0 0
        %1610 = vmatprep.mubr.bf16.mxu0 0
        %1611 = vmatmul.mubr.bf16.gmra.mrb[0].mxu0 %v1573
        %v1612 = vpop.f32.mrb[0].mxu0
        %v1613 = vadd.f32 0.0, %v1612
        %v1614 = vpop.f32.mrb[0].mxu0
        %v1615 = vpop.f32.mrb[0].mxu0
        %v1616 = vpop.f32.mrb[0].mxu0
        %1617 = vdwg.mxu0
        %v1618 = vsel %vm278, %v1475, 0.0
        %v1619 = vsel %vm278, %v1521, 0.0
        %v1620 = vadd.f32 %v1618, %v1619
        %v1621 = vsel %vm278, %v1567, 0.0
        %v1622 = vadd.f32 %v1620, %v1621
        %v1623 = vsel %vm278, %v1613, 0.0
        %v1624 = vadd.f32 %v1622, %v1623
        %v1625 = vld [vmem:[%s4] sm:$0x1]
        %v1627 = vlaneseq
        %v1628 = vshrl.u32 %v1627, 7
        %v1629 = vsub.s32 0, %v1628
        %v1630 = vrot.slane %v1625, %v1629
        %v1632 = vadd.f32 %v1624, %v1630
        %1633 = vst.msk [vmem:[%s215] sm:$0xff] %vm278, %v1632
        %s1634 = sand.u32 %s137, 1
        %s1635 = scalar_lea.sflag [#allocation3], %s1634
        %s1636 = sand.u32 %s137, 1
        %s1637 = smul.addr %s1636, 8
        %s1638 = scalar_lea.vmem [#allocation2], %s1637
        // Predicated region
        $region41: #{tpu_custom_call.1} parent=39 // pred_check
          %p1639 = pneg %p147
        $region42: #{tpu_custom_call.1} parent=39 // pred_check_branch
          %1641 = sbr.rel (%p1639) target = $region44
        $region43: #{tpu_custom_call.1} parent=39 // pred_region
          %s1643 = ssub.s32 128, 128
          %1644 = vsyncadd %s1635, %s1643
          %s1645 = smul.addr %s19, 128
          %s1646 = scalar_lea.hbm %s5, %s1645
          %s1648 = sshll.u32 %s1638, 4
          %s1649 = int_to_ptr.vmem [resolvable:$true] %s1648
          %1651 = dma.vmem_to_hbm [thread:$0]  %s1649, 128, %s1646, %s1635
        $region44: #{tpu_custom_call.1} parent=39 // pred_fallthru
          _
      $region40: #{tpu_custom_call.1} parent=5 // pred_fallthru
        _
      %p1652 = scmp.le.s32.totalorder 2, %s14
      // Predicated region
      $region45: #{tpu_custom_call.1} parent=5 // pred_check
        %p1653 = pneg %p1652
      $region46: #{tpu_custom_call.1} parent=5 // pred_check_branch
        %1655 = sbr.rel (%p1653) target = $region48
      $region47: #{tpu_custom_call.1} parent=5 // pred_region
        %s1656 = ssub.s32 %s14, 2
        // Predicated region
        $region49: #{tpu_custom_call.1} parent=47 // pred_check
          %p1657 = pneg %p153
        $region50: #{tpu_custom_call.1} parent=47 // pred_check_branch
          %1659 = sbr.rel (%p1657) target = $region52
        $region51: #{tpu_custom_call.1} parent=47 // pred_region
          %s1660 = sand.u32 %s138, 1
          %s1661 = scalar_lea.sflag [#allocation3], %s1660
          %s1662 = sand.u32 %s138, 1
          %s1663 = smul.addr %s1662, 8
          %s1664 = scalar_lea.vmem [#allocation2], %s1663
          %1665 = dma.done %s1661, 128
        $region52: #{tpu_custom_call.1} parent=47 // pred_fallthru
          _
      $region48: #{tpu_custom_call.1} parent=5 // pred_fallthru
        _
    $region6: #{tpu_custom_call.1} parent=1 // loop_footer
      %s18 = sadd.s32 1, %s14
    $region7: #{tpu_custom_call.1} parent=1 // loop_footer_branch
      %13 = sbr.rel target = $region3
    $region8: #{tpu_custom_call.1} parent=1 // loop_exit
      _
    %1666 = vsyncpa [#allocation3], 1
    %s1667 = scalar_lea.sflag [#allocation3], 1
    %1668 = vsyncpa %s1667, 1

</llo_original>
